<compile_context>
chip_gen: v5e
topology: v5e:2x2
jax: 0.10.0
libtpu: 0.0.40
codegen_flags: <defaults>
</compile_context>

<pallas_src>
import functools

import jax
import jax.numpy as jnp
import numpy as np
from jax.experimental import pallas as pl
from jax.experimental.pallas import tpu as pltpu


_SQRT_2_OVER_PI = 0.7978845608028654


def _gelu_tanh(x):
    # TODO(synk): PyTorch nn.GELU() defaults to the exact erf form; Mosaic has no clean erf
    # lowering, so the tanh approximation (i.e. nn.GELU(approximate='tanh')) is used here.
    return 0.5 * x * (1.0 + jnp.tanh(_SQRT_2_OVER_PI * (x + 0.044715 * x * x * x)))


def encoder_block_kernel(x_ref, weff_ref, bdw_ref, gmean_ref, gamma_ref, beta_ref,
                         wup_ref, bup_ref, wdn_ref, bdn_ref, o_ref, *,
                         img_w, ksize, eps):
    # x_ref    : (1, FC, S)   FC = fold*C rows (fold batch elems stacked on sublanes),
    #                         S = H*W on lanes (lane-dense, multiple of 128)
    # weff_ref : (K*K, FC, S) fused per-tap weights: border_mask[k,s] * w_dw[c,k]
    # bdw_ref  : (FC, 1)      depthwise conv bias (tiled over fold)
    # gmean_ref: (FC, FC)     block-diagonal group-averaging matrix (1/C within a group)
    # gamma/beta : (FC, 1)    LayerNorm affine (tiled over fold)
    # wup_ref  : (fold*4C, FC), bup_ref : (fold*4C, 1)   Linear(C->4C), fold-block-diagonal
    # wdn_ref  : (FC, fold*4C), bdn_ref : (FC, 1)        Linear(4C->C), fold-block-diagonal
    # o_ref    : (1, FC, S)
    _, FC, S = x_ref.shape
    R = ksize // 2
    hp = jax.lax.Precision.HIGHEST

    x = x_ref[0]                                     # (FC, S) - one f32 vreg at FC=8, S=256

    # ---- depthwise KxK conv: static lane rolls (XLU) * resident fused weights (VPU) ----
    # 4 independent accumulator chains so dependent vadds don't serialize the VALU.
    n_acc = 4
    accs = [jnp.zeros((FC, S), jnp.float32) for _ in range(n_acc)]
    k = 0
    for dy in range(-R, R + 1):
        for dx in range(-R, R + 1):
            delta = dy * img_w + dx                  # flattened spatial offset of this tap
            shifted = x if delta == 0 else pltpu.roll(x, (-delta) % S, axis=1)
            accs[k % n_acc] = accs[k % n_acc] + shifted * weff_ref[k]
            k += 1
    dw = (accs[0] + accs[1]) + (accs[2] + accs[3]) + bdw_ref[...]        # (FC, S)

    # ---- LayerNorm over channels (per fold group) via a tiny MXU group-mean matmul ----
    # Keeps everything in the dense (FC, S) layout: no sublane reshapes/slices.
    gm = gmean_ref[...]                                                  # (FC, FC)
    u = jnp.dot(gm, dw, preferred_element_type=jnp.float32, precision=hp)
    d = dw - u
    var = jnp.dot(gm, d * d, preferred_element_type=jnp.float32, precision=hp)
    y = d * jax.lax.rsqrt(var + eps)
    y = gamma_ref[...] * y + beta_ref[...]                               # (FC, S)

    # ---- MLP: Linear(C->4C) + GELU + Linear(4C->C) on the MXU (block-diag over fold) ----
    h = jnp.dot(wup_ref[...], y, preferred_element_type=jnp.float32, precision=hp)
    h = _gelu_tanh(h + bup_ref[...])                                     # (fold*4C, S)
    out = jnp.dot(wdn_ref[...], h, preferred_element_type=jnp.float32, precision=hp)
    out = out + bdn_ref[...]                                             # (FC, S)

    # ---- residual add, lane-dense unmasked store ----
    o_ref[0] = (out + x).astype(o_ref.dtype)


def _tap_masks(h, w, ksize):
    """mask[k, s] = 1 iff the source pixel of tap k is inside the image at position s."""
    r = ksize // 2
    ii, jj = np.meshgrid(np.arange(h), np.arange(w), indexing="ij")
    ii = ii.reshape(-1)
    jj = jj.reshape(-1)
    masks = []
    for dy in range(-r, r + 1):
        for dx in range(-r, r + 1):
            masks.append((ii + dy >= 0) & (ii + dy < h) & (jj + dx >= 0) & (jj + dx < w))
    return np.stack(masks).astype(np.float32)                            # (K*K, H*W)


def _pick_fold(n_batch, channels):
    """Fill the 8-row f32 sublane dim, but keep >=2 grid steps on 2-TensorCore chips."""
    fold = 1
    while (fold * 2 * channels <= 8) and (n_batch % (fold * 2) == 0):
        fold *= 2
    if fold == 1:
        return 1
    try:
        kind = jax.devices()[0].device_kind.lower()
    except Exception:
        kind = ""
    two_core = any(tag in kind for tag in ("v7", "v4", "v5p"))
    while two_core and fold > 1 and (n_batch // fold) < 2:
        fold //= 2
    return fold


@functools.partial(jax.jit, static_argnames=("eps", "fold"))
def _encoder_block_forward(x, w_dw, b_dw, gamma, beta, w_up, b_up, w_dn, b_dn, eps, fold):
    N, C, H, W = x.shape
    K = w_dw.shape[-1]
    S = H * W
    C4 = w_up.shape[0]
    FC = fold * C
    G = N // fold

    # Fold `fold` batch elements onto the sublane axis: contiguous reshapes, no transpose.
    x_g = x.reshape(N, C, S).reshape(G, FC, S)

    # Fused per-tap effective weights: w_eff[k, f*C+c, s] = mask[k, s] * w_dw[c, k]
    tap_mask = jnp.asarray(_tap_masks(H, W, K))                          # (K*K, S)
    w_eff = tap_mask[:, None, :] * w_dw.reshape(C, K * K).T[:, :, None]  # (K*K, C, S)
    w_eff = jnp.tile(w_eff, (1, fold, 1))                                # (K*K, FC, S)

    eye_f = jnp.eye(fold, dtype=x.dtype)
    gmean = jnp.kron(eye_f, jnp.full((C, C), 1.0 / C, x.dtype))          # (FC, FC)
    wup_bd = jnp.kron(eye_f, w_up)                                       # (fold*4C, FC)
    wdn_bd = jnp.kron(eye_f, w_dn)                                       # (FC, fold*4C)

    bdw_t = jnp.tile(b_dw.reshape(C, 1), (fold, 1))
    g_t = jnp.tile(gamma.reshape(C, 1), (fold, 1))
    bt_t = jnp.tile(beta.reshape(C, 1), (fold, 1))
    bup_t = jnp.tile(b_up.reshape(C4, 1), (fold, 1))
    bdn_t = jnp.tile(b_dn.reshape(C, 1), (fold, 1))

    kern = functools.partial(encoder_block_kernel, img_w=W, ksize=K, eps=eps)

    out_g = pl.pallas_call(
        kern,
        out_shape=jax.ShapeDtypeStruct((G, FC, S), x.dtype),
        grid_spec=pltpu.PrefetchScalarGridSpec(
            num_scalar_prefetch=0,
            grid=(G,),
            in_specs=[
                pl.BlockSpec((1, FC, S), lambda g: (g, 0, 0)),           # x (per-step block)
                pl.BlockSpec((K * K, FC, S), lambda g: (0, 0, 0)),       # fused conv weights
                pl.BlockSpec((FC, 1), lambda g: (0, 0)),                 # conv bias
                pl.BlockSpec((FC, FC), lambda g: (0, 0)),                # group-mean matrix
                pl.BlockSpec((FC, 1), lambda g: (0, 0)),                 # LN gamma
                pl.BlockSpec((FC, 1), lambda g: (0, 0)),                 # LN beta
                pl.BlockSpec((fold * C4, FC), lambda g: (0, 0)),         # up-proj weight
                pl.BlockSpec((fold * C4, 1), lambda g: (0, 0)),          # up-proj bias
                pl.BlockSpec((FC, fold * C4), lambda g: (0, 0)),         # down-proj weight
                pl.BlockSpec((FC, 1), lambda g: (0, 0)),                 # down-proj bias
            ],
            out_specs=pl.BlockSpec((1, FC, S), lambda g: (g, 0, 0)),
        ),
        compiler_params=pltpu.CompilerParams(dimension_semantics=("parallel",)),
    )(x_g, w_eff, bdw_t, gmean, g_t, bt_t, wup_bd, bup_t, wdn_bd, bdn_t)

    return out_g.reshape(N, C, H, W)


def encoder_block_forward(x, w_dw, b_dw, gamma, beta, w_up, b_up, w_dn, b_dn,
                          eps=1e-6, fold=None):
    """x: (N, C, H, W) float32; w_dw: (C, K, K); returns (N, C, H, W)."""
    if fold is None:
        fold = _pick_fold(x.shape[0], x.shape[1])
    assert x.shape[0] % fold == 0, "batch must be divisible by fold"
    return _encoder_block_forward(x, w_dw, b_dw, gamma, beta, w_up, b_up, w_dn, b_dn,
                                  eps, fold)


def encoder_block_reference(x, w_dw, b_dw, gamma, beta, w_up, b_up, w_dn, b_dn, eps=1e-6):
    """Pure-JAX reference mirroring the PyTorch EncoderBlock forward."""
    N, C, H, W = x.shape
    hp = jax.lax.Precision.HIGHEST
    # depthwise conv: HWIO weight (K, K, 1, C), feature_group_count=C
    w_hwio = jnp.transpose(w_dw, (1, 2, 0))[:, :, None, :]
    dn = jax.lax.conv_dimension_numbers(x.shape, w_hwio.shape, ("NCHW", "HWIO", "NCHW"))
    r = jax.lax.conv_general_dilated(x, w_hwio, (1, 1), "SAME",
                                     dimension_numbers=dn, feature_group_count=C,
                                     precision=hp)
    r = r + b_dw[None, :, None, None]
    e = jnp.transpose(r, (0, 2, 3, 1))                                   # NHWC
    u = e.mean(-1, keepdims=True)
    s = ((e - u) ** 2).mean(-1, keepdims=True)
    e = (e - u) * jax.lax.rsqrt(s + eps) * gamma + beta
    h = _gelu_tanh(jnp.einsum("nhwc,oc->nhwo", e, w_up, precision=hp) + b_up)
    e = jnp.einsum("nhwo,co->nhwc", h, w_dn, precision=hp) + b_dn
    return jnp.transpose(e, (0, 3, 1, 2)) + x


if __name__ == "__main__":
    # EncoderBlock(in_channels=4) at small shapes: N=2, C=4, H=W=16, kernel 7, hidden 4*C=16
    N, C, H, W = 2, 4, 16, 16
    K = 7
    C4 = 4 * C

    key = jax.random.PRNGKey(0)
    keys = jax.random.split(key, 9)

    x = jax.random.normal(keys[0], (N, C, H, W), jnp.float32)
    w_dw = jax.random.normal(keys[1], (C, K, K), jnp.float32) * 0.1      # depthwise conv
    b_dw = jax.random.normal(keys[2], (C,), jnp.float32) * 0.1
    gamma = jnp.ones((C,), jnp.float32) + 0.1 * jax.random.normal(keys[3], (C,), jnp.float32)
    beta = 0.1 * jax.random.normal(keys[4], (C,), jnp.float32)
    w_up = jax.random.normal(keys[5], (C4, C), jnp.float32) * 0.2        # Linear(C, 4C)
    b_up = jax.random.normal(keys[6], (C4,), jnp.float32) * 0.1
    w_dn = jax.random.normal(keys[7], (C, C4), jnp.float32) * 0.2        # Linear(4C, C)
    b_dn = jax.random.normal(keys[8], (C,), jnp.float32) * 0.1

    ref = jax.block_until_ready(
        encoder_block_reference(x, w_dw, b_dw, gamma, beta, w_up, b_up, w_dn, b_dn))

    # Default (device-aware fold) path.
    out = jax.block_until_ready(
        encoder_block_forward(x, w_dw, b_dw, gamma, beta, w_up, b_up, w_dn, b_dn))
    assert out.shape == (N, C, H, W)
    assert jnp.allclose(out, ref, atol=2e-4, rtol=2e-4), "mismatch vs JAX reference (auto fold)"

    # Also exercise the other fold path so both layouts are validated regardless of chip.
    other_fold = 1 if _pick_fold(N, C) != 1 else 2
    out2 = jax.block_until_ready(
        encoder_block_forward(x, w_dw, b_dw, gamma, beta, w_up, b_up, w_dn, b_dn,
                              fold=other_fold))
    assert jnp.allclose(out2, ref, atol=2e-4, rtol=2e-4), "mismatch vs JAX reference (alt fold)"

    print("KERNEL_OK")
</pallas_src>

<mosaic_0001>
module attributes {stable_mosaic.version = 11 : i64} {
  func.func @encoder_block_kernel(%arg0: i32, %arg1: memref<1x8x256xf32, #tpu.memory_space<vmem>>, %arg2: memref<49x8x256xf32, #tpu.memory_space<vmem>>, %arg3: memref<8x1xf32, #tpu.memory_space<vmem>>, %arg4: memref<8x8xf32, #tpu.memory_space<vmem>>, %arg5: memref<8x1xf32, #tpu.memory_space<vmem>>, %arg6: memref<8x1xf32, #tpu.memory_space<vmem>>, %arg7: memref<32x8xf32, #tpu.memory_space<vmem>>, %arg8: memref<32x1xf32, #tpu.memory_space<vmem>>, %arg9: memref<8x32xf32, #tpu.memory_space<vmem>>, %arg10: memref<8x1xf32, #tpu.memory_space<vmem>>, %arg11: memref<1x8x256xf32, #tpu.memory_space<vmem>>) attributes {dimension_semantics = [#tpu.dimension_semantics<parallel>], iteration_bounds = array<i64: 1>, scalar_prefetch = 0 : i64, scratch_operands = 0 : i64, tpu.core_type = #tpu.core_type<tc>, window_params = [{transform_indices = @transform_0, window_bounds = array<i64: 1, 8, 256>}, {pipeline_mode = #tpu.pipeline_mode<synchronous>, transform_indices = @transform_1, window_bounds = array<i64: 49, 8, 256>}, {pipeline_mode = #tpu.pipeline_mode<synchronous>, transform_indices = @transform_2, window_bounds = array<i64: 8, 1>}, {pipeline_mode = #tpu.pipeline_mode<synchronous>, transform_indices = @transform_3, window_bounds = array<i64: 8, 8>}, {pipeline_mode = #tpu.pipeline_mode<synchronous>, transform_indices = @transform_4, window_bounds = array<i64: 8, 1>}, {pipeline_mode = #tpu.pipeline_mode<synchronous>, transform_indices = @transform_5, window_bounds = array<i64: 8, 1>}, {pipeline_mode = #tpu.pipeline_mode<synchronous>, transform_indices = @transform_6, window_bounds = array<i64: 32, 8>}, {pipeline_mode = #tpu.pipeline_mode<synchronous>, transform_indices = @transform_7, window_bounds = array<i64: 32, 1>}, {pipeline_mode = #tpu.pipeline_mode<synchronous>, transform_indices = @transform_8, window_bounds = array<i64: 8, 32>}, {pipeline_mode = #tpu.pipeline_mode<synchronous>, transform_indices = @transform_9, window_bounds = array<i64: 8, 1>}, {transform_indices = @transform_10, window_bounds = array<i64: 1, 8, 256>}]} {
    %c0 = arith.constant 0 : index
    %c0_0 = arith.constant 0 : index
    %c0_1 = arith.constant 0 : index
    %0 = vector.load %arg1[%c0, %c0_0, %c0_1] : memref<1x8x256xf32, #tpu.memory_space<vmem>>, vector<1x8x256xf32>
    %1 = vector.shape_cast %0 : vector<1x8x256xf32> to vector<8x256xf32>
    %cst = arith.constant 0.000000e+00 : f32
    %2 = vector.broadcast %cst : f32 to vector<8x256xf32>
    %cst_2 = arith.constant 0.000000e+00 : f32
    %3 = vector.broadcast %cst_2 : f32 to vector<8x256xf32>
    %cst_3 = arith.constant 0.000000e+00 : f32
    %4 = vector.broadcast %cst_3 : f32 to vector<8x256xf32>
    %cst_4 = arith.constant 0.000000e+00 : f32
    %5 = vector.broadcast %cst_4 : f32 to vector<8x256xf32>
    %c51_i32 = arith.constant 51 : i32
    %6 = tpu.dynamic_rotate %1 by %c51_i32 dim 1 : vector<8x256xf32>, i32 -> vector<8x256xf32>
    %c0_5 = arith.constant 0 : index
    %c0_6 = arith.constant 0 : index
    %c0_7 = arith.constant 0 : index
    %7 = vector.load %arg2[%c0_5, %c0_6, %c0_7] : memref<49x8x256xf32, #tpu.memory_space<vmem>>, vector<1x8x256xf32>
    %8 = vector.shape_cast %7 : vector<1x8x256xf32> to vector<8x256xf32>
    %9 = arith.mulf %6, %8 : vector<8x256xf32>
    %10 = arith.addf %2, %9 : vector<8x256xf32>
    %c50_i32 = arith.constant 50 : i32
    %11 = tpu.dynamic_rotate %1 by %c50_i32 dim 1 : vector<8x256xf32>, i32 -> vector<8x256xf32>
    %c1 = arith.constant 1 : index
    %c0_8 = arith.constant 0 : index
    %c0_9 = arith.constant 0 : index
    %12 = vector.load %arg2[%c1, %c0_8, %c0_9] : memref<49x8x256xf32, #tpu.memory_space<vmem>>, vector<1x8x256xf32>
    %13 = vector.shape_cast %12 : vector<1x8x256xf32> to vector<8x256xf32>
    %14 = arith.mulf %11, %13 : vector<8x256xf32>
    %15 = arith.addf %3, %14 : vector<8x256xf32>
    %c49_i32 = arith.constant 49 : i32
    %16 = tpu.dynamic_rotate %1 by %c49_i32 dim 1 : vector<8x256xf32>, i32 -> vector<8x256xf32>
    %c2 = arith.constant 2 : index
    %c0_10 = arith.constant 0 : index
    %c0_11 = arith.constant 0 : index
    %17 = vector.load %arg2[%c2, %c0_10, %c0_11] : memref<49x8x256xf32, #tpu.memory_space<vmem>>, vector<1x8x256xf32>
    %18 = vector.shape_cast %17 : vector<1x8x256xf32> to vector<8x256xf32>
    %19 = arith.mulf %16, %18 : vector<8x256xf32>
    %20 = arith.addf %4, %19 : vector<8x256xf32>
    %c48_i32 = arith.constant 48 : i32
    %21 = tpu.dynamic_rotate %1 by %c48_i32 dim 1 : vector<8x256xf32>, i32 -> vector<8x256xf32>
    %c3 = arith.constant 3 : index
    %c0_12 = arith.constant 0 : index
    %c0_13 = arith.constant 0 : index
    %22 = vector.load %arg2[%c3, %c0_12, %c0_13] : memref<49x8x256xf32, #tpu.memory_space<vmem>>, vector<1x8x256xf32>
    %23 = vector.shape_cast %22 : vector<1x8x256xf32> to vector<8x256xf32>
    %24 = arith.mulf %21, %23 : vector<8x256xf32>
    %25 = arith.addf %5, %24 : vector<8x256xf32>
    %c47_i32 = arith.constant 47 : i32
    %26 = tpu.dynamic_rotate %1 by %c47_i32 dim 1 : vector<8x256xf32>, i32 -> vector<8x256xf32>
    %c4 = arith.constant 4 : index
    %c0_14 = arith.constant 0 : index
    %c0_15 = arith.constant 0 : index
    %27 = vector.load %arg2[%c4, %c0_14, %c0_15] : memref<49x8x256xf32, #tpu.memory_space<vmem>>, vector<1x8x256xf32>
    %28 = vector.shape_cast %27 : vector<1x8x256xf32> to vector<8x256xf32>
    %29 = arith.mulf %26, %28 : vector<8x256xf32>
    %30 = arith.addf %10, %29 : vector<8x256xf32>
    %c46_i32 = arith.constant 46 : i32
    %31 = tpu.dynamic_rotate %1 by %c46_i32 dim 1 : vector<8x256xf32>, i32 -> vector<8x256xf32>
    %c5 = arith.constant 5 : index
    %c0_16 = arith.constant 0 : index
    %c0_17 = arith.constant 0 : index
    %32 = vector.load %arg2[%c5, %c0_16, %c0_17] : memref<49x8x256xf32, #tpu.memory_space<vmem>>, vector<1x8x256xf32>
    %33 = vector.shape_cast %32 : vector<1x8x256xf32> to vector<8x256xf32>
    %34 = arith.mulf %31, %33 : vector<8x256xf32>
    %35 = arith.addf %15, %34 : vector<8x256xf32>
    %c45_i32 = arith.constant 45 : i32
    %36 = tpu.dynamic_rotate %1 by %c45_i32 dim 1 : vector<8x256xf32>, i32 -> vector<8x256xf32>
    %c6 = arith.constant 6 : index
    %c0_18 = arith.constant 0 : index
    %c0_19 = arith.constant 0 : index
    %37 = vector.load %arg2[%c6, %c0_18, %c0_19] : memref<49x8x256xf32, #tpu.memory_space<vmem>>, vector<1x8x256xf32>
    %38 = vector.shape_cast %37 : vector<1x8x256xf32> to vector<8x256xf32>
    %39 = arith.mulf %36, %38 : vector<8x256xf32>
    %40 = arith.addf %20, %39 : vector<8x256xf32>
    %c35_i32 = arith.constant 35 : i32
    %41 = tpu.dynamic_rotate %1 by %c35_i32 dim 1 : vector<8x256xf32>, i32 -> vector<8x256xf32>
    %c7 = arith.constant 7 : index
    %c0_20 = arith.constant 0 : index
    %c0_21 = arith.constant 0 : index
    %42 = vector.load %arg2[%c7, %c0_20, %c0_21] : memref<49x8x256xf32, #tpu.memory_space<vmem>>, vector<1x8x256xf32>
    %43 = vector.shape_cast %42 : vector<1x8x256xf32> to vector<8x256xf32>
    %44 = arith.mulf %41, %43 : vector<8x256xf32>
    %45 = arith.addf %25, %44 : vector<8x256xf32>
    %c34_i32 = arith.constant 34 : i32
    %46 = tpu.dynamic_rotate %1 by %c34_i32 dim 1 : vector<8x256xf32>, i32 -> vector<8x256xf32>
    %c8 = arith.constant 8 : index
    %c0_22 = arith.constant 0 : index
    %c0_23 = arith.constant 0 : index
    %47 = vector.load %arg2[%c8, %c0_22, %c0_23] : memref<49x8x256xf32, #tpu.memory_space<vmem>>, vector<1x8x256xf32>
    %48 = vector.shape_cast %47 : vector<1x8x256xf32> to vector<8x256xf32>
    %49 = arith.mulf %46, %48 : vector<8x256xf32>
    %50 = arith.addf %30, %49 : vector<8x256xf32>
    %c33_i32 = arith.constant 33 : i32
    %51 = tpu.dynamic_rotate %1 by %c33_i32 dim 1 : vector<8x256xf32>, i32 -> vector<8x256xf32>
    %c9 = arith.constant 9 : index
    %c0_24 = arith.constant 0 : index
    %c0_25 = arith.constant 0 : index
    %52 = vector.load %arg2[%c9, %c0_24, %c0_25] : memref<49x8x256xf32, #tpu.memory_space<vmem>>, vector<1x8x256xf32>
    %53 = vector.shape_cast %52 : vector<1x8x256xf32> to vector<8x256xf32>
    %54 = arith.mulf %51, %53 : vector<8x256xf32>
    %55 = arith.addf %35, %54 : vector<8x256xf32>
    %c32_i32 = arith.constant 32 : i32
    %56 = tpu.dynamic_rotate %1 by %c32_i32 dim 1 : vector<8x256xf32>, i32 -> vector<8x256xf32>
    %c10 = arith.constant 10 : index
    %c0_26 = arith.constant 0 : index
    %c0_27 = arith.constant 0 : index
    %57 = vector.load %arg2[%c10, %c0_26, %c0_27] : memref<49x8x256xf32, #tpu.memory_space<vmem>>, vector<1x8x256xf32>
    %58 = vector.shape_cast %57 : vector<1x8x256xf32> to vector<8x256xf32>
    %59 = arith.mulf %56, %58 : vector<8x256xf32>
    %60 = arith.addf %40, %59 : vector<8x256xf32>
    %c31_i32 = arith.constant 31 : i32
    %61 = tpu.dynamic_rotate %1 by %c31_i32 dim 1 : vector<8x256xf32>, i32 -> vector<8x256xf32>
    %c11 = arith.constant 11 : index
    %c0_28 = arith.constant 0 : index
    %c0_29 = arith.constant 0 : index
    %62 = vector.load %arg2[%c11, %c0_28, %c0_29] : memref<49x8x256xf32, #tpu.memory_space<vmem>>, vector<1x8x256xf32>
    %63 = vector.shape_cast %62 : vector<1x8x256xf32> to vector<8x256xf32>
    %64 = arith.mulf %61, %63 : vector<8x256xf32>
    %65 = arith.addf %45, %64 : vector<8x256xf32>
    %c30_i32 = arith.constant 30 : i32
    %66 = tpu.dynamic_rotate %1 by %c30_i32 dim 1 : vector<8x256xf32>, i32 -> vector<8x256xf32>
    %c12 = arith.constant 12 : index
    %c0_30 = arith.constant 0 : index
    %c0_31 = arith.constant 0 : index
    %67 = vector.load %arg2[%c12, %c0_30, %c0_31] : memref<49x8x256xf32, #tpu.memory_space<vmem>>, vector<1x8x256xf32>
    %68 = vector.shape_cast %67 : vector<1x8x256xf32> to vector<8x256xf32>
    %69 = arith.mulf %66, %68 : vector<8x256xf32>
    %70 = arith.addf %50, %69 : vector<8x256xf32>
    %c29_i32 = arith.constant 29 : i32
    %71 = tpu.dynamic_rotate %1 by %c29_i32 dim 1 : vector<8x256xf32>, i32 -> vector<8x256xf32>
    %c13 = arith.constant 13 : index
    %c0_32 = arith.constant 0 : index
    %c0_33 = arith.constant 0 : index
    %72 = vector.load %arg2[%c13, %c0_32, %c0_33] : memref<49x8x256xf32, #tpu.memory_space<vmem>>, vector<1x8x256xf32>
    %73 = vector.shape_cast %72 : vector<1x8x256xf32> to vector<8x256xf32>
    %74 = arith.mulf %71, %73 : vector<8x256xf32>
    %75 = arith.addf %55, %74 : vector<8x256xf32>
    %c19_i32 = arith.constant 19 : i32
    %76 = tpu.dynamic_rotate %1 by %c19_i32 dim 1 : vector<8x256xf32>, i32 -> vector<8x256xf32>
    %c14 = arith.constant 14 : index
    %c0_34 = arith.constant 0 : index
    %c0_35 = arith.constant 0 : index
    %77 = vector.load %arg2[%c14, %c0_34, %c0_35] : memref<49x8x256xf32, #tpu.memory_space<vmem>>, vector<1x8x256xf32>
    %78 = vector.shape_cast %77 : vector<1x8x256xf32> to vector<8x256xf32>
    %79 = arith.mulf %76, %78 : vector<8x256xf32>
    %80 = arith.addf %60, %79 : vector<8x256xf32>
    %c18_i32 = arith.constant 18 : i32
    %81 = tpu.dynamic_rotate %1 by %c18_i32 dim 1 : vector<8x256xf32>, i32 -> vector<8x256xf32>
    %c15 = arith.constant 15 : index
    %c0_36 = arith.constant 0 : index
    %c0_37 = arith.constant 0 : index
    %82 = vector.load %arg2[%c15, %c0_36, %c0_37] : memref<49x8x256xf32, #tpu.memory_space<vmem>>, vector<1x8x256xf32>
    %83 = vector.shape_cast %82 : vector<1x8x256xf32> to vector<8x256xf32>
    %84 = arith.mulf %81, %83 : vector<8x256xf32>
    %85 = arith.addf %65, %84 : vector<8x256xf32>
    %c17_i32 = arith.constant 17 : i32
    %86 = tpu.dynamic_rotate %1 by %c17_i32 dim 1 : vector<8x256xf32>, i32 -> vector<8x256xf32>
    %c16 = arith.constant 16 : index
    %c0_38 = arith.constant 0 : index
    %c0_39 = arith.constant 0 : index
    %87 = vector.load %arg2[%c16, %c0_38, %c0_39] : memref<49x8x256xf32, #tpu.memory_space<vmem>>, vector<1x8x256xf32>
    %88 = vector.shape_cast %87 : vector<1x8x256xf32> to vector<8x256xf32>
    %89 = arith.mulf %86, %88 : vector<8x256xf32>
    %90 = arith.addf %70, %89 : vector<8x256xf32>
    %c16_i32 = arith.constant 16 : i32
    %91 = tpu.dynamic_rotate %1 by %c16_i32 dim 1 : vector<8x256xf32>, i32 -> vector<8x256xf32>
    %c17 = arith.constant 17 : index
    %c0_40 = arith.constant 0 : index
    %c0_41 = arith.constant 0 : index
    %92 = vector.load %arg2[%c17, %c0_40, %c0_41] : memref<49x8x256xf32, #tpu.memory_space<vmem>>, vector<1x8x256xf32>
    %93 = vector.shape_cast %92 : vector<1x8x256xf32> to vector<8x256xf32>
    %94 = arith.mulf %91, %93 : vector<8x256xf32>
    %95 = arith.addf %75, %94 : vector<8x256xf32>
    %c15_i32 = arith.constant 15 : i32
    %96 = tpu.dynamic_rotate %1 by %c15_i32 dim 1 : vector<8x256xf32>, i32 -> vector<8x256xf32>
    %c18 = arith.constant 18 : index
    %c0_42 = arith.constant 0 : index
    %c0_43 = arith.constant 0 : index
    %97 = vector.load %arg2[%c18, %c0_42, %c0_43] : memref<49x8x256xf32, #tpu.memory_space<vmem>>, vector<1x8x256xf32>
    %98 = vector.shape_cast %97 : vector<1x8x256xf32> to vector<8x256xf32>
    %99 = arith.mulf %96, %98 : vector<8x256xf32>
    %100 = arith.addf %80, %99 : vector<8x256xf32>
    %c14_i32 = arith.constant 14 : i32
    %101 = tpu.dynamic_rotate %1 by %c14_i32 dim 1 : vector<8x256xf32>, i32 -> vector<8x256xf32>
    %c19 = arith.constant 19 : index
    %c0_44 = arith.constant 0 : index
    %c0_45 = arith.constant 0 : index
    %102 = vector.load %arg2[%c19, %c0_44, %c0_45] : memref<49x8x256xf32, #tpu.memory_space<vmem>>, vector<1x8x256xf32>
    %103 = vector.shape_cast %102 : vector<1x8x256xf32> to vector<8x256xf32>
    %104 = arith.mulf %101, %103 : vector<8x256xf32>
    %105 = arith.addf %85, %104 : vector<8x256xf32>
    %c13_i32 = arith.constant 13 : i32
    %106 = tpu.dynamic_rotate %1 by %c13_i32 dim 1 : vector<8x256xf32>, i32 -> vector<8x256xf32>
    %c20 = arith.constant 20 : index
    %c0_46 = arith.constant 0 : index
    %c0_47 = arith.constant 0 : index
    %107 = vector.load %arg2[%c20, %c0_46, %c0_47] : memref<49x8x256xf32, #tpu.memory_space<vmem>>, vector<1x8x256xf32>
    %108 = vector.shape_cast %107 : vector<1x8x256xf32> to vector<8x256xf32>
    %109 = arith.mulf %106, %108 : vector<8x256xf32>
    %110 = arith.addf %90, %109 : vector<8x256xf32>
    %c3_i32 = arith.constant 3 : i32
    %111 = tpu.dynamic_rotate %1 by %c3_i32 dim 1 : vector<8x256xf32>, i32 -> vector<8x256xf32>
    %c21 = arith.constant 21 : index
    %c0_48 = arith.constant 0 : index
    %c0_49 = arith.constant 0 : index
    %112 = vector.load %arg2[%c21, %c0_48, %c0_49] : memref<49x8x256xf32, #tpu.memory_space<vmem>>, vector<1x8x256xf32>
    %113 = vector.shape_cast %112 : vector<1x8x256xf32> to vector<8x256xf32>
    %114 = arith.mulf %111, %113 : vector<8x256xf32>
    %115 = arith.addf %95, %114 : vector<8x256xf32>
    %c2_i32 = arith.constant 2 : i32
    %116 = tpu.dynamic_rotate %1 by %c2_i32 dim 1 : vector<8x256xf32>, i32 -> vector<8x256xf32>
    %c22 = arith.constant 22 : index
    %c0_50 = arith.constant 0 : index
    %c0_51 = arith.constant 0 : index
    %117 = vector.load %arg2[%c22, %c0_50, %c0_51] : memref<49x8x256xf32, #tpu.memory_space<vmem>>, vector<1x8x256xf32>
    %118 = vector.shape_cast %117 : vector<1x8x256xf32> to vector<8x256xf32>
    %119 = arith.mulf %116, %118 : vector<8x256xf32>
    %120 = arith.addf %100, %119 : vector<8x256xf32>
    %c1_i32 = arith.constant 1 : i32
    %121 = tpu.dynamic_rotate %1 by %c1_i32 dim 1 : vector<8x256xf32>, i32 -> vector<8x256xf32>
    %c23 = arith.constant 23 : index
    %c0_52 = arith.constant 0 : index
    %c0_53 = arith.constant 0 : index
    %122 = vector.load %arg2[%c23, %c0_52, %c0_53] : memref<49x8x256xf32, #tpu.memory_space<vmem>>, vector<1x8x256xf32>
    %123 = vector.shape_cast %122 : vector<1x8x256xf32> to vector<8x256xf32>
    %124 = arith.mulf %121, %123 : vector<8x256xf32>
    %125 = arith.addf %105, %124 : vector<8x256xf32>
    %c24 = arith.constant 24 : index
    %c0_54 = arith.constant 0 : index
    %c0_55 = arith.constant 0 : index
    %126 = vector.load %arg2[%c24, %c0_54, %c0_55] : memref<49x8x256xf32, #tpu.memory_space<vmem>>, vector<1x8x256xf32>
    %127 = vector.shape_cast %126 : vector<1x8x256xf32> to vector<8x256xf32>
    %128 = arith.mulf %1, %127 : vector<8x256xf32>
    %129 = arith.addf %110, %128 : vector<8x256xf32>
    %c255_i32 = arith.constant 255 : i32
    %130 = tpu.dynamic_rotate %1 by %c255_i32 dim 1 : vector<8x256xf32>, i32 -> vector<8x256xf32>
    %c25 = arith.constant 25 : index
    %c0_56 = arith.constant 0 : index
    %c0_57 = arith.constant 0 : index
    %131 = vector.load %arg2[%c25, %c0_56, %c0_57] : memref<49x8x256xf32, #tpu.memory_space<vmem>>, vector<1x8x256xf32>
    %132 = vector.shape_cast %131 : vector<1x8x256xf32> to vector<8x256xf32>
    %133 = arith.mulf %130, %132 : vector<8x256xf32>
    %134 = arith.addf %115, %133 : vector<8x256xf32>
    %c254_i32 = arith.constant 254 : i32
    %135 = tpu.dynamic_rotate %1 by %c254_i32 dim 1 : vector<8x256xf32>, i32 -> vector<8x256xf32>
    %c26 = arith.constant 26 : index
    %c0_58 = arith.constant 0 : index
    %c0_59 = arith.constant 0 : index
    %136 = vector.load %arg2[%c26, %c0_58, %c0_59] : memref<49x8x256xf32, #tpu.memory_space<vmem>>, vector<1x8x256xf32>
    %137 = vector.shape_cast %136 : vector<1x8x256xf32> to vector<8x256xf32>
    %138 = arith.mulf %135, %137 : vector<8x256xf32>
    %139 = arith.addf %120, %138 : vector<8x256xf32>
    %c253_i32 = arith.constant 253 : i32
    %140 = tpu.dynamic_rotate %1 by %c253_i32 dim 1 : vector<8x256xf32>, i32 -> vector<8x256xf32>
    %c27 = arith.constant 27 : index
    %c0_60 = arith.constant 0 : index
    %c0_61 = arith.constant 0 : index
    %141 = vector.load %arg2[%c27, %c0_60, %c0_61] : memref<49x8x256xf32, #tpu.memory_space<vmem>>, vector<1x8x256xf32>
    %142 = vector.shape_cast %141 : vector<1x8x256xf32> to vector<8x256xf32>
    %143 = arith.mulf %140, %142 : vector<8x256xf32>
    %144 = arith.addf %125, %143 : vector<8x256xf32>
    %c243_i32 = arith.constant 243 : i32
    %145 = tpu.dynamic_rotate %1 by %c243_i32 dim 1 : vector<8x256xf32>, i32 -> vector<8x256xf32>
    %c28 = arith.constant 28 : index
    %c0_62 = arith.constant 0 : index
    %c0_63 = arith.constant 0 : index
    %146 = vector.load %arg2[%c28, %c0_62, %c0_63] : memref<49x8x256xf32, #tpu.memory_space<vmem>>, vector<1x8x256xf32>
    %147 = vector.shape_cast %146 : vector<1x8x256xf32> to vector<8x256xf32>
    %148 = arith.mulf %145, %147 : vector<8x256xf32>
    %149 = arith.addf %129, %148 : vector<8x256xf32>
    %c242_i32 = arith.constant 242 : i32
    %150 = tpu.dynamic_rotate %1 by %c242_i32 dim 1 : vector<8x256xf32>, i32 -> vector<8x256xf32>
    %c29 = arith.constant 29 : index
    %c0_64 = arith.constant 0 : index
    %c0_65 = arith.constant 0 : index
    %151 = vector.load %arg2[%c29, %c0_64, %c0_65] : memref<49x8x256xf32, #tpu.memory_space<vmem>>, vector<1x8x256xf32>
    %152 = vector.shape_cast %151 : vector<1x8x256xf32> to vector<8x256xf32>
    %153 = arith.mulf %150, %152 : vector<8x256xf32>
    %154 = arith.addf %134, %153 : vector<8x256xf32>
    %c241_i32 = arith.constant 241 : i32
    %155 = tpu.dynamic_rotate %1 by %c241_i32 dim 1 : vector<8x256xf32>, i32 -> vector<8x256xf32>
    %c30 = arith.constant 30 : index
    %c0_66 = arith.constant 0 : index
    %c0_67 = arith.constant 0 : index
    %156 = vector.load %arg2[%c30, %c0_66, %c0_67] : memref<49x8x256xf32, #tpu.memory_space<vmem>>, vector<1x8x256xf32>
    %157 = vector.shape_cast %156 : vector<1x8x256xf32> to vector<8x256xf32>
    %158 = arith.mulf %155, %157 : vector<8x256xf32>
    %159 = arith.addf %139, %158 : vector<8x256xf32>
    %c240_i32 = arith.constant 240 : i32
    %160 = tpu.dynamic_rotate %1 by %c240_i32 dim 1 : vector<8x256xf32>, i32 -> vector<8x256xf32>
    %c31 = arith.constant 31 : index
    %c0_68 = arith.constant 0 : index
    %c0_69 = arith.constant 0 : index
    %161 = vector.load %arg2[%c31, %c0_68, %c0_69] : memref<49x8x256xf32, #tpu.memory_space<vmem>>, vector<1x8x256xf32>
    %162 = vector.shape_cast %161 : vector<1x8x256xf32> to vector<8x256xf32>
    %163 = arith.mulf %160, %162 : vector<8x256xf32>
    %164 = arith.addf %144, %163 : vector<8x256xf32>
    %c239_i32 = arith.constant 239 : i32
    %165 = tpu.dynamic_rotate %1 by %c239_i32 dim 1 : vector<8x256xf32>, i32 -> vector<8x256xf32>
    %c32 = arith.constant 32 : index
    %c0_70 = arith.constant 0 : index
    %c0_71 = arith.constant 0 : index
    %166 = vector.load %arg2[%c32, %c0_70, %c0_71] : memref<49x8x256xf32, #tpu.memory_space<vmem>>, vector<1x8x256xf32>
    %167 = vector.shape_cast %166 : vector<1x8x256xf32> to vector<8x256xf32>
    %168 = arith.mulf %165, %167 : vector<8x256xf32>
    %169 = arith.addf %149, %168 : vector<8x256xf32>
    %c238_i32 = arith.constant 238 : i32
    %170 = tpu.dynamic_rotate %1 by %c238_i32 dim 1 : vector<8x256xf32>, i32 -> vector<8x256xf32>
    %c33 = arith.constant 33 : index
    %c0_72 = arith.constant 0 : index
    %c0_73 = arith.constant 0 : index
    %171 = vector.load %arg2[%c33, %c0_72, %c0_73] : memref<49x8x256xf32, #tpu.memory_space<vmem>>, vector<1x8x256xf32>
    %172 = vector.shape_cast %171 : vector<1x8x256xf32> to vector<8x256xf32>
    %173 = arith.mulf %170, %172 : vector<8x256xf32>
    %174 = arith.addf %154, %173 : vector<8x256xf32>
    %c237_i32 = arith.constant 237 : i32
    %175 = tpu.dynamic_rotate %1 by %c237_i32 dim 1 : vector<8x256xf32>, i32 -> vector<8x256xf32>
    %c34 = arith.constant 34 : index
    %c0_74 = arith.constant 0 : index
    %c0_75 = arith.constant 0 : index
    %176 = vector.load %arg2[%c34, %c0_74, %c0_75] : memref<49x8x256xf32, #tpu.memory_space<vmem>>, vector<1x8x256xf32>
    %177 = vector.shape_cast %176 : vector<1x8x256xf32> to vector<8x256xf32>
    %178 = arith.mulf %175, %177 : vector<8x256xf32>
    %179 = arith.addf %159, %178 : vector<8x256xf32>
    %c227_i32 = arith.constant 227 : i32
    %180 = tpu.dynamic_rotate %1 by %c227_i32 dim 1 : vector<8x256xf32>, i32 -> vector<8x256xf32>
    %c35 = arith.constant 35 : index
    %c0_76 = arith.constant 0 : index
    %c0_77 = arith.constant 0 : index
    %181 = vector.load %arg2[%c35, %c0_76, %c0_77] : memref<49x8x256xf32, #tpu.memory_space<vmem>>, vector<1x8x256xf32>
    %182 = vector.shape_cast %181 : vector<1x8x256xf32> to vector<8x256xf32>
    %183 = arith.mulf %180, %182 : vector<8x256xf32>
    %184 = arith.addf %164, %183 : vector<8x256xf32>
    %c226_i32 = arith.constant 226 : i32
    %185 = tpu.dynamic_rotate %1 by %c226_i32 dim 1 : vector<8x256xf32>, i32 -> vector<8x256xf32>
    %c36 = arith.constant 36 : index
    %c0_78 = arith.constant 0 : index
    %c0_79 = arith.constant 0 : index
    %186 = vector.load %arg2[%c36, %c0_78, %c0_79] : memref<49x8x256xf32, #tpu.memory_space<vmem>>, vector<1x8x256xf32>
    %187 = vector.shape_cast %186 : vector<1x8x256xf32> to vector<8x256xf32>
    %188 = arith.mulf %185, %187 : vector<8x256xf32>
    %189 = arith.addf %169, %188 : vector<8x256xf32>
    %c225_i32 = arith.constant 225 : i32
    %190 = tpu.dynamic_rotate %1 by %c225_i32 dim 1 : vector<8x256xf32>, i32 -> vector<8x256xf32>
    %c37 = arith.constant 37 : index
    %c0_80 = arith.constant 0 : index
    %c0_81 = arith.constant 0 : index
    %191 = vector.load %arg2[%c37, %c0_80, %c0_81] : memref<49x8x256xf32, #tpu.memory_space<vmem>>, vector<1x8x256xf32>
    %192 = vector.shape_cast %191 : vector<1x8x256xf32> to vector<8x256xf32>
    %193 = arith.mulf %190, %192 : vector<8x256xf32>
    %194 = arith.addf %174, %193 : vector<8x256xf32>
    %c224_i32 = arith.constant 224 : i32
    %195 = tpu.dynamic_rotate %1 by %c224_i32 dim 1 : vector<8x256xf32>, i32 -> vector<8x256xf32>
    %c38 = arith.constant 38 : index
    %c0_82 = arith.constant 0 : index
    %c0_83 = arith.constant 0 : index
    %196 = vector.load %arg2[%c38, %c0_82, %c0_83] : memref<49x8x256xf32, #tpu.memory_space<vmem>>, vector<1x8x256xf32>
    %197 = vector.shape_cast %196 : vector<1x8x256xf32> to vector<8x256xf32>
    %198 = arith.mulf %195, %197 : vector<8x256xf32>
    %199 = arith.addf %179, %198 : vector<8x256xf32>
    %c223_i32 = arith.constant 223 : i32
    %200 = tpu.dynamic_rotate %1 by %c223_i32 dim 1 : vector<8x256xf32>, i32 -> vector<8x256xf32>
    %c39 = arith.constant 39 : index
    %c0_84 = arith.constant 0 : index
    %c0_85 = arith.constant 0 : index
    %201 = vector.load %arg2[%c39, %c0_84, %c0_85] : memref<49x8x256xf32, #tpu.memory_space<vmem>>, vector<1x8x256xf32>
    %202 = vector.shape_cast %201 : vector<1x8x256xf32> to vector<8x256xf32>
    %203 = arith.mulf %200, %202 : vector<8x256xf32>
    %204 = arith.addf %184, %203 : vector<8x256xf32>
    %c222_i32 = arith.constant 222 : i32
    %205 = tpu.dynamic_rotate %1 by %c222_i32 dim 1 : vector<8x256xf32>, i32 -> vector<8x256xf32>
    %c40 = arith.constant 40 : index
    %c0_86 = arith.constant 0 : index
    %c0_87 = arith.constant 0 : index
    %206 = vector.load %arg2[%c40, %c0_86, %c0_87] : memref<49x8x256xf32, #tpu.memory_space<vmem>>, vector<1x8x256xf32>
    %207 = vector.shape_cast %206 : vector<1x8x256xf32> to vector<8x256xf32>
    %208 = arith.mulf %205, %207 : vector<8x256xf32>
    %209 = arith.addf %189, %208 : vector<8x256xf32>
    %c221_i32 = arith.constant 221 : i32
    %210 = tpu.dynamic_rotate %1 by %c221_i32 dim 1 : vector<8x256xf32>, i32 -> vector<8x256xf32>
    %c41 = arith.constant 41 : index
    %c0_88 = arith.constant 0 : index
    %c0_89 = arith.constant 0 : index
    %211 = vector.load %arg2[%c41, %c0_88, %c0_89] : memref<49x8x256xf32, #tpu.memory_space<vmem>>, vector<1x8x256xf32>
    %212 = vector.shape_cast %211 : vector<1x8x256xf32> to vector<8x256xf32>
    %213 = arith.mulf %210, %212 : vector<8x256xf32>
    %214 = arith.addf %194, %213 : vector<8x256xf32>
    %c211_i32 = arith.constant 211 : i32
    %215 = tpu.dynamic_rotate %1 by %c211_i32 dim 1 : vector<8x256xf32>, i32 -> vector<8x256xf32>
    %c42 = arith.constant 42 : index
    %c0_90 = arith.constant 0 : index
    %c0_91 = arith.constant 0 : index
    %216 = vector.load %arg2[%c42, %c0_90, %c0_91] : memref<49x8x256xf32, #tpu.memory_space<vmem>>, vector<1x8x256xf32>
    %217 = vector.shape_cast %216 : vector<1x8x256xf32> to vector<8x256xf32>
    %218 = arith.mulf %215, %217 : vector<8x256xf32>
    %219 = arith.addf %199, %218 : vector<8x256xf32>
    %c210_i32 = arith.constant 210 : i32
    %220 = tpu.dynamic_rotate %1 by %c210_i32 dim 1 : vector<8x256xf32>, i32 -> vector<8x256xf32>
    %c43 = arith.constant 43 : index
    %c0_92 = arith.constant 0 : index
    %c0_93 = arith.constant 0 : index
    %221 = vector.load %arg2[%c43, %c0_92, %c0_93] : memref<49x8x256xf32, #tpu.memory_space<vmem>>, vector<1x8x256xf32>
    %222 = vector.shape_cast %221 : vector<1x8x256xf32> to vector<8x256xf32>
    %223 = arith.mulf %220, %222 : vector<8x256xf32>
    %224 = arith.addf %204, %223 : vector<8x256xf32>
    %c209_i32 = arith.constant 209 : i32
    %225 = tpu.dynamic_rotate %1 by %c209_i32 dim 1 : vector<8x256xf32>, i32 -> vector<8x256xf32>
    %c44 = arith.constant 44 : index
    %c0_94 = arith.constant 0 : index
    %c0_95 = arith.constant 0 : index
    %226 = vector.load %arg2[%c44, %c0_94, %c0_95] : memref<49x8x256xf32, #tpu.memory_space<vmem>>, vector<1x8x256xf32>
    %227 = vector.shape_cast %226 : vector<1x8x256xf32> to vector<8x256xf32>
    %228 = arith.mulf %225, %227 : vector<8x256xf32>
    %229 = arith.addf %209, %228 : vector<8x256xf32>
    %c208_i32 = arith.constant 208 : i32
    %230 = tpu.dynamic_rotate %1 by %c208_i32 dim 1 : vector<8x256xf32>, i32 -> vector<8x256xf32>
    %c45 = arith.constant 45 : index
    %c0_96 = arith.constant 0 : index
    %c0_97 = arith.constant 0 : index
    %231 = vector.load %arg2[%c45, %c0_96, %c0_97] : memref<49x8x256xf32, #tpu.memory_space<vmem>>, vector<1x8x256xf32>
    %232 = vector.shape_cast %231 : vector<1x8x256xf32> to vector<8x256xf32>
    %233 = arith.mulf %230, %232 : vector<8x256xf32>
    %234 = arith.addf %214, %233 : vector<8x256xf32>
    %c207_i32 = arith.constant 207 : i32
    %235 = tpu.dynamic_rotate %1 by %c207_i32 dim 1 : vector<8x256xf32>, i32 -> vector<8x256xf32>
    %c46 = arith.constant 46 : index
    %c0_98 = arith.constant 0 : index
    %c0_99 = arith.constant 0 : index
    %236 = vector.load %arg2[%c46, %c0_98, %c0_99] : memref<49x8x256xf32, #tpu.memory_space<vmem>>, vector<1x8x256xf32>
    %237 = vector.shape_cast %236 : vector<1x8x256xf32> to vector<8x256xf32>
    %238 = arith.mulf %235, %237 : vector<8x256xf32>
    %239 = arith.addf %219, %238 : vector<8x256xf32>
    %c206_i32 = arith.constant 206 : i32
    %240 = tpu.dynamic_rotate %1 by %c206_i32 dim 1 : vector<8x256xf32>, i32 -> vector<8x256xf32>
    %c47 = arith.constant 47 : index
    %c0_100 = arith.constant 0 : index
    %c0_101 = arith.constant 0 : index
    %241 = vector.load %arg2[%c47, %c0_100, %c0_101] : memref<49x8x256xf32, #tpu.memory_space<vmem>>, vector<1x8x256xf32>
    %242 = vector.shape_cast %241 : vector<1x8x256xf32> to vector<8x256xf32>
    %243 = arith.mulf %240, %242 : vector<8x256xf32>
    %244 = arith.addf %224, %243 : vector<8x256xf32>
    %c205_i32 = arith.constant 205 : i32
    %245 = tpu.dynamic_rotate %1 by %c205_i32 dim 1 : vector<8x256xf32>, i32 -> vector<8x256xf32>
    %c48 = arith.constant 48 : index
    %c0_102 = arith.constant 0 : index
    %c0_103 = arith.constant 0 : index
    %246 = vector.load %arg2[%c48, %c0_102, %c0_103] : memref<49x8x256xf32, #tpu.memory_space<vmem>>, vector<1x8x256xf32>
    %247 = vector.shape_cast %246 : vector<1x8x256xf32> to vector<8x256xf32>
    %248 = arith.mulf %245, %247 : vector<8x256xf32>
    %249 = arith.addf %229, %248 : vector<8x256xf32>
    %250 = arith.addf %249, %234 : vector<8x256xf32>
    %251 = arith.addf %239, %244 : vector<8x256xf32>
    %252 = arith.addf %250, %251 : vector<8x256xf32>
    %c0_104 = arith.constant 0 : index
    %c0_105 = arith.constant 0 : index
    %253 = vector.load %arg3[%c0_104, %c0_105] : memref<8x1xf32, #tpu.memory_space<vmem>>, vector<8x1xf32>
    %254 = vector.broadcast %253 : vector<8x1xf32> to vector<8x256xf32>
    %255 = arith.addf %252, %254 : vector<8x256xf32>
    %c0_106 = arith.constant 0 : index
    %c0_107 = arith.constant 0 : index
    %256 = vector.load %arg4[%c0_106, %c0_107] : memref<8x8xf32, #tpu.memory_space<vmem>>, vector<8x8xf32>
    %cst_108 = arith.constant dense<0.000000e+00> : vector<8x256xf32>
    %257 = tpu.matmul %256, %255, %cst_108 {dimension_numbers = #tpu.dot_dimension_numbers<[1], [0], [0], [1], [0, 0, 1, 1], [], []>, precision = #tpu.contract_precision<fp32>} : vector<8x8xf32>, vector<8x256xf32>, vector<8x256xf32> -> vector<8x256xf32>
    %258 = arith.subf %255, %257 : vector<8x256xf32>
    %259 = arith.mulf %258, %258 : vector<8x256xf32>
    %cst_109 = arith.constant dense<0.000000e+00> : vector<8x256xf32>
    %260 = tpu.matmul %256, %259, %cst_109 {dimension_numbers = #tpu.dot_dimension_numbers<[1], [0], [0], [1], [0, 0, 1, 1], [], []>, precision = #tpu.contract_precision<fp32>} : vector<8x8xf32>, vector<8x256xf32>, vector<8x256xf32> -> vector<8x256xf32>
    %cst_110 = arith.constant 9.99999997E-7 : f32
    %261 = vector.broadcast %cst_110 : f32 to vector<8x256xf32>
    %262 = arith.addf %260, %261 : vector<8x256xf32>
    %263 = math.rsqrt %262 : vector<8x256xf32>
    %264 = arith.mulf %258, %263 : vector<8x256xf32>
    %c0_111 = arith.constant 0 : index
    %c0_112 = arith.constant 0 : index
    %265 = vector.load %arg5[%c0_111, %c0_112] : memref<8x1xf32, #tpu.memory_space<vmem>>, vector<8x1xf32>
    %266 = vector.broadcast %265 : vector<8x1xf32> to vector<8x256xf32>
    %267 = arith.mulf %266, %264 : vector<8x256xf32>
    %c0_113 = arith.constant 0 : index
    %c0_114 = arith.constant 0 : index
    %268 = vector.load %arg6[%c0_113, %c0_114] : memref<8x1xf32, #tpu.memory_space<vmem>>, vector<8x1xf32>
    %269 = vector.broadcast %268 : vector<8x1xf32> to vector<8x256xf32>
    %270 = arith.addf %267, %269 : vector<8x256xf32>
    %c0_115 = arith.constant 0 : index
    %c0_116 = arith.constant 0 : index
    %271 = vector.load %arg7[%c0_115, %c0_116] : memref<32x8xf32, #tpu.memory_space<vmem>>, vector<32x8xf32>
    %cst_117 = arith.constant dense<0.000000e+00> : vector<32x256xf32>
    %272 = tpu.matmul %271, %270, %cst_117 {dimension_numbers = #tpu.dot_dimension_numbers<[1], [0], [0], [1], [0, 0, 1, 1], [], []>, precision = #tpu.contract_precision<fp32>} : vector<32x8xf32>, vector<8x256xf32>, vector<32x256xf32> -> vector<32x256xf32>
    %c0_118 = arith.constant 0 : index
    %c0_119 = arith.constant 0 : index
    %273 = vector.load %arg8[%c0_118, %c0_119] : memref<32x1xf32, #tpu.memory_space<vmem>>, vector<32x1xf32>
    %274 = vector.broadcast %273 : vector<32x1xf32> to vector<32x256xf32>
    %275 = arith.addf %272, %274 : vector<32x256xf32>
    %cst_120 = arith.constant 5.000000e-01 : f32
    %276 = vector.broadcast %cst_120 : f32 to vector<32x256xf32>
    %277 = arith.mulf %276, %275 : vector<32x256xf32>
    %cst_121 = arith.constant 4.471500e-02 : f32
    %278 = vector.broadcast %cst_121 : f32 to vector<32x256xf32>
    %279 = arith.mulf %278, %275 : vector<32x256xf32>
    %280 = arith.mulf %279, %275 : vector<32x256xf32>
    %281 = arith.mulf %280, %275 : vector<32x256xf32>
    %282 = arith.addf %275, %281 : vector<32x256xf32>
    %cst_122 = arith.constant 0.797884583 : f32
    %283 = vector.broadcast %cst_122 : f32 to vector<32x256xf32>
    %284 = arith.mulf %283, %282 : vector<32x256xf32>
    %285 = math.tanh %284 : vector<32x256xf32>
    %cst_123 = arith.constant 1.000000e+00 : f32
    %286 = vector.broadcast %cst_123 : f32 to vector<32x256xf32>
    %287 = arith.addf %286, %285 : vector<32x256xf32>
    %288 = arith.mulf %277, %287 : vector<32x256xf32>
    %c0_124 = arith.constant 0 : index
    %c0_125 = arith.constant 0 : index
    %289 = vector.load %arg9[%c0_124, %c0_125] : memref<8x32xf32, #tpu.memory_space<vmem>>, vector<8x32xf32>
    %cst_126 = arith.constant dense<0.000000e+00> : vector<8x256xf32>
    %290 = tpu.matmul %289, %288, %cst_126 {dimension_numbers = #tpu.dot_dimension_numbers<[1], [0], [0], [1], [0, 0, 1, 1], [], []>, precision = #tpu.contract_precision<fp32>} : vector<8x32xf32>, vector<32x256xf32>, vector<8x256xf32> -> vector<8x256xf32>
    %c0_127 = arith.constant 0 : index
    %c0_128 = arith.constant 0 : index
    %291 = vector.load %arg10[%c0_127, %c0_128] : memref<8x1xf32, #tpu.memory_space<vmem>>, vector<8x1xf32>
    %292 = vector.broadcast %291 : vector<8x1xf32> to vector<8x256xf32>
    %293 = arith.addf %290, %292 : vector<8x256xf32>
    %294 = arith.addf %293, %1 : vector<8x256xf32>
    %c0_129 = arith.constant 0 : index
    %c0_130 = arith.constant 0 : index
    %c0_131 = arith.constant 0 : index
    %295 = vector.load %arg11[%c0_129, %c0_130, %c0_131] : memref<1x8x256xf32, #tpu.memory_space<vmem>>, vector<1x8x256xf32>
    %296 = vector.shape_cast %295 : vector<1x8x256xf32> to vector<8x256xf32>
    %297 = vector.shape_cast %294 : vector<8x256xf32> to vector<1x8x256xf32>
    tpu.vector_store %arg11[%c0_129, %c0_130, %c0_131], %297 {strides = array<i32>} : memref<1x8x256xf32, #tpu.memory_space<vmem>>, vector<1x8x256xf32>,
    return
  }
  func.func @transform_0(%arg0: i32) -> (i32, i32, i32) {
    %c0_i32 = arith.constant 0 : i32
    %c0_i32_0 = arith.constant 0 : i32
    %c0_i32_1 = arith.constant 0 : i32
    return %arg0, %c0_i32, %c0_i32_0 : i32, i32, i32
  }
  func.func @transform_1(%arg0: i32) -> (i32, i32, i32) {
    %c0_i32 = arith.constant 0 : i32
    %c0_i32_0 = arith.constant 0 : i32
    %c0_i32_1 = arith.constant 0 : i32
    %c0_i32_2 = arith.constant 0 : i32
    return %c0_i32, %c0_i32_0, %c0_i32_1 : i32, i32, i32
  }
  func.func @transform_2(%arg0: i32) -> (i32, i32) {
    %c0_i32 = arith.constant 0 : i32
    %c0_i32_0 = arith.constant 0 : i32
    %c0_i32_1 = arith.constant 0 : i32
    return %c0_i32, %c0_i32_0 : i32, i32
  }
  func.func @transform_3(%arg0: i32) -> (i32, i32) {
    %c0_i32 = arith.constant 0 : i32
    %c0_i32_0 = arith.constant 0 : i32
    %c0_i32_1 = arith.constant 0 : i32
    return %c0_i32, %c0_i32_0 : i32, i32
  }
  func.func @transform_4(%arg0: i32) -> (i32, i32) {
    %c0_i32 = arith.constant 0 : i32
    %c0_i32_0 = arith.constant 0 : i32
    %c0_i32_1 = arith.constant 0 : i32
    return %c0_i32, %c0_i32_0 : i32, i32
  }
  func.func @transform_5(%arg0: i32) -> (i32, i32) {
    %c0_i32 = arith.constant 0 : i32
    %c0_i32_0 = arith.constant 0 : i32
    %c0_i32_1 = arith.constant 0 : i32
    return %c0_i32, %c0_i32_0 : i32, i32
  }
  func.func @transform_6(%arg0: i32) -> (i32, i32) {
    %c0_i32 = arith.constant 0 : i32
    %c0_i32_0 = arith.constant 0 : i32
    %c0_i32_1 = arith.constant 0 : i32
    return %c0_i32, %c0_i32_0 : i32, i32
  }
  func.func @transform_7(%arg0: i32) -> (i32, i32) {
    %c0_i32 = arith.constant 0 : i32
    %c0_i32_0 = arith.constant 0 : i32
    %c0_i32_1 = arith.constant 0 : i32
    return %c0_i32, %c0_i32_0 : i32, i32
  }
  func.func @transform_8(%arg0: i32) -> (i32, i32) {
    %c0_i32 = arith.constant 0 : i32
    %c0_i32_0 = arith.constant 0 : i32
    %c0_i32_1 = arith.constant 0 : i32
    return %c0_i32, %c0_i32_0 : i32, i32
  }
  func.func @transform_9(%arg0: i32) -> (i32, i32) {
    %c0_i32 = arith.constant 0 : i32
    %c0_i32_0 = arith.constant 0 : i32
    %c0_i32_1 = arith.constant 0 : i32
    return %c0_i32, %c0_i32_0 : i32, i32
  }
  func.func @transform_10(%arg0: i32) -> (i32, i32, i32) {
    %c0_i32 = arith.constant 0 : i32
    %c0_i32_0 = arith.constant 0 : i32
    %c0_i32_1 = arith.constant 0 : i32
    return %arg0, %c0_i32, %c0_i32_0 : i32, i32, i32
  }
}

</mosaic_0001>

<llo_original>
// kernel: tile.29
$region0: #{tile.29}
  %s0 = inlined_call_operand.vmem [shape: f32[49,2,4,256], index: 0, kind: input, shape index: {}]
  %s1 = inlined_call_operand.vmem [shape: f32[49,8,256], index: 1, kind: output, shape index: {}]
  $region1: #{tile.29} parent=0
    #allocation0 [shape = 'u8[802816]{0}', space=vmem, size = 0xc4000, scoped, tag = 'scoped mem for input reshape']
    %s3 = ssub.s32 16, 1
    %s4 = scalar_lea.vmem %s0, 780
    %v5 = vld [vmem:[%s4] sm:%s3]
    %s6 = scalar_lea.vmem [#allocation0], 1560
    %7 = vst [vmem:[%s6] sm:%s3] %v5
    %s8 = scalar_lea.vmem %s0, 776
    %v9 = vld [vmem:[%s8] sm:%s3]
    %s10 = scalar_lea.vmem [#allocation0], 1552
    %11 = vst [vmem:[%s10] sm:%s3] %v9
    %s12 = scalar_lea.vmem %s0, 772
    %v13 = vld [vmem:[%s12] sm:%s3]
    %s14 = scalar_lea.vmem [#allocation0], 1544
    %15 = vst [vmem:[%s14] sm:%s3] %v13
    %s16 = scalar_lea.vmem %s0, 768
    %v17 = vld [vmem:[%s16] sm:%s3]
    %s18 = scalar_lea.vmem [#allocation0], 1536
    %19 = vst [vmem:[%s18] sm:%s3] %v17
    %s20 = scalar_lea.vmem %s0, 764
    %v21 = vld [vmem:[%s20] sm:%s3]
    %s22 = scalar_lea.vmem [#allocation0], 1528
    %23 = vst [vmem:[%s22] sm:%s3] %v21
    %s24 = scalar_lea.vmem %s0, 760
    %v25 = vld [vmem:[%s24] sm:%s3]
    %s26 = scalar_lea.vmem [#allocation0], 1520
    %27 = vst [vmem:[%s26] sm:%s3] %v25
    %s28 = scalar_lea.vmem %s0, 756
    %v29 = vld [vmem:[%s28] sm:%s3]
    %s30 = scalar_lea.vmem [#allocation0], 1512
    %31 = vst [vmem:[%s30] sm:%s3] %v29
    %s32 = scalar_lea.vmem %s0, 752
    %v33 = vld [vmem:[%s32] sm:%s3]
    %s34 = scalar_lea.vmem [#allocation0], 1504
    %35 = vst [vmem:[%s34] sm:%s3] %v33
    %s36 = scalar_lea.vmem %s0, 748
    %v37 = vld [vmem:[%s36] sm:%s3]
    %s38 = scalar_lea.vmem [#allocation0], 1496
    %39 = vst [vmem:[%s38] sm:%s3] %v37
    %s40 = scalar_lea.vmem %s0, 744
    %v41 = vld [vmem:[%s40] sm:%s3]
    %s42 = scalar_lea.vmem [#allocation0], 1488
    %43 = vst [vmem:[%s42] sm:%s3] %v41
    %s44 = scalar_lea.vmem %s0, 740
    %v45 = vld [vmem:[%s44] sm:%s3]
    %s46 = scalar_lea.vmem [#allocation0], 1480
    %47 = vst [vmem:[%s46] sm:%s3] %v45
    %s48 = scalar_lea.vmem %s0, 736
    %v49 = vld [vmem:[%s48] sm:%s3]
    %s50 = scalar_lea.vmem [#allocation0], 1472
    %51 = vst [vmem:[%s50] sm:%s3] %v49
    %s52 = scalar_lea.vmem %s0, 732
    %v53 = vld [vmem:[%s52] sm:%s3]
    %s54 = scalar_lea.vmem [#allocation0], 1464
    %55 = vst [vmem:[%s54] sm:%s3] %v53
    %s56 = scalar_lea.vmem %s0, 728
    %v57 = vld [vmem:[%s56] sm:%s3]
    %s58 = scalar_lea.vmem [#allocation0], 1456
    %59 = vst [vmem:[%s58] sm:%s3] %v57
    %s60 = scalar_lea.vmem %s0, 724
    %v61 = vld [vmem:[%s60] sm:%s3]
    %s62 = scalar_lea.vmem [#allocation0], 1448
    %63 = vst [vmem:[%s62] sm:%s3] %v61
    %s64 = scalar_lea.vmem %s0, 720
    %v65 = vld [vmem:[%s64] sm:%s3]
    %s66 = scalar_lea.vmem [#allocation0], 1440
    %67 = vst [vmem:[%s66] sm:%s3] %v65
    %s68 = scalar_lea.vmem %s0, 716
    %v69 = vld [vmem:[%s68] sm:%s3]
    %s70 = scalar_lea.vmem [#allocation0], 1432
    %71 = vst [vmem:[%s70] sm:%s3] %v69
    %s72 = scalar_lea.vmem %s0, 712
    %v73 = vld [vmem:[%s72] sm:%s3]
    %s74 = scalar_lea.vmem [#allocation0], 1424
    %75 = vst [vmem:[%s74] sm:%s3] %v73
    %s76 = scalar_lea.vmem %s0, 708
    %v77 = vld [vmem:[%s76] sm:%s3]
    %s78 = scalar_lea.vmem [#allocation0], 1416
    %79 = vst [vmem:[%s78] sm:%s3] %v77
    %s80 = scalar_lea.vmem %s0, 704
    %v81 = vld [vmem:[%s80] sm:%s3]
    %s82 = scalar_lea.vmem [#allocation0], 1408
    %83 = vst [vmem:[%s82] sm:%s3] %v81
    %s84 = scalar_lea.vmem %s0, 700
    %v85 = vld [vmem:[%s84] sm:%s3]
    %s86 = scalar_lea.vmem [#allocation0], 1400
    %87 = vst [vmem:[%s86] sm:%s3] %v85
    %s88 = scalar_lea.vmem %s0, 696
    %v89 = vld [vmem:[%s88] sm:%s3]
    %s90 = scalar_lea.vmem [#allocation0], 1392
    %91 = vst [vmem:[%s90] sm:%s3] %v89
    %s92 = scalar_lea.vmem %s0, 692
    %v93 = vld [vmem:[%s92] sm:%s3]
    %s94 = scalar_lea.vmem [#allocation0], 1384
    %95 = vst [vmem:[%s94] sm:%s3] %v93
    %s96 = scalar_lea.vmem %s0, 688
    %v97 = vld [vmem:[%s96] sm:%s3]
    %s98 = scalar_lea.vmem [#allocation0], 1376
    %99 = vst [vmem:[%s98] sm:%s3] %v97
    %s100 = scalar_lea.vmem %s0, 684
    %v101 = vld [vmem:[%s100] sm:%s3]
    %s102 = scalar_lea.vmem [#allocation0], 1368
    %103 = vst [vmem:[%s102] sm:%s3] %v101
    %s104 = scalar_lea.vmem %s0, 680
    %v105 = vld [vmem:[%s104] sm:%s3]
    %s106 = scalar_lea.vmem [#allocation0], 1360
    %107 = vst [vmem:[%s106] sm:%s3] %v105
    %s108 = scalar_lea.vmem %s0, 676
    %v109 = vld [vmem:[%s108] sm:%s3]
    %s110 = scalar_lea.vmem [#allocation0], 1352
    %111 = vst [vmem:[%s110] sm:%s3] %v109
    %s112 = scalar_lea.vmem %s0, 672
    %v113 = vld [vmem:[%s112] sm:%s3]
    %s114 = scalar_lea.vmem [#allocation0], 1344
    %115 = vst [vmem:[%s114] sm:%s3] %v113
    %s116 = scalar_lea.vmem %s0, 668
    %v117 = vld [vmem:[%s116] sm:%s3]
    %s118 = scalar_lea.vmem [#allocation0], 1336
    %119 = vst [vmem:[%s118] sm:%s3] %v117
    %s120 = scalar_lea.vmem %s0, 664
    %v121 = vld [vmem:[%s120] sm:%s3]
    %s122 = scalar_lea.vmem [#allocation0], 1328
    %123 = vst [vmem:[%s122] sm:%s3] %v121
    %s124 = scalar_lea.vmem %s0, 660
    %v125 = vld [vmem:[%s124] sm:%s3]
    %s126 = scalar_lea.vmem [#allocation0], 1320
    %127 = vst [vmem:[%s126] sm:%s3] %v125
    %s128 = scalar_lea.vmem %s0, 656
    %v129 = vld [vmem:[%s128] sm:%s3]
    %s130 = scalar_lea.vmem [#allocation0], 1312
    %131 = vst [vmem:[%s130] sm:%s3] %v129
    %s132 = scalar_lea.vmem %s0, 652
    %v133 = vld [vmem:[%s132] sm:%s3]
    %s134 = scalar_lea.vmem [#allocation0], 1304
    %135 = vst [vmem:[%s134] sm:%s3] %v133
    %s136 = scalar_lea.vmem %s0, 648
    %v137 = vld [vmem:[%s136] sm:%s3]
    %s138 = scalar_lea.vmem [#allocation0], 1296
    %139 = vst [vmem:[%s138] sm:%s3] %v137
    %s140 = scalar_lea.vmem %s0, 644
    %v141 = vld [vmem:[%s140] sm:%s3]
    %s142 = scalar_lea.vmem [#allocation0], 1288
    %143 = vst [vmem:[%s142] sm:%s3] %v141
    %s144 = scalar_lea.vmem %s0, 640
    %v145 = vld [vmem:[%s144] sm:%s3]
    %s146 = scalar_lea.vmem [#allocation0], 1280
    %147 = vst [vmem:[%s146] sm:%s3] %v145
    %s148 = scalar_lea.vmem %s0, 636
    %v149 = vld [vmem:[%s148] sm:%s3]
    %s150 = scalar_lea.vmem [#allocation0], 1272
    %151 = vst [vmem:[%s150] sm:%s3] %v149
    %s152 = scalar_lea.vmem %s0, 632
    %v153 = vld [vmem:[%s152] sm:%s3]
    %s154 = scalar_lea.vmem [#allocation0], 1264
    %155 = vst [vmem:[%s154] sm:%s3] %v153
    %s156 = scalar_lea.vmem %s0, 628
    %v157 = vld [vmem:[%s156] sm:%s3]
    %s158 = scalar_lea.vmem [#allocation0], 1256
    %159 = vst [vmem:[%s158] sm:%s3] %v157
    %s160 = scalar_lea.vmem %s0, 624
    %v161 = vld [vmem:[%s160] sm:%s3]
    %s162 = scalar_lea.vmem [#allocation0], 1248
    %163 = vst [vmem:[%s162] sm:%s3] %v161
    %s164 = scalar_lea.vmem %s0, 620
    %v165 = vld [vmem:[%s164] sm:%s3]
    %s166 = scalar_lea.vmem [#allocation0], 1240
    %167 = vst [vmem:[%s166] sm:%s3] %v165
    %s168 = scalar_lea.vmem %s0, 616
    %v169 = vld [vmem:[%s168] sm:%s3]
    %s170 = scalar_lea.vmem [#allocation0], 1232
    %171 = vst [vmem:[%s170] sm:%s3] %v169
    %s172 = scalar_lea.vmem %s0, 612
    %v173 = vld [vmem:[%s172] sm:%s3]
    %s174 = scalar_lea.vmem [#allocation0], 1224
    %175 = vst [vmem:[%s174] sm:%s3] %v173
    %s176 = scalar_lea.vmem %s0, 608
    %v177 = vld [vmem:[%s176] sm:%s3]
    %s178 = scalar_lea.vmem [#allocation0], 1216
    %179 = vst [vmem:[%s178] sm:%s3] %v177
    %s180 = scalar_lea.vmem %s0, 604
    %v181 = vld [vmem:[%s180] sm:%s3]
    %s182 = scalar_lea.vmem [#allocation0], 1208
    %183 = vst [vmem:[%s182] sm:%s3] %v181
    %s184 = scalar_lea.vmem %s0, 600
    %v185 = vld [vmem:[%s184] sm:%s3]
    %s186 = scalar_lea.vmem [#allocation0], 1200
    %187 = vst [vmem:[%s186] sm:%s3] %v185
    %s188 = scalar_lea.vmem %s0, 596
    %v189 = vld [vmem:[%s188] sm:%s3]
    %s190 = scalar_lea.vmem [#allocation0], 1192
    %191 = vst [vmem:[%s190] sm:%s3] %v189
    %s192 = scalar_lea.vmem %s0, 592
    %v193 = vld [vmem:[%s192] sm:%s3]
    %s194 = scalar_lea.vmem [#allocation0], 1184
    %195 = vst [vmem:[%s194] sm:%s3] %v193
    %s196 = scalar_lea.vmem %s0, 588
    %v197 = vld [vmem:[%s196] sm:%s3]
    %s198 = scalar_lea.vmem [#allocation0], 1176
    %199 = vst [vmem:[%s198] sm:%s3] %v197
    %s200 = scalar_lea.vmem %s0, 584
    %v201 = vld [vmem:[%s200] sm:%s3]
    %s202 = scalar_lea.vmem [#allocation0], 1168
    %203 = vst [vmem:[%s202] sm:%s3] %v201
    %s204 = scalar_lea.vmem %s0, 580
    %v205 = vld [vmem:[%s204] sm:%s3]
    %s206 = scalar_lea.vmem [#allocation0], 1160
    %207 = vst [vmem:[%s206] sm:%s3] %v205
    %s208 = scalar_lea.vmem %s0, 576
    %v209 = vld [vmem:[%s208] sm:%s3]
    %s210 = scalar_lea.vmem [#allocation0], 1152
    %211 = vst [vmem:[%s210] sm:%s3] %v209
    %s212 = scalar_lea.vmem %s0, 572
    %v213 = vld [vmem:[%s212] sm:%s3]
    %s214 = scalar_lea.vmem [#allocation0], 1144
    %215 = vst [vmem:[%s214] sm:%s3] %v213
    %s216 = scalar_lea.vmem %s0, 568
    %v217 = vld [vmem:[%s216] sm:%s3]
    %s218 = scalar_lea.vmem [#allocation0], 1136
    %219 = vst [vmem:[%s218] sm:%s3] %v217
    %s220 = scalar_lea.vmem %s0, 564
    %v221 = vld [vmem:[%s220] sm:%s3]
    %s222 = scalar_lea.vmem [#allocation0], 1128
    %223 = vst [vmem:[%s222] sm:%s3] %v221
    %s224 = scalar_lea.vmem %s0, 560
    %v225 = vld [vmem:[%s224] sm:%s3]
    %s226 = scalar_lea.vmem [#allocation0], 1120
    %227 = vst [vmem:[%s226] sm:%s3] %v225
    %s228 = scalar_lea.vmem %s0, 556
    %v229 = vld [vmem:[%s228] sm:%s3]
    %s230 = scalar_lea.vmem [#allocation0], 1112
    %231 = vst [vmem:[%s230] sm:%s3] %v229
    %s232 = scalar_lea.vmem %s0, 552
    %v233 = vld [vmem:[%s232] sm:%s3]
    %s234 = scalar_lea.vmem [#allocation0], 1104
    %235 = vst [vmem:[%s234] sm:%s3] %v233
    %s236 = scalar_lea.vmem %s0, 548
    %v237 = vld [vmem:[%s236] sm:%s3]
    %s238 = scalar_lea.vmem [#allocation0], 1096
    %239 = vst [vmem:[%s238] sm:%s3] %v237
    %s240 = scalar_lea.vmem %s0, 544
    %v241 = vld [vmem:[%s240] sm:%s3]
    %s242 = scalar_lea.vmem [#allocation0], 1088
    %243 = vst [vmem:[%s242] sm:%s3] %v241
    %s244 = scalar_lea.vmem %s0, 540
    %v245 = vld [vmem:[%s244] sm:%s3]
    %s246 = scalar_lea.vmem [#allocation0], 1080
    %247 = vst [vmem:[%s246] sm:%s3] %v245
    %s248 = scalar_lea.vmem %s0, 536
    %v249 = vld [vmem:[%s248] sm:%s3]
    %s250 = scalar_lea.vmem [#allocation0], 1072
    %251 = vst [vmem:[%s250] sm:%s3] %v249
    %s252 = scalar_lea.vmem %s0, 532
    %v253 = vld [vmem:[%s252] sm:%s3]
    %s254 = scalar_lea.vmem [#allocation0], 1064
    %255 = vst [vmem:[%s254] sm:%s3] %v253
    %s256 = scalar_lea.vmem %s0, 528
    %v257 = vld [vmem:[%s256] sm:%s3]
    %s258 = scalar_lea.vmem [#allocation0], 1056
    %259 = vst [vmem:[%s258] sm:%s3] %v257
    %s260 = scalar_lea.vmem %s0, 524
    %v261 = vld [vmem:[%s260] sm:%s3]
    %s262 = scalar_lea.vmem [#allocation0], 1048
    %263 = vst [vmem:[%s262] sm:%s3] %v261
    %s264 = scalar_lea.vmem %s0, 520
    %v265 = vld [vmem:[%s264] sm:%s3]
    %s266 = scalar_lea.vmem [#allocation0], 1040
    %267 = vst [vmem:[%s266] sm:%s3] %v265
    %s268 = scalar_lea.vmem %s0, 516
    %v269 = vld [vmem:[%s268] sm:%s3]
    %s270 = scalar_lea.vmem [#allocation0], 1032
    %271 = vst [vmem:[%s270] sm:%s3] %v269
    %s272 = scalar_lea.vmem %s0, 512
    %v273 = vld [vmem:[%s272] sm:%s3]
    %s274 = scalar_lea.vmem [#allocation0], 1024
    %275 = vst [vmem:[%s274] sm:%s3] %v273
    %s276 = scalar_lea.vmem %s0, 508
    %v277 = vld [vmem:[%s276] sm:%s3]
    %s278 = scalar_lea.vmem [#allocation0], 1016
    %279 = vst [vmem:[%s278] sm:%s3] %v277
    %s280 = scalar_lea.vmem %s0, 504
    %v281 = vld [vmem:[%s280] sm:%s3]
    %s282 = scalar_lea.vmem [#allocation0], 1008
    %283 = vst [vmem:[%s282] sm:%s3] %v281
    %s284 = scalar_lea.vmem %s0, 500
    %v285 = vld [vmem:[%s284] sm:%s3]
    %s286 = scalar_lea.vmem [#allocation0], 1000
    %287 = vst [vmem:[%s286] sm:%s3] %v285
    %s288 = scalar_lea.vmem %s0, 496
    %v289 = vld [vmem:[%s288] sm:%s3]
    %s290 = scalar_lea.vmem [#allocation0], 992
    %291 = vst [vmem:[%s290] sm:%s3] %v289
    %s292 = scalar_lea.vmem %s0, 492
    %v293 = vld [vmem:[%s292] sm:%s3]
    %s294 = scalar_lea.vmem [#allocation0], 984
    %295 = vst [vmem:[%s294] sm:%s3] %v293
    %s296 = scalar_lea.vmem %s0, 488
    %v297 = vld [vmem:[%s296] sm:%s3]
    %s298 = scalar_lea.vmem [#allocation0], 976
    %299 = vst [vmem:[%s298] sm:%s3] %v297
    %s300 = scalar_lea.vmem %s0, 484
    %v301 = vld [vmem:[%s300] sm:%s3]
    %s302 = scalar_lea.vmem [#allocation0], 968
    %303 = vst [vmem:[%s302] sm:%s3] %v301
    %s304 = scalar_lea.vmem %s0, 480
    %v305 = vld [vmem:[%s304] sm:%s3]
    %s306 = scalar_lea.vmem [#allocation0], 960
    %307 = vst [vmem:[%s306] sm:%s3] %v305
    %s308 = scalar_lea.vmem %s0, 476
    %v309 = vld [vmem:[%s308] sm:%s3]
    %s310 = scalar_lea.vmem [#allocation0], 952
    %311 = vst [vmem:[%s310] sm:%s3] %v309
    %s312 = scalar_lea.vmem %s0, 472
    %v313 = vld [vmem:[%s312] sm:%s3]
    %s314 = scalar_lea.vmem [#allocation0], 944
    %315 = vst [vmem:[%s314] sm:%s3] %v313
    %s316 = scalar_lea.vmem %s0, 468
    %v317 = vld [vmem:[%s316] sm:%s3]
    %s318 = scalar_lea.vmem [#allocation0], 936
    %319 = vst [vmem:[%s318] sm:%s3] %v317
    %s320 = scalar_lea.vmem %s0, 464
    %v321 = vld [vmem:[%s320] sm:%s3]
    %s322 = scalar_lea.vmem [#allocation0], 928
    %323 = vst [vmem:[%s322] sm:%s3] %v321
    %s324 = scalar_lea.vmem %s0, 460
    %v325 = vld [vmem:[%s324] sm:%s3]
    %s326 = scalar_lea.vmem [#allocation0], 920
    %327 = vst [vmem:[%s326] sm:%s3] %v325
    %s328 = scalar_lea.vmem %s0, 456
    %v329 = vld [vmem:[%s328] sm:%s3]
    %s330 = scalar_lea.vmem [#allocation0], 912
    %331 = vst [vmem:[%s330] sm:%s3] %v329
    %s332 = scalar_lea.vmem %s0, 452
    %v333 = vld [vmem:[%s332] sm:%s3]
    %s334 = scalar_lea.vmem [#allocation0], 904
    %335 = vst [vmem:[%s334] sm:%s3] %v333
    %s336 = scalar_lea.vmem %s0, 448
    %v337 = vld [vmem:[%s336] sm:%s3]
    %s338 = scalar_lea.vmem [#allocation0], 896
    %339 = vst [vmem:[%s338] sm:%s3] %v337
    %s340 = scalar_lea.vmem %s0, 444
    %v341 = vld [vmem:[%s340] sm:%s3]
    %s342 = scalar_lea.vmem [#allocation0], 888
    %343 = vst [vmem:[%s342] sm:%s3] %v341
    %s344 = scalar_lea.vmem %s0, 440
    %v345 = vld [vmem:[%s344] sm:%s3]
    %s346 = scalar_lea.vmem [#allocation0], 880
    %347 = vst [vmem:[%s346] sm:%s3] %v345
    %s348 = scalar_lea.vmem %s0, 436
    %v349 = vld [vmem:[%s348] sm:%s3]
    %s350 = scalar_lea.vmem [#allocation0], 872
    %351 = vst [vmem:[%s350] sm:%s3] %v349
    %s352 = scalar_lea.vmem %s0, 432
    %v353 = vld [vmem:[%s352] sm:%s3]
    %s354 = scalar_lea.vmem [#allocation0], 864
    %355 = vst [vmem:[%s354] sm:%s3] %v353
    %s356 = scalar_lea.vmem %s0, 428
    %v357 = vld [vmem:[%s356] sm:%s3]
    %s358 = scalar_lea.vmem [#allocation0], 856
    %359 = vst [vmem:[%s358] sm:%s3] %v357
    %s360 = scalar_lea.vmem %s0, 424
    %v361 = vld [vmem:[%s360] sm:%s3]
    %s362 = scalar_lea.vmem [#allocation0], 848
    %363 = vst [vmem:[%s362] sm:%s3] %v361
    %s364 = scalar_lea.vmem %s0, 420
    %v365 = vld [vmem:[%s364] sm:%s3]
    %s366 = scalar_lea.vmem [#allocation0], 840
    %367 = vst [vmem:[%s366] sm:%s3] %v365
    %s368 = scalar_lea.vmem %s0, 416
    %v369 = vld [vmem:[%s368] sm:%s3]
    %s370 = scalar_lea.vmem [#allocation0], 832
    %371 = vst [vmem:[%s370] sm:%s3] %v369
    %s372 = scalar_lea.vmem %s0, 412
    %v373 = vld [vmem:[%s372] sm:%s3]
    %s374 = scalar_lea.vmem [#allocation0], 824
    %375 = vst [vmem:[%s374] sm:%s3] %v373
    %s376 = scalar_lea.vmem %s0, 408
    %v377 = vld [vmem:[%s376] sm:%s3]
    %s378 = scalar_lea.vmem [#allocation0], 816
    %379 = vst [vmem:[%s378] sm:%s3] %v377
    %s380 = scalar_lea.vmem %s0, 404
    %v381 = vld [vmem:[%s380] sm:%s3]
    %s382 = scalar_lea.vmem [#allocation0], 808
    %383 = vst [vmem:[%s382] sm:%s3] %v381
    %s384 = scalar_lea.vmem %s0, 400
    %v385 = vld [vmem:[%s384] sm:%s3]
    %s386 = scalar_lea.vmem [#allocation0], 800
    %387 = vst [vmem:[%s386] sm:%s3] %v385
    %s388 = scalar_lea.vmem %s0, 396
    %v389 = vld [vmem:[%s388] sm:%s3]
    %s390 = scalar_lea.vmem [#allocation0], 792
    %391 = vst [vmem:[%s390] sm:%s3] %v389
    %s392 = scalar_lea.vmem %s0, 392
    %v393 = vld [vmem:[%s392] sm:%s3]
    %s394 = scalar_lea.vmem [#allocation0], 784
    %395 = vst [vmem:[%s394] sm:%s3] %v393
    %s396 = scalar_lea.vmem %s0, 388
    %v397 = vld [vmem:[%s396] sm:%s3]
    %s398 = scalar_lea.vmem [#allocation0], 776
    %399 = vst [vmem:[%s398] sm:%s3] %v397
    %s400 = scalar_lea.vmem %s0, 384
    %v401 = vld [vmem:[%s400] sm:%s3]
    %s402 = scalar_lea.vmem [#allocation0], 768
    %403 = vst [vmem:[%s402] sm:%s3] %v401
    %s404 = scalar_lea.vmem %s0, 380
    %v405 = vld [vmem:[%s404] sm:%s3]
    %s406 = scalar_lea.vmem [#allocation0], 760
    %407 = vst [vmem:[%s406] sm:%s3] %v405
    %s408 = scalar_lea.vmem %s0, 376
    %v409 = vld [vmem:[%s408] sm:%s3]
    %s410 = scalar_lea.vmem [#allocation0], 752
    %411 = vst [vmem:[%s410] sm:%s3] %v409
    %s412 = scalar_lea.vmem %s0, 372
    %v413 = vld [vmem:[%s412] sm:%s3]
    %s414 = scalar_lea.vmem [#allocation0], 744
    %415 = vst [vmem:[%s414] sm:%s3] %v413
    %s416 = scalar_lea.vmem %s0, 368
    %v417 = vld [vmem:[%s416] sm:%s3]
    %s418 = scalar_lea.vmem [#allocation0], 736
    %419 = vst [vmem:[%s418] sm:%s3] %v417
    %s420 = scalar_lea.vmem %s0, 364
    %v421 = vld [vmem:[%s420] sm:%s3]
    %s422 = scalar_lea.vmem [#allocation0], 728
    %423 = vst [vmem:[%s422] sm:%s3] %v421
    %s424 = scalar_lea.vmem %s0, 360
    %v425 = vld [vmem:[%s424] sm:%s3]
    %s426 = scalar_lea.vmem [#allocation0], 720
    %427 = vst [vmem:[%s426] sm:%s3] %v425
    %s428 = scalar_lea.vmem %s0, 356
    %v429 = vld [vmem:[%s428] sm:%s3]
    %s430 = scalar_lea.vmem [#allocation0], 712
    %431 = vst [vmem:[%s430] sm:%s3] %v429
    %s432 = scalar_lea.vmem %s0, 352
    %v433 = vld [vmem:[%s432] sm:%s3]
    %s434 = scalar_lea.vmem [#allocation0], 704
    %435 = vst [vmem:[%s434] sm:%s3] %v433
    %s436 = scalar_lea.vmem %s0, 348
    %v437 = vld [vmem:[%s436] sm:%s3]
    %s438 = scalar_lea.vmem [#allocation0], 696
    %439 = vst [vmem:[%s438] sm:%s3] %v437
    %s440 = scalar_lea.vmem %s0, 344
    %v441 = vld [vmem:[%s440] sm:%s3]
    %s442 = scalar_lea.vmem [#allocation0], 688
    %443 = vst [vmem:[%s442] sm:%s3] %v441
    %s444 = scalar_lea.vmem %s0, 340
    %v445 = vld [vmem:[%s444] sm:%s3]
    %s446 = scalar_lea.vmem [#allocation0], 680
    %447 = vst [vmem:[%s446] sm:%s3] %v445
    %s448 = scalar_lea.vmem %s0, 336
    %v449 = vld [vmem:[%s448] sm:%s3]
    %s450 = scalar_lea.vmem [#allocation0], 672
    %451 = vst [vmem:[%s450] sm:%s3] %v449
    %s452 = scalar_lea.vmem %s0, 332
    %v453 = vld [vmem:[%s452] sm:%s3]
    %s454 = scalar_lea.vmem [#allocation0], 664
    %455 = vst [vmem:[%s454] sm:%s3] %v453
    %s456 = scalar_lea.vmem %s0, 328
    %v457 = vld [vmem:[%s456] sm:%s3]
    %s458 = scalar_lea.vmem [#allocation0], 656
    %459 = vst [vmem:[%s458] sm:%s3] %v457
    %s460 = scalar_lea.vmem %s0, 324
    %v461 = vld [vmem:[%s460] sm:%s3]
    %s462 = scalar_lea.vmem [#allocation0], 648
    %463 = vst [vmem:[%s462] sm:%s3] %v461
    %s464 = scalar_lea.vmem %s0, 320
    %v465 = vld [vmem:[%s464] sm:%s3]
    %s466 = scalar_lea.vmem [#allocation0], 640
    %467 = vst [vmem:[%s466] sm:%s3] %v465
    %s468 = scalar_lea.vmem %s0, 316
    %v469 = vld [vmem:[%s468] sm:%s3]
    %s470 = scalar_lea.vmem [#allocation0], 632
    %471 = vst [vmem:[%s470] sm:%s3] %v469
    %s472 = scalar_lea.vmem %s0, 312
    %v473 = vld [vmem:[%s472] sm:%s3]
    %s474 = scalar_lea.vmem [#allocation0], 624
    %475 = vst [vmem:[%s474] sm:%s3] %v473
    %s476 = scalar_lea.vmem %s0, 308
    %v477 = vld [vmem:[%s476] sm:%s3]
    %s478 = scalar_lea.vmem [#allocation0], 616
    %479 = vst [vmem:[%s478] sm:%s3] %v477
    %s480 = scalar_lea.vmem %s0, 304
    %v481 = vld [vmem:[%s480] sm:%s3]
    %s482 = scalar_lea.vmem [#allocation0], 608
    %483 = vst [vmem:[%s482] sm:%s3] %v481
    %s484 = scalar_lea.vmem %s0, 300
    %v485 = vld [vmem:[%s484] sm:%s3]
    %s486 = scalar_lea.vmem [#allocation0], 600
    %487 = vst [vmem:[%s486] sm:%s3] %v485
    %s488 = scalar_lea.vmem %s0, 296
    %v489 = vld [vmem:[%s488] sm:%s3]
    %s490 = scalar_lea.vmem [#allocation0], 592
    %491 = vst [vmem:[%s490] sm:%s3] %v489
    %s492 = scalar_lea.vmem %s0, 292
    %v493 = vld [vmem:[%s492] sm:%s3]
    %s494 = scalar_lea.vmem [#allocation0], 584
    %495 = vst [vmem:[%s494] sm:%s3] %v493
    %s496 = scalar_lea.vmem %s0, 288
    %v497 = vld [vmem:[%s496] sm:%s3]
    %s498 = scalar_lea.vmem [#allocation0], 576
    %499 = vst [vmem:[%s498] sm:%s3] %v497
    %s500 = scalar_lea.vmem %s0, 284
    %v501 = vld [vmem:[%s500] sm:%s3]
    %s502 = scalar_lea.vmem [#allocation0], 568
    %503 = vst [vmem:[%s502] sm:%s3] %v501
    %s504 = scalar_lea.vmem %s0, 280
    %v505 = vld [vmem:[%s504] sm:%s3]
    %s506 = scalar_lea.vmem [#allocation0], 560
    %507 = vst [vmem:[%s506] sm:%s3] %v505
    %s508 = scalar_lea.vmem %s0, 276
    %v509 = vld [vmem:[%s508] sm:%s3]
    %s510 = scalar_lea.vmem [#allocation0], 552
    %511 = vst [vmem:[%s510] sm:%s3] %v509
    %s512 = scalar_lea.vmem %s0, 272
    %v513 = vld [vmem:[%s512] sm:%s3]
    %s514 = scalar_lea.vmem [#allocation0], 544
    %515 = vst [vmem:[%s514] sm:%s3] %v513
    %s516 = scalar_lea.vmem %s0, 268
    %v517 = vld [vmem:[%s516] sm:%s3]
    %s518 = scalar_lea.vmem [#allocation0], 536
    %519 = vst [vmem:[%s518] sm:%s3] %v517
    %s520 = scalar_lea.vmem %s0, 264
    %v521 = vld [vmem:[%s520] sm:%s3]
    %s522 = scalar_lea.vmem [#allocation0], 528
    %523 = vst [vmem:[%s522] sm:%s3] %v521
    %s524 = scalar_lea.vmem %s0, 260
    %v525 = vld [vmem:[%s524] sm:%s3]
    %s526 = scalar_lea.vmem [#allocation0], 520
    %527 = vst [vmem:[%s526] sm:%s3] %v525
    %s528 = scalar_lea.vmem %s0, 256
    %v529 = vld [vmem:[%s528] sm:%s3]
    %s530 = scalar_lea.vmem [#allocation0], 512
    %531 = vst [vmem:[%s530] sm:%s3] %v529
    %s532 = scalar_lea.vmem %s0, 252
    %v533 = vld [vmem:[%s532] sm:%s3]
    %s534 = scalar_lea.vmem [#allocation0], 504
    %535 = vst [vmem:[%s534] sm:%s3] %v533
    %s536 = scalar_lea.vmem %s0, 248
    %v537 = vld [vmem:[%s536] sm:%s3]
    %s538 = scalar_lea.vmem [#allocation0], 496
    %539 = vst [vmem:[%s538] sm:%s3] %v537
    %s540 = scalar_lea.vmem %s0, 244
    %v541 = vld [vmem:[%s540] sm:%s3]
    %s542 = scalar_lea.vmem [#allocation0], 488
    %543 = vst [vmem:[%s542] sm:%s3] %v541
    %s544 = scalar_lea.vmem %s0, 240
    %v545 = vld [vmem:[%s544] sm:%s3]
    %s546 = scalar_lea.vmem [#allocation0], 480
    %547 = vst [vmem:[%s546] sm:%s3] %v545
    %s548 = scalar_lea.vmem %s0, 236
    %v549 = vld [vmem:[%s548] sm:%s3]
    %s550 = scalar_lea.vmem [#allocation0], 472
    %551 = vst [vmem:[%s550] sm:%s3] %v549
    %s552 = scalar_lea.vmem %s0, 232
    %v553 = vld [vmem:[%s552] sm:%s3]
    %s554 = scalar_lea.vmem [#allocation0], 464
    %555 = vst [vmem:[%s554] sm:%s3] %v553
    %s556 = scalar_lea.vmem %s0, 228
    %v557 = vld [vmem:[%s556] sm:%s3]
    %s558 = scalar_lea.vmem [#allocation0], 456
    %559 = vst [vmem:[%s558] sm:%s3] %v557
    %s560 = scalar_lea.vmem %s0, 224
    %v561 = vld [vmem:[%s560] sm:%s3]
    %s562 = scalar_lea.vmem [#allocation0], 448
    %563 = vst [vmem:[%s562] sm:%s3] %v561
    %s564 = scalar_lea.vmem %s0, 220
    %v565 = vld [vmem:[%s564] sm:%s3]
    %s566 = scalar_lea.vmem [#allocation0], 440
    %567 = vst [vmem:[%s566] sm:%s3] %v565
    %s568 = scalar_lea.vmem %s0, 216
    %v569 = vld [vmem:[%s568] sm:%s3]
    %s570 = scalar_lea.vmem [#allocation0], 432
    %571 = vst [vmem:[%s570] sm:%s3] %v569
    %s572 = scalar_lea.vmem %s0, 212
    %v573 = vld [vmem:[%s572] sm:%s3]
    %s574 = scalar_lea.vmem [#allocation0], 424
    %575 = vst [vmem:[%s574] sm:%s3] %v573
    %s576 = scalar_lea.vmem %s0, 208
    %v577 = vld [vmem:[%s576] sm:%s3]
    %s578 = scalar_lea.vmem [#allocation0], 416
    %579 = vst [vmem:[%s578] sm:%s3] %v577
    %s580 = scalar_lea.vmem %s0, 204
    %v581 = vld [vmem:[%s580] sm:%s3]
    %s582 = scalar_lea.vmem [#allocation0], 408
    %583 = vst [vmem:[%s582] sm:%s3] %v581
    %s584 = scalar_lea.vmem %s0, 200
    %v585 = vld [vmem:[%s584] sm:%s3]
    %s586 = scalar_lea.vmem [#allocation0], 400
    %587 = vst [vmem:[%s586] sm:%s3] %v585
    %s588 = scalar_lea.vmem %s0, 196
    %v589 = vld [vmem:[%s588] sm:%s3]
    %s590 = scalar_lea.vmem [#allocation0], 392
    %591 = vst [vmem:[%s590] sm:%s3] %v589
    %s592 = scalar_lea.vmem %s0, 192
    %v593 = vld [vmem:[%s592] sm:%s3]
    %s594 = scalar_lea.vmem [#allocation0], 384
    %595 = vst [vmem:[%s594] sm:%s3] %v593
    %s596 = scalar_lea.vmem %s0, 188
    %v597 = vld [vmem:[%s596] sm:%s3]
    %s598 = scalar_lea.vmem [#allocation0], 376
    %599 = vst [vmem:[%s598] sm:%s3] %v597
    %s600 = scalar_lea.vmem %s0, 184
    %v601 = vld [vmem:[%s600] sm:%s3]
    %s602 = scalar_lea.vmem [#allocation0], 368
    %603 = vst [vmem:[%s602] sm:%s3] %v601
    %s604 = scalar_lea.vmem %s0, 180
    %v605 = vld [vmem:[%s604] sm:%s3]
    %s606 = scalar_lea.vmem [#allocation0], 360
    %607 = vst [vmem:[%s606] sm:%s3] %v605
    %s608 = scalar_lea.vmem %s0, 176
    %v609 = vld [vmem:[%s608] sm:%s3]
    %s610 = scalar_lea.vmem [#allocation0], 352
    %611 = vst [vmem:[%s610] sm:%s3] %v609
    %s612 = scalar_lea.vmem %s0, 172
    %v613 = vld [vmem:[%s612] sm:%s3]
    %s614 = scalar_lea.vmem [#allocation0], 344
    %615 = vst [vmem:[%s614] sm:%s3] %v613
    %s616 = scalar_lea.vmem %s0, 168
    %v617 = vld [vmem:[%s616] sm:%s3]
    %s618 = scalar_lea.vmem [#allocation0], 336
    %619 = vst [vmem:[%s618] sm:%s3] %v617
    %s620 = scalar_lea.vmem %s0, 164
    %v621 = vld [vmem:[%s620] sm:%s3]
    %s622 = scalar_lea.vmem [#allocation0], 328
    %623 = vst [vmem:[%s622] sm:%s3] %v621
    %s624 = scalar_lea.vmem %s0, 160
    %v625 = vld [vmem:[%s624] sm:%s3]
    %s626 = scalar_lea.vmem [#allocation0], 320
    %627 = vst [vmem:[%s626] sm:%s3] %v625
    %s628 = scalar_lea.vmem %s0, 156
    %v629 = vld [vmem:[%s628] sm:%s3]
    %s630 = scalar_lea.vmem [#allocation0], 312
    %631 = vst [vmem:[%s630] sm:%s3] %v629
    %s632 = scalar_lea.vmem %s0, 152
    %v633 = vld [vmem:[%s632] sm:%s3]
    %s634 = scalar_lea.vmem [#allocation0], 304
    %635 = vst [vmem:[%s634] sm:%s3] %v633
    %s636 = scalar_lea.vmem %s0, 148
    %v637 = vld [vmem:[%s636] sm:%s3]
    %s638 = scalar_lea.vmem [#allocation0], 296
    %639 = vst [vmem:[%s638] sm:%s3] %v637
    %s640 = scalar_lea.vmem %s0, 144
    %v641 = vld [vmem:[%s640] sm:%s3]
    %s642 = scalar_lea.vmem [#allocation0], 288
    %643 = vst [vmem:[%s642] sm:%s3] %v641
    %s644 = scalar_lea.vmem %s0, 140
    %v645 = vld [vmem:[%s644] sm:%s3]
    %s646 = scalar_lea.vmem [#allocation0], 280
    %647 = vst [vmem:[%s646] sm:%s3] %v645
    %s648 = scalar_lea.vmem %s0, 136
    %v649 = vld [vmem:[%s648] sm:%s3]
    %s650 = scalar_lea.vmem [#allocation0], 272
    %651 = vst [vmem:[%s650] sm:%s3] %v649
    %s652 = scalar_lea.vmem %s0, 132
    %v653 = vld [vmem:[%s652] sm:%s3]
    %s654 = scalar_lea.vmem [#allocation0], 264
    %655 = vst [vmem:[%s654] sm:%s3] %v653
    %s656 = scalar_lea.vmem %s0, 128
    %v657 = vld [vmem:[%s656] sm:%s3]
    %s658 = scalar_lea.vmem [#allocation0], 256
    %659 = vst [vmem:[%s658] sm:%s3] %v657
    %s660 = scalar_lea.vmem %s0, 124
    %v661 = vld [vmem:[%s660] sm:%s3]
    %s662 = scalar_lea.vmem [#allocation0], 248
    %663 = vst [vmem:[%s662] sm:%s3] %v661
    %s664 = scalar_lea.vmem %s0, 120
    %v665 = vld [vmem:[%s664] sm:%s3]
    %s666 = scalar_lea.vmem [#allocation0], 240
    %667 = vst [vmem:[%s666] sm:%s3] %v665
    %s668 = scalar_lea.vmem %s0, 116
    %v669 = vld [vmem:[%s668] sm:%s3]
    %s670 = scalar_lea.vmem [#allocation0], 232
    %671 = vst [vmem:[%s670] sm:%s3] %v669
    %s672 = scalar_lea.vmem %s0, 112
    %v673 = vld [vmem:[%s672] sm:%s3]
    %s674 = scalar_lea.vmem [#allocation0], 224
    %675 = vst [vmem:[%s674] sm:%s3] %v673
    %s676 = scalar_lea.vmem %s0, 108
    %v677 = vld [vmem:[%s676] sm:%s3]
    %s678 = scalar_lea.vmem [#allocation0], 216
    %679 = vst [vmem:[%s678] sm:%s3] %v677
    %s680 = scalar_lea.vmem %s0, 104
    %v681 = vld [vmem:[%s680] sm:%s3]
    %s682 = scalar_lea.vmem [#allocation0], 208
    %683 = vst [vmem:[%s682] sm:%s3] %v681
    %s684 = scalar_lea.vmem %s0, 100
    %v685 = vld [vmem:[%s684] sm:%s3]
    %s686 = scalar_lea.vmem [#allocation0], 200
    %687 = vst [vmem:[%s686] sm:%s3] %v685
    %s688 = scalar_lea.vmem %s0, 96
    %v689 = vld [vmem:[%s688] sm:%s3]
    %s690 = scalar_lea.vmem [#allocation0], 192
    %691 = vst [vmem:[%s690] sm:%s3] %v689
    %s692 = scalar_lea.vmem %s0, 92
    %v693 = vld [vmem:[%s692] sm:%s3]
    %s694 = scalar_lea.vmem [#allocation0], 184
    %695 = vst [vmem:[%s694] sm:%s3] %v693
    %s696 = scalar_lea.vmem %s0, 88
    %v697 = vld [vmem:[%s696] sm:%s3]
    %s698 = scalar_lea.vmem [#allocation0], 176
    %699 = vst [vmem:[%s698] sm:%s3] %v697
    %s700 = scalar_lea.vmem %s0, 84
    %v701 = vld [vmem:[%s700] sm:%s3]
    %s702 = scalar_lea.vmem [#allocation0], 168
    %703 = vst [vmem:[%s702] sm:%s3] %v701
    %s704 = scalar_lea.vmem %s0, 80
    %v705 = vld [vmem:[%s704] sm:%s3]
    %s706 = scalar_lea.vmem [#allocation0], 160
    %707 = vst [vmem:[%s706] sm:%s3] %v705
    %s708 = scalar_lea.vmem %s0, 76
    %v709 = vld [vmem:[%s708] sm:%s3]
    %s710 = scalar_lea.vmem [#allocation0], 152
    %711 = vst [vmem:[%s710] sm:%s3] %v709
    %s712 = scalar_lea.vmem %s0, 72
    %v713 = vld [vmem:[%s712] sm:%s3]
    %s714 = scalar_lea.vmem [#allocation0], 144
    %715 = vst [vmem:[%s714] sm:%s3] %v713
    %s716 = scalar_lea.vmem %s0, 68
    %v717 = vld [vmem:[%s716] sm:%s3]
    %s718 = scalar_lea.vmem [#allocation0], 136
    %719 = vst [vmem:[%s718] sm:%s3] %v717
    %s720 = scalar_lea.vmem %s0, 64
    %v721 = vld [vmem:[%s720] sm:%s3]
    %s722 = scalar_lea.vmem [#allocation0], 128
    %723 = vst [vmem:[%s722] sm:%s3] %v721
    %s724 = scalar_lea.vmem %s0, 60
    %v725 = vld [vmem:[%s724] sm:%s3]
    %s726 = scalar_lea.vmem [#allocation0], 120
    %727 = vst [vmem:[%s726] sm:%s3] %v725
    %s728 = scalar_lea.vmem %s0, 56
    %v729 = vld [vmem:[%s728] sm:%s3]
    %s730 = scalar_lea.vmem [#allocation0], 112
    %731 = vst [vmem:[%s730] sm:%s3] %v729
    %s732 = scalar_lea.vmem %s0, 52
    %v733 = vld [vmem:[%s732] sm:%s3]
    %s734 = scalar_lea.vmem [#allocation0], 104
    %735 = vst [vmem:[%s734] sm:%s3] %v733
    %s736 = scalar_lea.vmem %s0, 48
    %v737 = vld [vmem:[%s736] sm:%s3]
    %s738 = scalar_lea.vmem [#allocation0], 96
    %739 = vst [vmem:[%s738] sm:%s3] %v737
    %s740 = scalar_lea.vmem %s0, 44
    %v741 = vld [vmem:[%s740] sm:%s3]
    %s742 = scalar_lea.vmem [#allocation0], 88
    %743 = vst [vmem:[%s742] sm:%s3] %v741
    %s744 = scalar_lea.vmem %s0, 40
    %v745 = vld [vmem:[%s744] sm:%s3]
    %s746 = scalar_lea.vmem [#allocation0], 80
    %747 = vst [vmem:[%s746] sm:%s3] %v745
    %s748 = scalar_lea.vmem %s0, 36
    %v749 = vld [vmem:[%s748] sm:%s3]
    %s750 = scalar_lea.vmem [#allocation0], 72
    %751 = vst [vmem:[%s750] sm:%s3] %v749
    %s752 = scalar_lea.vmem %s0, 32
    %v753 = vld [vmem:[%s752] sm:%s3]
    %s754 = scalar_lea.vmem [#allocation0], 64
    %755 = vst [vmem:[%s754] sm:%s3] %v753
    %s756 = scalar_lea.vmem %s0, 28
    %v757 = vld [vmem:[%s756] sm:%s3]
    %s758 = scalar_lea.vmem [#allocation0], 56
    %759 = vst [vmem:[%s758] sm:%s3] %v757
    %s760 = scalar_lea.vmem %s0, 24
    %v761 = vld [vmem:[%s760] sm:%s3]
    %s762 = scalar_lea.vmem [#allocation0], 48
    %763 = vst [vmem:[%s762] sm:%s3] %v761
    %s764 = scalar_lea.vmem %s0, 20
    %v765 = vld [vmem:[%s764] sm:%s3]
    %s766 = scalar_lea.vmem [#allocation0], 40
    %767 = vst [vmem:[%s766] sm:%s3] %v765
    %s768 = scalar_lea.vmem %s0, 16
    %v769 = vld [vmem:[%s768] sm:%s3]
    %s770 = scalar_lea.vmem [#allocation0], 32
    %771 = vst [vmem:[%s770] sm:%s3] %v769
    %s772 = scalar_lea.vmem %s0, 12
    %v773 = vld [vmem:[%s772] sm:%s3]
    %s774 = scalar_lea.vmem [#allocation0], 24
    %775 = vst [vmem:[%s774] sm:%s3] %v773
    %s776 = scalar_lea.vmem %s0, 8
    %v777 = vld [vmem:[%s776] sm:%s3]
    %s778 = scalar_lea.vmem [#allocation0], 16
    %779 = vst [vmem:[%s778] sm:%s3] %v777
    %s780 = scalar_lea.vmem %s0, 4
    %v781 = vld [vmem:[%s780] sm:%s3]
    %s782 = scalar_lea.vmem [#allocation0], 8
    %783 = vst [vmem:[%s782] sm:%s3] %v781
    %v784 = vld [vmem:[%s0] sm:%s3]
    %785 = vst [vmem:[#allocation0] sm:%s3] %v784
    %v786 = vld [vmem:[#allocation0] sm:$0xf]
    %787 = vst [vmem:[%s1] sm:$0xf] %v786
    %s788 = scalar_lea.vmem [#allocation0], 8
    %v789 = vld [vmem:[%s788] sm:$0xf]
    %s790 = scalar_lea.vmem %s1, 8
    %791 = vst [vmem:[%s790] sm:$0xf] %v789
    %s792 = scalar_lea.vmem [#allocation0], 16
    %v793 = vld [vmem:[%s792] sm:$0xf]
    %s794 = scalar_lea.vmem %s1, 4
    %795 = vst [vmem:[%s794] sm:$0xf] %v793
    %s796 = scalar_lea.vmem [#allocation0], 24
    %v797 = vld [vmem:[%s796] sm:$0xf]
    %s798 = scalar_lea.vmem %s1, 12
    %799 = vst [vmem:[%s798] sm:$0xf] %v797
    %s800 = scalar_lea.vmem [#allocation0], 32
    %v801 = vld [vmem:[%s800] sm:$0xf]
    %s802 = scalar_lea.vmem %s1, 16
    %803 = vst [vmem:[%s802] sm:$0xf] %v801
    %s804 = scalar_lea.vmem [#allocation0], 40
    %v805 = vld [vmem:[%s804] sm:$0xf]
    %s806 = scalar_lea.vmem %s1, 24
    %807 = vst [vmem:[%s806] sm:$0xf] %v805
    %s808 = scalar_lea.vmem [#allocation0], 48
    %v809 = vld [vmem:[%s808] sm:$0xf]
    %s810 = scalar_lea.vmem %s1, 20
    %811 = vst [vmem:[%s810] sm:$0xf] %v809
    %s812 = scalar_lea.vmem [#allocation0], 56
    %v813 = vld [vmem:[%s812] sm:$0xf]
    %s814 = scalar_lea.vmem %s1, 28
    %815 = vst [vmem:[%s814] sm:$0xf] %v813
    %s816 = scalar_lea.vmem [#allocation0], 64
    %v817 = vld [vmem:[%s816] sm:$0xf]
    %s818 = scalar_lea.vmem %s1, 32
    %819 = vst [vmem:[%s818] sm:$0xf] %v817
    %s820 = scalar_lea.vmem [#allocation0], 72
    %v821 = vld [vmem:[%s820] sm:$0xf]
    %s822 = scalar_lea.vmem %s1, 40
    %823 = vst [vmem:[%s822] sm:$0xf] %v821
    %s824 = scalar_lea.vmem [#allocation0], 80
    %v825 = vld [vmem:[%s824] sm:$0xf]
    %s826 = scalar_lea.vmem %s1, 36
    %827 = vst [vmem:[%s826] sm:$0xf] %v825
    %s828 = scalar_lea.vmem [#allocation0], 88
    %v829 = vld [vmem:[%s828] sm:$0xf]
    %s830 = scalar_lea.vmem %s1, 44
    %831 = vst [vmem:[%s830] sm:$0xf] %v829
    %s832 = scalar_lea.vmem [#allocation0], 96
    %v833 = vld [vmem:[%s832] sm:$0xf]
    %s834 = scalar_lea.vmem %s1, 48
    %835 = vst [vmem:[%s834] sm:$0xf] %v833
    %s836 = scalar_lea.vmem [#allocation0], 104
    %v837 = vld [vmem:[%s836] sm:$0xf]
    %s838 = scalar_lea.vmem %s1, 56
    %839 = vst [vmem:[%s838] sm:$0xf] %v837
    %s840 = scalar_lea.vmem [#allocation0], 112
    %v841 = vld [vmem:[%s840] sm:$0xf]
    %s842 = scalar_lea.vmem %s1, 52
    %843 = vst [vmem:[%s842] sm:$0xf] %v841
    %s844 = scalar_lea.vmem [#allocation0], 120
    %v845 = vld [vmem:[%s844] sm:$0xf]
    %s846 = scalar_lea.vmem %s1, 60
    %847 = vst [vmem:[%s846] sm:$0xf] %v845
    %s848 = scalar_lea.vmem [#allocation0], 128
    %v849 = vld [vmem:[%s848] sm:$0xf]
    %s850 = scalar_lea.vmem %s1, 64
    %851 = vst [vmem:[%s850] sm:$0xf] %v849
    %s852 = scalar_lea.vmem [#allocation0], 136
    %v853 = vld [vmem:[%s852] sm:$0xf]
    %s854 = scalar_lea.vmem %s1, 72
    %855 = vst [vmem:[%s854] sm:$0xf] %v853
    %s856 = scalar_lea.vmem [#allocation0], 144
    %v857 = vld [vmem:[%s856] sm:$0xf]
    %s858 = scalar_lea.vmem %s1, 68
    %859 = vst [vmem:[%s858] sm:$0xf] %v857
    %s860 = scalar_lea.vmem [#allocation0], 152
    %v861 = vld [vmem:[%s860] sm:$0xf]
    %s862 = scalar_lea.vmem %s1, 76
    %863 = vst [vmem:[%s862] sm:$0xf] %v861
    %s864 = scalar_lea.vmem [#allocation0], 160
    %v865 = vld [vmem:[%s864] sm:$0xf]
    %s866 = scalar_lea.vmem %s1, 80
    %867 = vst [vmem:[%s866] sm:$0xf] %v865
    %s868 = scalar_lea.vmem [#allocation0], 168
    %v869 = vld [vmem:[%s868] sm:$0xf]
    %s870 = scalar_lea.vmem %s1, 88
    %871 = vst [vmem:[%s870] sm:$0xf] %v869
    %s872 = scalar_lea.vmem [#allocation0], 176
    %v873 = vld [vmem:[%s872] sm:$0xf]
    %s874 = scalar_lea.vmem %s1, 84
    %875 = vst [vmem:[%s874] sm:$0xf] %v873
    %s876 = scalar_lea.vmem [#allocation0], 184
    %v877 = vld [vmem:[%s876] sm:$0xf]
    %s878 = scalar_lea.vmem %s1, 92
    %879 = vst [vmem:[%s878] sm:$0xf] %v877
    %s880 = scalar_lea.vmem [#allocation0], 192
    %v881 = vld [vmem:[%s880] sm:$0xf]
    %s882 = scalar_lea.vmem %s1, 96
    %883 = vst [vmem:[%s882] sm:$0xf] %v881
    %s884 = scalar_lea.vmem [#allocation0], 200
    %v885 = vld [vmem:[%s884] sm:$0xf]
    %s886 = scalar_lea.vmem %s1, 104
    %887 = vst [vmem:[%s886] sm:$0xf] %v885
    %s888 = scalar_lea.vmem [#allocation0], 208
    %v889 = vld [vmem:[%s888] sm:$0xf]
    %s890 = scalar_lea.vmem %s1, 100
    %891 = vst [vmem:[%s890] sm:$0xf] %v889
    %s892 = scalar_lea.vmem [#allocation0], 216
    %v893 = vld [vmem:[%s892] sm:$0xf]
    %s894 = scalar_lea.vmem %s1, 108
    %895 = vst [vmem:[%s894] sm:$0xf] %v893
    %s896 = scalar_lea.vmem [#allocation0], 224
    %v897 = vld [vmem:[%s896] sm:$0xf]
    %s898 = scalar_lea.vmem %s1, 112
    %899 = vst [vmem:[%s898] sm:$0xf] %v897
    %s900 = scalar_lea.vmem [#allocation0], 232
    %v901 = vld [vmem:[%s900] sm:$0xf]
    %s902 = scalar_lea.vmem %s1, 120
    %903 = vst [vmem:[%s902] sm:$0xf] %v901
    %s904 = scalar_lea.vmem [#allocation0], 240
    %v905 = vld [vmem:[%s904] sm:$0xf]
    %s906 = scalar_lea.vmem %s1, 116
    %907 = vst [vmem:[%s906] sm:$0xf] %v905
    %s908 = scalar_lea.vmem [#allocation0], 248
    %v909 = vld [vmem:[%s908] sm:$0xf]
    %s910 = scalar_lea.vmem %s1, 124
    %911 = vst [vmem:[%s910] sm:$0xf] %v909
    %s912 = scalar_lea.vmem [#allocation0], 256
    %v913 = vld [vmem:[%s912] sm:$0xf]
    %s914 = scalar_lea.vmem %s1, 128
    %915 = vst [vmem:[%s914] sm:$0xf] %v913
    %s916 = scalar_lea.vmem [#allocation0], 264
    %v917 = vld [vmem:[%s916] sm:$0xf]
    %s918 = scalar_lea.vmem %s1, 136
    %919 = vst [vmem:[%s918] sm:$0xf] %v917
    %s920 = scalar_lea.vmem [#allocation0], 272
    %v921 = vld [vmem:[%s920] sm:$0xf]
    %s922 = scalar_lea.vmem %s1, 132
    %923 = vst [vmem:[%s922] sm:$0xf] %v921
    %s924 = scalar_lea.vmem [#allocation0], 280
    %v925 = vld [vmem:[%s924] sm:$0xf]
    %s926 = scalar_lea.vmem %s1, 140
    %927 = vst [vmem:[%s926] sm:$0xf] %v925
    %s928 = scalar_lea.vmem [#allocation0], 288
    %v929 = vld [vmem:[%s928] sm:$0xf]
    %s930 = scalar_lea.vmem %s1, 144
    %931 = vst [vmem:[%s930] sm:$0xf] %v929
    %s932 = scalar_lea.vmem [#allocation0], 296
    %v933 = vld [vmem:[%s932] sm:$0xf]
    %s934 = scalar_lea.vmem %s1, 152
    %935 = vst [vmem:[%s934] sm:$0xf] %v933
    %s936 = scalar_lea.vmem [#allocation0], 304
    %v937 = vld [vmem:[%s936] sm:$0xf]
    %s938 = scalar_lea.vmem %s1, 148
    %939 = vst [vmem:[%s938] sm:$0xf] %v937
    %s940 = scalar_lea.vmem [#allocation0], 312
    %v941 = vld [vmem:[%s940] sm:$0xf]
    %s942 = scalar_lea.vmem %s1, 156
    %943 = vst [vmem:[%s942] sm:$0xf] %v941
    %s944 = scalar_lea.vmem [#allocation0], 320
    %v945 = vld [vmem:[%s944] sm:$0xf]
    %s946 = scalar_lea.vmem %s1, 160
    %947 = vst [vmem:[%s946] sm:$0xf] %v945
    %s948 = scalar_lea.vmem [#allocation0], 328
    %v949 = vld [vmem:[%s948] sm:$0xf]
    %s950 = scalar_lea.vmem %s1, 168
    %951 = vst [vmem:[%s950] sm:$0xf] %v949
    %s952 = scalar_lea.vmem [#allocation0], 336
    %v953 = vld [vmem:[%s952] sm:$0xf]
    %s954 = scalar_lea.vmem %s1, 164
    %955 = vst [vmem:[%s954] sm:$0xf] %v953
    %s956 = scalar_lea.vmem [#allocation0], 344
    %v957 = vld [vmem:[%s956] sm:$0xf]
    %s958 = scalar_lea.vmem %s1, 172
    %959 = vst [vmem:[%s958] sm:$0xf] %v957
    %s960 = scalar_lea.vmem [#allocation0], 352
    %v961 = vld [vmem:[%s960] sm:$0xf]
    %s962 = scalar_lea.vmem %s1, 176
    %963 = vst [vmem:[%s962] sm:$0xf] %v961
    %s964 = scalar_lea.vmem [#allocation0], 360
    %v965 = vld [vmem:[%s964] sm:$0xf]
    %s966 = scalar_lea.vmem %s1, 184
    %967 = vst [vmem:[%s966] sm:$0xf] %v965
    %s968 = scalar_lea.vmem [#allocation0], 368
    %v969 = vld [vmem:[%s968] sm:$0xf]
    %s970 = scalar_lea.vmem %s1, 180
    %971 = vst [vmem:[%s970] sm:$0xf] %v969
    %s972 = scalar_lea.vmem [#allocation0], 376
    %v973 = vld [vmem:[%s972] sm:$0xf]
    %s974 = scalar_lea.vmem %s1, 188
    %975 = vst [vmem:[%s974] sm:$0xf] %v973
    %s976 = scalar_lea.vmem [#allocation0], 384
    %v977 = vld [vmem:[%s976] sm:$0xf]
    %s978 = scalar_lea.vmem %s1, 192
    %979 = vst [vmem:[%s978] sm:$0xf] %v977
    %s980 = scalar_lea.vmem [#allocation0], 392
    %v981 = vld [vmem:[%s980] sm:$0xf]
    %s982 = scalar_lea.vmem %s1, 200
    %983 = vst [vmem:[%s982] sm:$0xf] %v981
    %s984 = scalar_lea.vmem [#allocation0], 400
    %v985 = vld [vmem:[%s984] sm:$0xf]
    %s986 = scalar_lea.vmem %s1, 196
    %987 = vst [vmem:[%s986] sm:$0xf] %v985
    %s988 = scalar_lea.vmem [#allocation0], 408
    %v989 = vld [vmem:[%s988] sm:$0xf]
    %s990 = scalar_lea.vmem %s1, 204
    %991 = vst [vmem:[%s990] sm:$0xf] %v989
    %s992 = scalar_lea.vmem [#allocation0], 416
    %v993 = vld [vmem:[%s992] sm:$0xf]
    %s994 = scalar_lea.vmem %s1, 208
    %995 = vst [vmem:[%s994] sm:$0xf] %v993
    %s996 = scalar_lea.vmem [#allocation0], 424
    %v997 = vld [vmem:[%s996] sm:$0xf]
    %s998 = scalar_lea.vmem %s1, 216
    %999 = vst [vmem:[%s998] sm:$0xf] %v997
    %s1000 = scalar_lea.vmem [#allocation0], 432
    %v1001 = vld [vmem:[%s1000] sm:$0xf]
    %s1002 = scalar_lea.vmem %s1, 212
    %1003 = vst [vmem:[%s1002] sm:$0xf] %v1001
    %s1004 = scalar_lea.vmem [#allocation0], 440
    %v1005 = vld [vmem:[%s1004] sm:$0xf]
    %s1006 = scalar_lea.vmem %s1, 220
    %1007 = vst [vmem:[%s1006] sm:$0xf] %v1005
    %s1008 = scalar_lea.vmem [#allocation0], 448
    %v1009 = vld [vmem:[%s1008] sm:$0xf]
    %s1010 = scalar_lea.vmem %s1, 224
    %1011 = vst [vmem:[%s1010] sm:$0xf] %v1009
    %s1012 = scalar_lea.vmem [#allocation0], 456
    %v1013 = vld [vmem:[%s1012] sm:$0xf]
    %s1014 = scalar_lea.vmem %s1, 232
    %1015 = vst [vmem:[%s1014] sm:$0xf] %v1013
    %s1016 = scalar_lea.vmem [#allocation0], 464
    %v1017 = vld [vmem:[%s1016] sm:$0xf]
    %s1018 = scalar_lea.vmem %s1, 228
    %1019 = vst [vmem:[%s1018] sm:$0xf] %v1017
    %s1020 = scalar_lea.vmem [#allocation0], 472
    %v1021 = vld [vmem:[%s1020] sm:$0xf]
    %s1022 = scalar_lea.vmem %s1, 236
    %1023 = vst [vmem:[%s1022] sm:$0xf] %v1021
    %s1024 = scalar_lea.vmem [#allocation0], 480
    %v1025 = vld [vmem:[%s1024] sm:$0xf]
    %s1026 = scalar_lea.vmem %s1, 240
    %1027 = vst [vmem:[%s1026] sm:$0xf] %v1025
    %s1028 = scalar_lea.vmem [#allocation0], 488
    %v1029 = vld [vmem:[%s1028] sm:$0xf]
    %s1030 = scalar_lea.vmem %s1, 248
    %1031 = vst [vmem:[%s1030] sm:$0xf] %v1029
    %s1032 = scalar_lea.vmem [#allocation0], 496
    %v1033 = vld [vmem:[%s1032] sm:$0xf]
    %s1034 = scalar_lea.vmem %s1, 244
    %1035 = vst [vmem:[%s1034] sm:$0xf] %v1033
    %s1036 = scalar_lea.vmem [#allocation0], 504
    %v1037 = vld [vmem:[%s1036] sm:$0xf]
    %s1038 = scalar_lea.vmem %s1, 252
    %1039 = vst [vmem:[%s1038] sm:$0xf] %v1037
    %s1040 = scalar_lea.vmem [#allocation0], 512
    %v1041 = vld [vmem:[%s1040] sm:$0xf]
    %s1042 = scalar_lea.vmem %s1, 256
    %1043 = vst [vmem:[%s1042] sm:$0xf] %v1041
    %s1044 = scalar_lea.vmem [#allocation0], 520
    %v1045 = vld [vmem:[%s1044] sm:$0xf]
    %s1046 = scalar_lea.vmem %s1, 264
    %1047 = vst [vmem:[%s1046] sm:$0xf] %v1045
    %s1048 = scalar_lea.vmem [#allocation0], 528
    %v1049 = vld [vmem:[%s1048] sm:$0xf]
    %s1050 = scalar_lea.vmem %s1, 260
    %1051 = vst [vmem:[%s1050] sm:$0xf] %v1049
    %s1052 = scalar_lea.vmem [#allocation0], 536
    %v1053 = vld [vmem:[%s1052] sm:$0xf]
    %s1054 = scalar_lea.vmem %s1, 268
    %1055 = vst [vmem:[%s1054] sm:$0xf] %v1053
    %s1056 = scalar_lea.vmem [#allocation0], 544
    %v1057 = vld [vmem:[%s1056] sm:$0xf]
    %s1058 = scalar_lea.vmem %s1, 272
    %1059 = vst [vmem:[%s1058] sm:$0xf] %v1057
    %s1060 = scalar_lea.vmem [#allocation0], 552
    %v1061 = vld [vmem:[%s1060] sm:$0xf]
    %s1062 = scalar_lea.vmem %s1, 280
    %1063 = vst [vmem:[%s1062] sm:$0xf] %v1061
    %s1064 = scalar_lea.vmem [#allocation0], 560
    %v1065 = vld [vmem:[%s1064] sm:$0xf]
    %s1066 = scalar_lea.vmem %s1, 276
    %1067 = vst [vmem:[%s1066] sm:$0xf] %v1065
    %s1068 = scalar_lea.vmem [#allocation0], 568
    %v1069 = vld [vmem:[%s1068] sm:$0xf]
    %s1070 = scalar_lea.vmem %s1, 284
    %1071 = vst [vmem:[%s1070] sm:$0xf] %v1069
    %s1072 = scalar_lea.vmem [#allocation0], 576
    %v1073 = vld [vmem:[%s1072] sm:$0xf]
    %s1074 = scalar_lea.vmem %s1, 288
    %1075 = vst [vmem:[%s1074] sm:$0xf] %v1073
    %s1076 = scalar_lea.vmem [#allocation0], 584
    %v1077 = vld [vmem:[%s1076] sm:$0xf]
    %s1078 = scalar_lea.vmem %s1, 296
    %1079 = vst [vmem:[%s1078] sm:$0xf] %v1077
    %s1080 = scalar_lea.vmem [#allocation0], 592
    %v1081 = vld [vmem:[%s1080] sm:$0xf]
    %s1082 = scalar_lea.vmem %s1, 292
    %1083 = vst [vmem:[%s1082] sm:$0xf] %v1081
    %s1084 = scalar_lea.vmem [#allocation0], 600
    %v1085 = vld [vmem:[%s1084] sm:$0xf]
    %s1086 = scalar_lea.vmem %s1, 300
    %1087 = vst [vmem:[%s1086] sm:$0xf] %v1085
    %s1088 = scalar_lea.vmem [#allocation0], 608
    %v1089 = vld [vmem:[%s1088] sm:$0xf]
    %s1090 = scalar_lea.vmem %s1, 304
    %1091 = vst [vmem:[%s1090] sm:$0xf] %v1089
    %s1092 = scalar_lea.vmem [#allocation0], 616
    %v1093 = vld [vmem:[%s1092] sm:$0xf]
    %s1094 = scalar_lea.vmem %s1, 312
    %1095 = vst [vmem:[%s1094] sm:$0xf] %v1093
    %s1096 = scalar_lea.vmem [#allocation0], 624
    %v1097 = vld [vmem:[%s1096] sm:$0xf]
    %s1098 = scalar_lea.vmem %s1, 308
    %1099 = vst [vmem:[%s1098] sm:$0xf] %v1097
    %s1100 = scalar_lea.vmem [#allocation0], 632
    %v1101 = vld [vmem:[%s1100] sm:$0xf]
    %s1102 = scalar_lea.vmem %s1, 316
    %1103 = vst [vmem:[%s1102] sm:$0xf] %v1101
    %s1104 = scalar_lea.vmem [#allocation0], 640
    %v1105 = vld [vmem:[%s1104] sm:$0xf]
    %s1106 = scalar_lea.vmem %s1, 320
    %1107 = vst [vmem:[%s1106] sm:$0xf] %v1105
    %s1108 = scalar_lea.vmem [#allocation0], 648
    %v1109 = vld [vmem:[%s1108] sm:$0xf]
    %s1110 = scalar_lea.vmem %s1, 328
    %1111 = vst [vmem:[%s1110] sm:$0xf] %v1109
    %s1112 = scalar_lea.vmem [#allocation0], 656
    %v1113 = vld [vmem:[%s1112] sm:$0xf]
    %s1114 = scalar_lea.vmem %s1, 324
    %1115 = vst [vmem:[%s1114] sm:$0xf] %v1113
    %s1116 = scalar_lea.vmem [#allocation0], 664
    %v1117 = vld [vmem:[%s1116] sm:$0xf]
    %s1118 = scalar_lea.vmem %s1, 332
    %1119 = vst [vmem:[%s1118] sm:$0xf] %v1117
    %s1120 = scalar_lea.vmem [#allocation0], 672
    %v1121 = vld [vmem:[%s1120] sm:$0xf]
    %s1122 = scalar_lea.vmem %s1, 336
    %1123 = vst [vmem:[%s1122] sm:$0xf] %v1121
    %s1124 = scalar_lea.vmem [#allocation0], 680
    %v1125 = vld [vmem:[%s1124] sm:$0xf]
    %s1126 = scalar_lea.vmem %s1, 344
    %1127 = vst [vmem:[%s1126] sm:$0xf] %v1125
    %s1128 = scalar_lea.vmem [#allocation0], 688
    %v1129 = vld [vmem:[%s1128] sm:$0xf]
    %s1130 = scalar_lea.vmem %s1, 340
    %1131 = vst [vmem:[%s1130] sm:$0xf] %v1129
    %s1132 = scalar_lea.vmem [#allocation0], 696
    %v1133 = vld [vmem:[%s1132] sm:$0xf]
    %s1134 = scalar_lea.vmem %s1, 348
    %1135 = vst [vmem:[%s1134] sm:$0xf] %v1133
    %s1136 = scalar_lea.vmem [#allocation0], 704
    %v1137 = vld [vmem:[%s1136] sm:$0xf]
    %s1138 = scalar_lea.vmem %s1, 352
    %1139 = vst [vmem:[%s1138] sm:$0xf] %v1137
    %s1140 = scalar_lea.vmem [#allocation0], 712
    %v1141 = vld [vmem:[%s1140] sm:$0xf]
    %s1142 = scalar_lea.vmem %s1, 360
    %1143 = vst [vmem:[%s1142] sm:$0xf] %v1141
    %s1144 = scalar_lea.vmem [#allocation0], 720
    %v1145 = vld [vmem:[%s1144] sm:$0xf]
    %s1146 = scalar_lea.vmem %s1, 356
    %1147 = vst [vmem:[%s1146] sm:$0xf] %v1145
    %s1148 = scalar_lea.vmem [#allocation0], 728
    %v1149 = vld [vmem:[%s1148] sm:$0xf]
    %s1150 = scalar_lea.vmem %s1, 364
    %1151 = vst [vmem:[%s1150] sm:$0xf] %v1149
    %s1152 = scalar_lea.vmem [#allocation0], 736
    %v1153 = vld [vmem:[%s1152] sm:$0xf]
    %s1154 = scalar_lea.vmem %s1, 368
    %1155 = vst [vmem:[%s1154] sm:$0xf] %v1153
    %s1156 = scalar_lea.vmem [#allocation0], 744
    %v1157 = vld [vmem:[%s1156] sm:$0xf]
    %s1158 = scalar_lea.vmem %s1, 376
    %1159 = vst [vmem:[%s1158] sm:$0xf] %v1157
    %s1160 = scalar_lea.vmem [#allocation0], 752
    %v1161 = vld [vmem:[%s1160] sm:$0xf]
    %s1162 = scalar_lea.vmem %s1, 372
    %1163 = vst [vmem:[%s1162] sm:$0xf] %v1161
    %s1164 = scalar_lea.vmem [#allocation0], 760
    %v1165 = vld [vmem:[%s1164] sm:$0xf]
    %s1166 = scalar_lea.vmem %s1, 380
    %1167 = vst [vmem:[%s1166] sm:$0xf] %v1165
    %s1168 = scalar_lea.vmem [#allocation0], 768
    %v1169 = vld [vmem:[%s1168] sm:$0xf]
    %s1170 = scalar_lea.vmem %s1, 384
    %1171 = vst [vmem:[%s1170] sm:$0xf] %v1169
    %s1172 = scalar_lea.vmem [#allocation0], 776
    %v1173 = vld [vmem:[%s1172] sm:$0xf]
    %s1174 = scalar_lea.vmem %s1, 392
    %1175 = vst [vmem:[%s1174] sm:$0xf] %v1173
    %s1176 = scalar_lea.vmem [#allocation0], 784
    %v1177 = vld [vmem:[%s1176] sm:$0xf]
    %s1178 = scalar_lea.vmem %s1, 388
    %1179 = vst [vmem:[%s1178] sm:$0xf] %v1177
    %s1180 = scalar_lea.vmem [#allocation0], 792
    %v1181 = vld [vmem:[%s1180] sm:$0xf]
    %s1182 = scalar_lea.vmem %s1, 396
    %1183 = vst [vmem:[%s1182] sm:$0xf] %v1181
    %s1184 = scalar_lea.vmem [#allocation0], 800
    %v1185 = vld [vmem:[%s1184] sm:$0xf]
    %s1186 = scalar_lea.vmem %s1, 400
    %1187 = vst [vmem:[%s1186] sm:$0xf] %v1185
    %s1188 = scalar_lea.vmem [#allocation0], 808
    %v1189 = vld [vmem:[%s1188] sm:$0xf]
    %s1190 = scalar_lea.vmem %s1, 408
    %1191 = vst [vmem:[%s1190] sm:$0xf] %v1189
    %s1192 = scalar_lea.vmem [#allocation0], 816
    %v1193 = vld [vmem:[%s1192] sm:$0xf]
    %s1194 = scalar_lea.vmem %s1, 404
    %1195 = vst [vmem:[%s1194] sm:$0xf] %v1193
    %s1196 = scalar_lea.vmem [#allocation0], 824
    %v1197 = vld [vmem:[%s1196] sm:$0xf]
    %s1198 = scalar_lea.vmem %s1, 412
    %1199 = vst [vmem:[%s1198] sm:$0xf] %v1197
    %s1200 = scalar_lea.vmem [#allocation0], 832
    %v1201 = vld [vmem:[%s1200] sm:$0xf]
    %s1202 = scalar_lea.vmem %s1, 416
    %1203 = vst [vmem:[%s1202] sm:$0xf] %v1201
    %s1204 = scalar_lea.vmem [#allocation0], 840
    %v1205 = vld [vmem:[%s1204] sm:$0xf]
    %s1206 = scalar_lea.vmem %s1, 424
    %1207 = vst [vmem:[%s1206] sm:$0xf] %v1205
    %s1208 = scalar_lea.vmem [#allocation0], 848
    %v1209 = vld [vmem:[%s1208] sm:$0xf]
    %s1210 = scalar_lea.vmem %s1, 420
    %1211 = vst [vmem:[%s1210] sm:$0xf] %v1209
    %s1212 = scalar_lea.vmem [#allocation0], 856
    %v1213 = vld [vmem:[%s1212] sm:$0xf]
    %s1214 = scalar_lea.vmem %s1, 428
    %1215 = vst [vmem:[%s1214] sm:$0xf] %v1213
    %s1216 = scalar_lea.vmem [#allocation0], 864
    %v1217 = vld [vmem:[%s1216] sm:$0xf]
    %s1218 = scalar_lea.vmem %s1, 432
    %1219 = vst [vmem:[%s1218] sm:$0xf] %v1217
    %s1220 = scalar_lea.vmem [#allocation0], 872
    %v1221 = vld [vmem:[%s1220] sm:$0xf]
    %s1222 = scalar_lea.vmem %s1, 440
    %1223 = vst [vmem:[%s1222] sm:$0xf] %v1221
    %s1224 = scalar_lea.vmem [#allocation0], 880
    %v1225 = vld [vmem:[%s1224] sm:$0xf]
    %s1226 = scalar_lea.vmem %s1, 436
    %1227 = vst [vmem:[%s1226] sm:$0xf] %v1225
    %s1228 = scalar_lea.vmem [#allocation0], 888
    %v1229 = vld [vmem:[%s1228] sm:$0xf]
    %s1230 = scalar_lea.vmem %s1, 444
    %1231 = vst [vmem:[%s1230] sm:$0xf] %v1229
    %s1232 = scalar_lea.vmem [#allocation0], 896
    %v1233 = vld [vmem:[%s1232] sm:$0xf]
    %s1234 = scalar_lea.vmem %s1, 448
    %1235 = vst [vmem:[%s1234] sm:$0xf] %v1233
    %s1236 = scalar_lea.vmem [#allocation0], 904
    %v1237 = vld [vmem:[%s1236] sm:$0xf]
    %s1238 = scalar_lea.vmem %s1, 456
    %1239 = vst [vmem:[%s1238] sm:$0xf] %v1237
    %s1240 = scalar_lea.vmem [#allocation0], 912
    %v1241 = vld [vmem:[%s1240] sm:$0xf]
    %s1242 = scalar_lea.vmem %s1, 452
    %1243 = vst [vmem:[%s1242] sm:$0xf] %v1241
    %s1244 = scalar_lea.vmem [#allocation0], 920
    %v1245 = vld [vmem:[%s1244] sm:$0xf]
    %s1246 = scalar_lea.vmem %s1, 460
    %1247 = vst [vmem:[%s1246] sm:$0xf] %v1245
    %s1248 = scalar_lea.vmem [#allocation0], 928
    %v1249 = vld [vmem:[%s1248] sm:$0xf]
    %s1250 = scalar_lea.vmem %s1, 464
    %1251 = vst [vmem:[%s1250] sm:$0xf] %v1249
    %s1252 = scalar_lea.vmem [#allocation0], 936
    %v1253 = vld [vmem:[%s1252] sm:$0xf]
    %s1254 = scalar_lea.vmem %s1, 472
    %1255 = vst [vmem:[%s1254] sm:$0xf] %v1253
    %s1256 = scalar_lea.vmem [#allocation0], 944
    %v1257 = vld [vmem:[%s1256] sm:$0xf]
    %s1258 = scalar_lea.vmem %s1, 468
    %1259 = vst [vmem:[%s1258] sm:$0xf] %v1257
    %s1260 = scalar_lea.vmem [#allocation0], 952
    %v1261 = vld [vmem:[%s1260] sm:$0xf]
    %s1262 = scalar_lea.vmem %s1, 476
    %1263 = vst [vmem:[%s1262] sm:$0xf] %v1261
    %s1264 = scalar_lea.vmem [#allocation0], 960
    %v1265 = vld [vmem:[%s1264] sm:$0xf]
    %s1266 = scalar_lea.vmem %s1, 480
    %1267 = vst [vmem:[%s1266] sm:$0xf] %v1265
    %s1268 = scalar_lea.vmem [#allocation0], 968
    %v1269 = vld [vmem:[%s1268] sm:$0xf]
    %s1270 = scalar_lea.vmem %s1, 488
    %1271 = vst [vmem:[%s1270] sm:$0xf] %v1269
    %s1272 = scalar_lea.vmem [#allocation0], 976
    %v1273 = vld [vmem:[%s1272] sm:$0xf]
    %s1274 = scalar_lea.vmem %s1, 484
    %1275 = vst [vmem:[%s1274] sm:$0xf] %v1273
    %s1276 = scalar_lea.vmem [#allocation0], 984
    %v1277 = vld [vmem:[%s1276] sm:$0xf]
    %s1278 = scalar_lea.vmem %s1, 492
    %1279 = vst [vmem:[%s1278] sm:$0xf] %v1277
    %s1280 = scalar_lea.vmem [#allocation0], 992
    %v1281 = vld [vmem:[%s1280] sm:$0xf]
    %s1282 = scalar_lea.vmem %s1, 496
    %1283 = vst [vmem:[%s1282] sm:$0xf] %v1281
    %s1284 = scalar_lea.vmem [#allocation0], 1000
    %v1285 = vld [vmem:[%s1284] sm:$0xf]
    %s1286 = scalar_lea.vmem %s1, 504
    %1287 = vst [vmem:[%s1286] sm:$0xf] %v1285
    %s1288 = scalar_lea.vmem [#allocation0], 1008
    %v1289 = vld [vmem:[%s1288] sm:$0xf]
    %s1290 = scalar_lea.vmem %s1, 500
    %1291 = vst [vmem:[%s1290] sm:$0xf] %v1289
    %s1292 = scalar_lea.vmem [#allocation0], 1016
    %v1293 = vld [vmem:[%s1292] sm:$0xf]
    %s1294 = scalar_lea.vmem %s1, 508
    %1295 = vst [vmem:[%s1294] sm:$0xf] %v1293
    %s1296 = scalar_lea.vmem [#allocation0], 1024
    %v1297 = vld [vmem:[%s1296] sm:$0xf]
    %s1298 = scalar_lea.vmem %s1, 512
    %1299 = vst [vmem:[%s1298] sm:$0xf] %v1297
    %s1300 = scalar_lea.vmem [#allocation0], 1032
    %v1301 = vld [vmem:[%s1300] sm:$0xf]
    %s1302 = scalar_lea.vmem %s1, 520
    %1303 = vst [vmem:[%s1302] sm:$0xf] %v1301
    %s1304 = scalar_lea.vmem [#allocation0], 1040
    %v1305 = vld [vmem:[%s1304] sm:$0xf]
    %s1306 = scalar_lea.vmem %s1, 516
    %1307 = vst [vmem:[%s1306] sm:$0xf] %v1305
    %s1308 = scalar_lea.vmem [#allocation0], 1048
    %v1309 = vld [vmem:[%s1308] sm:$0xf]
    %s1310 = scalar_lea.vmem %s1, 524
    %1311 = vst [vmem:[%s1310] sm:$0xf] %v1309
    %s1312 = scalar_lea.vmem [#allocation0], 1056
    %v1313 = vld [vmem:[%s1312] sm:$0xf]
    %s1314 = scalar_lea.vmem %s1, 528
    %1315 = vst [vmem:[%s1314] sm:$0xf] %v1313
    %s1316 = scalar_lea.vmem [#allocation0], 1064
    %v1317 = vld [vmem:[%s1316] sm:$0xf]
    %s1318 = scalar_lea.vmem %s1, 536
    %1319 = vst [vmem:[%s1318] sm:$0xf] %v1317
    %s1320 = scalar_lea.vmem [#allocation0], 1072
    %v1321 = vld [vmem:[%s1320] sm:$0xf]
    %s1322 = scalar_lea.vmem %s1, 532
    %1323 = vst [vmem:[%s1322] sm:$0xf] %v1321
    %s1324 = scalar_lea.vmem [#allocation0], 1080
    %v1325 = vld [vmem:[%s1324] sm:$0xf]
    %s1326 = scalar_lea.vmem %s1, 540
    %1327 = vst [vmem:[%s1326] sm:$0xf] %v1325
    %s1328 = scalar_lea.vmem [#allocation0], 1088
    %v1329 = vld [vmem:[%s1328] sm:$0xf]
    %s1330 = scalar_lea.vmem %s1, 544
    %1331 = vst [vmem:[%s1330] sm:$0xf] %v1329
    %s1332 = scalar_lea.vmem [#allocation0], 1096
    %v1333 = vld [vmem:[%s1332] sm:$0xf]
    %s1334 = scalar_lea.vmem %s1, 552
    %1335 = vst [vmem:[%s1334] sm:$0xf] %v1333
    %s1336 = scalar_lea.vmem [#allocation0], 1104
    %v1337 = vld [vmem:[%s1336] sm:$0xf]
    %s1338 = scalar_lea.vmem %s1, 548
    %1339 = vst [vmem:[%s1338] sm:$0xf] %v1337
    %s1340 = scalar_lea.vmem [#allocation0], 1112
    %v1341 = vld [vmem:[%s1340] sm:$0xf]
    %s1342 = scalar_lea.vmem %s1, 556
    %1343 = vst [vmem:[%s1342] sm:$0xf] %v1341
    %s1344 = scalar_lea.vmem [#allocation0], 1120
    %v1345 = vld [vmem:[%s1344] sm:$0xf]
    %s1346 = scalar_lea.vmem %s1, 560
    %1347 = vst [vmem:[%s1346] sm:$0xf] %v1345
    %s1348 = scalar_lea.vmem [#allocation0], 1128
    %v1349 = vld [vmem:[%s1348] sm:$0xf]
    %s1350 = scalar_lea.vmem %s1, 568
    %1351 = vst [vmem:[%s1350] sm:$0xf] %v1349
    %s1352 = scalar_lea.vmem [#allocation0], 1136
    %v1353 = vld [vmem:[%s1352] sm:$0xf]
    %s1354 = scalar_lea.vmem %s1, 564
    %1355 = vst [vmem:[%s1354] sm:$0xf] %v1353
    %s1356 = scalar_lea.vmem [#allocation0], 1144
    %v1357 = vld [vmem:[%s1356] sm:$0xf]
    %s1358 = scalar_lea.vmem %s1, 572
    %1359 = vst [vmem:[%s1358] sm:$0xf] %v1357
    %s1360 = scalar_lea.vmem [#allocation0], 1152
    %v1361 = vld [vmem:[%s1360] sm:$0xf]
    %s1362 = scalar_lea.vmem %s1, 576
    %1363 = vst [vmem:[%s1362] sm:$0xf] %v1361
    %s1364 = scalar_lea.vmem [#allocation0], 1160
    %v1365 = vld [vmem:[%s1364] sm:$0xf]
    %s1366 = scalar_lea.vmem %s1, 584
    %1367 = vst [vmem:[%s1366] sm:$0xf] %v1365
    %s1368 = scalar_lea.vmem [#allocation0], 1168
    %v1369 = vld [vmem:[%s1368] sm:$0xf]
    %s1370 = scalar_lea.vmem %s1, 580
    %1371 = vst [vmem:[%s1370] sm:$0xf] %v1369
    %s1372 = scalar_lea.vmem [#allocation0], 1176
    %v1373 = vld [vmem:[%s1372] sm:$0xf]
    %s1374 = scalar_lea.vmem %s1, 588
    %1375 = vst [vmem:[%s1374] sm:$0xf] %v1373
    %s1376 = scalar_lea.vmem [#allocation0], 1184
    %v1377 = vld [vmem:[%s1376] sm:$0xf]
    %s1378 = scalar_lea.vmem %s1, 592
    %1379 = vst [vmem:[%s1378] sm:$0xf] %v1377
    %s1380 = scalar_lea.vmem [#allocation0], 1192
    %v1381 = vld [vmem:[%s1380] sm:$0xf]
    %s1382 = scalar_lea.vmem %s1, 600
    %1383 = vst [vmem:[%s1382] sm:$0xf] %v1381
    %s1384 = scalar_lea.vmem [#allocation0], 1200
    %v1385 = vld [vmem:[%s1384] sm:$0xf]
    %s1386 = scalar_lea.vmem %s1, 596
    %1387 = vst [vmem:[%s1386] sm:$0xf] %v1385
    %s1388 = scalar_lea.vmem [#allocation0], 1208
    %v1389 = vld [vmem:[%s1388] sm:$0xf]
    %s1390 = scalar_lea.vmem %s1, 604
    %1391 = vst [vmem:[%s1390] sm:$0xf] %v1389
    %s1392 = scalar_lea.vmem [#allocation0], 1216
    %v1393 = vld [vmem:[%s1392] sm:$0xf]
    %s1394 = scalar_lea.vmem %s1, 608
    %1395 = vst [vmem:[%s1394] sm:$0xf] %v1393
    %s1396 = scalar_lea.vmem [#allocation0], 1224
    %v1397 = vld [vmem:[%s1396] sm:$0xf]
    %s1398 = scalar_lea.vmem %s1, 616
    %1399 = vst [vmem:[%s1398] sm:$0xf] %v1397
    %s1400 = scalar_lea.vmem [#allocation0], 1232
    %v1401 = vld [vmem:[%s1400] sm:$0xf]
    %s1402 = scalar_lea.vmem %s1, 612
    %1403 = vst [vmem:[%s1402] sm:$0xf] %v1401
    %s1404 = scalar_lea.vmem [#allocation0], 1240
    %v1405 = vld [vmem:[%s1404] sm:$0xf]
    %s1406 = scalar_lea.vmem %s1, 620
    %1407 = vst [vmem:[%s1406] sm:$0xf] %v1405
    %s1408 = scalar_lea.vmem [#allocation0], 1248
    %v1409 = vld [vmem:[%s1408] sm:$0xf]
    %s1410 = scalar_lea.vmem %s1, 624
    %1411 = vst [vmem:[%s1410] sm:$0xf] %v1409
    %s1412 = scalar_lea.vmem [#allocation0], 1256
    %v1413 = vld [vmem:[%s1412] sm:$0xf]
    %s1414 = scalar_lea.vmem %s1, 632
    %1415 = vst [vmem:[%s1414] sm:$0xf] %v1413
    %s1416 = scalar_lea.vmem [#allocation0], 1264
    %v1417 = vld [vmem:[%s1416] sm:$0xf]
    %s1418 = scalar_lea.vmem %s1, 628
    %1419 = vst [vmem:[%s1418] sm:$0xf] %v1417
    %s1420 = scalar_lea.vmem [#allocation0], 1272
    %v1421 = vld [vmem:[%s1420] sm:$0xf]
    %s1422 = scalar_lea.vmem %s1, 636
    %1423 = vst [vmem:[%s1422] sm:$0xf] %v1421
    %s1424 = scalar_lea.vmem [#allocation0], 1280
    %v1425 = vld [vmem:[%s1424] sm:$0xf]
    %s1426 = scalar_lea.vmem %s1, 640
    %1427 = vst [vmem:[%s1426] sm:$0xf] %v1425
    %s1428 = scalar_lea.vmem [#allocation0], 1288
    %v1429 = vld [vmem:[%s1428] sm:$0xf]
    %s1430 = scalar_lea.vmem %s1, 648
    %1431 = vst [vmem:[%s1430] sm:$0xf] %v1429
    %s1432 = scalar_lea.vmem [#allocation0], 1296
    %v1433 = vld [vmem:[%s1432] sm:$0xf]
    %s1434 = scalar_lea.vmem %s1, 644
    %1435 = vst [vmem:[%s1434] sm:$0xf] %v1433
    %s1436 = scalar_lea.vmem [#allocation0], 1304
    %v1437 = vld [vmem:[%s1436] sm:$0xf]
    %s1438 = scalar_lea.vmem %s1, 652
    %1439 = vst [vmem:[%s1438] sm:$0xf] %v1437
    %s1440 = scalar_lea.vmem [#allocation0], 1312
    %v1441 = vld [vmem:[%s1440] sm:$0xf]
    %s1442 = scalar_lea.vmem %s1, 656
    %1443 = vst [vmem:[%s1442] sm:$0xf] %v1441
    %s1444 = scalar_lea.vmem [#allocation0], 1320
    %v1445 = vld [vmem:[%s1444] sm:$0xf]
    %s1446 = scalar_lea.vmem %s1, 664
    %1447 = vst [vmem:[%s1446] sm:$0xf] %v1445
    %s1448 = scalar_lea.vmem [#allocation0], 1328
    %v1449 = vld [vmem:[%s1448] sm:$0xf]
    %s1450 = scalar_lea.vmem %s1, 660
    %1451 = vst [vmem:[%s1450] sm:$0xf] %v1449
    %s1452 = scalar_lea.vmem [#allocation0], 1336
    %v1453 = vld [vmem:[%s1452] sm:$0xf]
    %s1454 = scalar_lea.vmem %s1, 668
    %1455 = vst [vmem:[%s1454] sm:$0xf] %v1453
    %s1456 = scalar_lea.vmem [#allocation0], 1344
    %v1457 = vld [vmem:[%s1456] sm:$0xf]
    %s1458 = scalar_lea.vmem %s1, 672
    %1459 = vst [vmem:[%s1458] sm:$0xf] %v1457
    %s1460 = scalar_lea.vmem [#allocation0], 1352
    %v1461 = vld [vmem:[%s1460] sm:$0xf]
    %s1462 = scalar_lea.vmem %s1, 680
    %1463 = vst [vmem:[%s1462] sm:$0xf] %v1461
    %s1464 = scalar_lea.vmem [#allocation0], 1360
    %v1465 = vld [vmem:[%s1464] sm:$0xf]
    %s1466 = scalar_lea.vmem %s1, 676
    %1467 = vst [vmem:[%s1466] sm:$0xf] %v1465
    %s1468 = scalar_lea.vmem [#allocation0], 1368
    %v1469 = vld [vmem:[%s1468] sm:$0xf]
    %s1470 = scalar_lea.vmem %s1, 684
    %1471 = vst [vmem:[%s1470] sm:$0xf] %v1469
    %s1472 = scalar_lea.vmem [#allocation0], 1376
    %v1473 = vld [vmem:[%s1472] sm:$0xf]
    %s1474 = scalar_lea.vmem %s1, 688
    %1475 = vst [vmem:[%s1474] sm:$0xf] %v1473
    %s1476 = scalar_lea.vmem [#allocation0], 1384
    %v1477 = vld [vmem:[%s1476] sm:$0xf]
    %s1478 = scalar_lea.vmem %s1, 696
    %1479 = vst [vmem:[%s1478] sm:$0xf] %v1477
    %s1480 = scalar_lea.vmem [#allocation0], 1392
    %v1481 = vld [vmem:[%s1480] sm:$0xf]
    %s1482 = scalar_lea.vmem %s1, 692
    %1483 = vst [vmem:[%s1482] sm:$0xf] %v1481
    %s1484 = scalar_lea.vmem [#allocation0], 1400
    %v1485 = vld [vmem:[%s1484] sm:$0xf]
    %s1486 = scalar_lea.vmem %s1, 700
    %1487 = vst [vmem:[%s1486] sm:$0xf] %v1485
    %s1488 = scalar_lea.vmem [#allocation0], 1408
    %v1489 = vld [vmem:[%s1488] sm:$0xf]
    %s1490 = scalar_lea.vmem %s1, 704
    %1491 = vst [vmem:[%s1490] sm:$0xf] %v1489
    %s1492 = scalar_lea.vmem [#allocation0], 1416
    %v1493 = vld [vmem:[%s1492] sm:$0xf]
    %s1494 = scalar_lea.vmem %s1, 712
    %1495 = vst [vmem:[%s1494] sm:$0xf] %v1493
    %s1496 = scalar_lea.vmem [#allocation0], 1424
    %v1497 = vld [vmem:[%s1496] sm:$0xf]
    %s1498 = scalar_lea.vmem %s1, 708
    %1499 = vst [vmem:[%s1498] sm:$0xf] %v1497
    %s1500 = scalar_lea.vmem [#allocation0], 1432
    %v1501 = vld [vmem:[%s1500] sm:$0xf]
    %s1502 = scalar_lea.vmem %s1, 716
    %1503 = vst [vmem:[%s1502] sm:$0xf] %v1501
    %s1504 = scalar_lea.vmem [#allocation0], 1440
    %v1505 = vld [vmem:[%s1504] sm:$0xf]
    %s1506 = scalar_lea.vmem %s1, 720
    %1507 = vst [vmem:[%s1506] sm:$0xf] %v1505
    %s1508 = scalar_lea.vmem [#allocation0], 1448
    %v1509 = vld [vmem:[%s1508] sm:$0xf]
    %s1510 = scalar_lea.vmem %s1, 728
    %1511 = vst [vmem:[%s1510] sm:$0xf] %v1509
    %s1512 = scalar_lea.vmem [#allocation0], 1456
    %v1513 = vld [vmem:[%s1512] sm:$0xf]
    %s1514 = scalar_lea.vmem %s1, 724
    %1515 = vst [vmem:[%s1514] sm:$0xf] %v1513
    %s1516 = scalar_lea.vmem [#allocation0], 1464
    %v1517 = vld [vmem:[%s1516] sm:$0xf]
    %s1518 = scalar_lea.vmem %s1, 732
    %1519 = vst [vmem:[%s1518] sm:$0xf] %v1517
    %s1520 = scalar_lea.vmem [#allocation0], 1472
    %v1521 = vld [vmem:[%s1520] sm:$0xf]
    %s1522 = scalar_lea.vmem %s1, 736
    %1523 = vst [vmem:[%s1522] sm:$0xf] %v1521
    %s1524 = scalar_lea.vmem [#allocation0], 1480
    %v1525 = vld [vmem:[%s1524] sm:$0xf]
    %s1526 = scalar_lea.vmem %s1, 744
    %1527 = vst [vmem:[%s1526] sm:$0xf] %v1525
    %s1528 = scalar_lea.vmem [#allocation0], 1488
    %v1529 = vld [vmem:[%s1528] sm:$0xf]
    %s1530 = scalar_lea.vmem %s1, 740
    %1531 = vst [vmem:[%s1530] sm:$0xf] %v1529
    %s1532 = scalar_lea.vmem [#allocation0], 1496
    %v1533 = vld [vmem:[%s1532] sm:$0xf]
    %s1534 = scalar_lea.vmem %s1, 748
    %1535 = vst [vmem:[%s1534] sm:$0xf] %v1533
    %s1536 = scalar_lea.vmem [#allocation0], 1504
    %v1537 = vld [vmem:[%s1536] sm:$0xf]
    %s1538 = scalar_lea.vmem %s1, 752
    %1539 = vst [vmem:[%s1538] sm:$0xf] %v1537
    %s1540 = scalar_lea.vmem [#allocation0], 1512
    %v1541 = vld [vmem:[%s1540] sm:$0xf]
    %s1542 = scalar_lea.vmem %s1, 760
    %1543 = vst [vmem:[%s1542] sm:$0xf] %v1541
    %s1544 = scalar_lea.vmem [#allocation0], 1520
    %v1545 = vld [vmem:[%s1544] sm:$0xf]
    %s1546 = scalar_lea.vmem %s1, 756
    %1547 = vst [vmem:[%s1546] sm:$0xf] %v1545
    %s1548 = scalar_lea.vmem [#allocation0], 1528
    %v1549 = vld [vmem:[%s1548] sm:$0xf]
    %s1550 = scalar_lea.vmem %s1, 764
    %1551 = vst [vmem:[%s1550] sm:$0xf] %v1549
    %s1552 = scalar_lea.vmem [#allocation0], 1536
    %v1553 = vld [vmem:[%s1552] sm:$0xf]
    %s1554 = scalar_lea.vmem %s1, 768
    %1555 = vst [vmem:[%s1554] sm:$0xf] %v1553
    %s1556 = scalar_lea.vmem [#allocation0], 1544
    %v1557 = vld [vmem:[%s1556] sm:$0xf]
    %s1558 = scalar_lea.vmem %s1, 776
    %1559 = vst [vmem:[%s1558] sm:$0xf] %v1557
    %s1560 = scalar_lea.vmem [#allocation0], 1552
    %v1561 = vld [vmem:[%s1560] sm:$0xf]
    %s1562 = scalar_lea.vmem %s1, 772
    %1563 = vst [vmem:[%s1562] sm:$0xf] %v1561
    %s1564 = scalar_lea.vmem [#allocation0], 1560
    %v1565 = vld [vmem:[%s1564] sm:$0xf]
    %s1566 = scalar_lea.vmem %s1, 780
    %1567 = vst [vmem:[%s1566] sm:$0xf] %v1565

// kernel: _encoder_block_forward.1
$region0: #{_encoder_block_forward.1}
  #allocation0 [shape = 'u32[]', space=smem, size = 0x4, offset = 0x4, fixed_abs, tag = 'smem constant byte address 0x4 - core index']
  #allocation1 [shape = 'u32[72,128]{1,0:T(1,128)}', space=vmem, size = 0x9000, scoped, tag = 'internal scratch']
  %s0 = inlined_call_operand.vmem [shape: f32[1,8,256], index: 0, kind: input, shape index: {}]
  %s1 = inlined_call_operand.vmem [shape: f32[49,8,256], index: 1, kind: input, shape index: {}]
  %s2 = inlined_call_operand.vmem [shape: f32[8,1], index: 2, kind: input, shape index: {}]
  %s3 = inlined_call_operand.vmem [shape: f32[8,8], index: 3, kind: input, shape index: {}]
  %s4 = inlined_call_operand.vmem [shape: f32[8,1], index: 4, kind: input, shape index: {}]
  %s5 = inlined_call_operand.vmem [shape: f32[8,1], index: 5, kind: input, shape index: {}]
  %s6 = inlined_call_operand.vmem [shape: f32[32,8], index: 6, kind: input, shape index: {}]
  %s7 = inlined_call_operand.vmem [shape: f32[32,1], index: 7, kind: input, shape index: {}]
  %s8 = inlined_call_operand.vmem [shape: f32[8,32], index: 8, kind: input, shape index: {}]
  %s9 = inlined_call_operand.vmem [shape: f32[8,1], index: 9, kind: input, shape index: {}]
  %s10 = inlined_call_operand.vmem [shape: f32[1,8,256], index: 10, kind: output, shape index: {}]
  %s11 = sld [smem:[#allocation0]]
  $region50: #{_encoder_block_forward.1} parent=0
    _
  %s13 = ssub.s32 1, %s11
  %s14 = scalar_select 0, %s13, %s11
  // Predicated region
  $region2: #{_encoder_block_forward.1} parent=0 // pred_check
    _
  $region3: #{_encoder_block_forward.1} parent=0 // pred_check_branch
    %16 = sbr.rel (0) target = $region5
  $region4: #{_encoder_block_forward.1} parent=0 // pred_region
    _
  $region5: #{_encoder_block_forward.1} parent=0 // pred_fallthru
    _
  // Predicated region
  $region6: #{_encoder_block_forward.1} parent=0 // pred_check
    _
  $region7: #{_encoder_block_forward.1} parent=0 // pred_check_branch
    %18 = sbr.rel (0) target = $region9
  $region8: #{_encoder_block_forward.1} parent=0 // pred_region
    _
  $region9: #{_encoder_block_forward.1} parent=0 // pred_fallthru
    _
  // Predicated region
  $region10: #{_encoder_block_forward.1} parent=0 // pred_check
    _
  $region11: #{_encoder_block_forward.1} parent=0 // pred_check_branch
    %20 = sbr.rel (0) target = $region13
  $region12: #{_encoder_block_forward.1} parent=0 // pred_region
    _
  $region13: #{_encoder_block_forward.1} parent=0 // pred_fallthru
    _
  // Predicated region
  $region14: #{_encoder_block_forward.1} parent=0 // pred_check
    _
  $region15: #{_encoder_block_forward.1} parent=0 // pred_check_branch
    %22 = sbr.rel (0) target = $region17
  $region16: #{_encoder_block_forward.1} parent=0 // pred_region
    _
  $region17: #{_encoder_block_forward.1} parent=0 // pred_fallthru
    _
  // Predicated region
  $region18: #{_encoder_block_forward.1} parent=0 // pred_check
    _
  $region19: #{_encoder_block_forward.1} parent=0 // pred_check_branch
    %24 = sbr.rel (0) target = $region21
  $region20: #{_encoder_block_forward.1} parent=0 // pred_region
    _
  $region21: #{_encoder_block_forward.1} parent=0 // pred_fallthru
    _
  // Predicated region
  $region22: #{_encoder_block_forward.1} parent=0 // pred_check
    _
  $region23: #{_encoder_block_forward.1} parent=0 // pred_check_branch
    %26 = sbr.rel (0) target = $region25
  $region24: #{_encoder_block_forward.1} parent=0 // pred_region
    _
  $region25: #{_encoder_block_forward.1} parent=0 // pred_fallthru
    _
  // Predicated region
  $region26: #{_encoder_block_forward.1} parent=0 // pred_check
    _
  $region27: #{_encoder_block_forward.1} parent=0 // pred_check_branch
    %28 = sbr.rel (0) target = $region29
  $region28: #{_encoder_block_forward.1} parent=0 // pred_region
    _
  $region29: #{_encoder_block_forward.1} parent=0 // pred_fallthru
    _
  // Predicated region
  $region30: #{_encoder_block_forward.1} parent=0 // pred_check
    _
  $region31: #{_encoder_block_forward.1} parent=0 // pred_check_branch
    %30 = sbr.rel (0) target = $region33
  $region32: #{_encoder_block_forward.1} parent=0 // pred_region
    _
  $region33: #{_encoder_block_forward.1} parent=0 // pred_fallthru
    _
  // Predicated region
  $region34: #{_encoder_block_forward.1} parent=0 // pred_check
    _
  $region35: #{_encoder_block_forward.1} parent=0 // pred_check_branch
    %32 = sbr.rel (0) target = $region37
  $region36: #{_encoder_block_forward.1} parent=0 // pred_region
    _
  $region37: #{_encoder_block_forward.1} parent=0 // pred_fallthru
    _
  // Predicated region
  $region38: #{_encoder_block_forward.1} parent=0 // pred_check
    _
  $region39: #{_encoder_block_forward.1} parent=0 // pred_check_branch
    %34 = sbr.rel (0) target = $region41
  $region40: #{_encoder_block_forward.1} parent=0 // pred_region
    _
  $region41: #{_encoder_block_forward.1} parent=0 // pred_fallthru
    _
  %v35 = vld [vmem:[%s0] sm:$0xff]
  %v36 = vld [vmem:[%s0 + $0x8] sm:$0xff]
  %37 = vrot.lane.b32.xlu0 %v35, 51
  %v38 = vpop.permute.xlu0 %37
  %39 = vrot.lane.b32.xlu0 %v36, 51
  %v40 = vpop.permute.xlu0 %39
  %v41 = vlaneseq
  %v42 = vand.u32 %v41, 127
  %vm43 = vcmp.lt.s32.totalorder %v42, 51
  %v44 = vsel %vm43, %v38, %v40
  %v45 = vsel %vm43, %v40, %v38
  %v46 = vld [vmem:[%s1] sm:$0xff]
  %v47 = vld [vmem:[%s1 + $0x8] sm:$0xff]
  %v48 = vmul.f32 %v45, %v46
  %v49 = vmul.f32 %v44, %v47
  %v50 = vadd.f32 %v48, 0.0
  %v51 = vadd.f32 %v49, 0.0
  %52 = vrot.lane.b32.xlu0 %v35, 50
  %v53 = vpop.permute.xlu0 %52
  %54 = vrot.lane.b32.xlu0 %v36, 50
  %v55 = vpop.permute.xlu0 %54
  %vm56 = vcmp.lt.s32.totalorder %v42, 50
  %v57 = vsel %vm56, %v53, %v55
  %v58 = vsel %vm56, %v55, %v53
  %s59 = scalar_lea.vmem %s1, 16
  %v60 = vld [vmem:[%s59] sm:$0xff]
  %v61 = vld [vmem:[%s59 + $0x8] sm:$0xff]
  %v62 = vmul.f32 %v58, %v60
  %v63 = vmul.f32 %v57, %v61
  %v64 = vadd.f32 %v62, 0.0
  %v65 = vadd.f32 %v63, 0.0
  %66 = vrot.lane.b32.xlu0 %v35, 49
  %v67 = vpop.permute.xlu0 %66
  %68 = vrot.lane.b32.xlu0 %v36, 49
  %v69 = vpop.permute.xlu0 %68
  %vm70 = vcmp.lt.s32.totalorder %v42, 49
  %v71 = vsel %vm70, %v67, %v69
  %v72 = vsel %vm70, %v69, %v67
  %s73 = scalar_lea.vmem %s1, 32
  %v74 = vld [vmem:[%s73] sm:$0xff]
  %v75 = vld [vmem:[%s73 + $0x8] sm:$0xff]
  %v76 = vmul.f32 %v72, %v74
  %v77 = vmul.f32 %v71, %v75
  %v78 = vadd.f32 %v76, 0.0
  %v79 = vadd.f32 %v77, 0.0
  %80 = vrot.lane.b32.xlu0 %v35, 48
  %v81 = vpop.permute.xlu0 %80
  %82 = vrot.lane.b32.xlu0 %v36, 48
  %v83 = vpop.permute.xlu0 %82
  %vm84 = vcmp.lt.s32.totalorder %v42, 48
  %v85 = vsel %vm84, %v81, %v83
  %v86 = vsel %vm84, %v83, %v81
  %s87 = scalar_lea.vmem %s1, 48
  %v88 = vld [vmem:[%s87] sm:$0xff]
  %v89 = vld [vmem:[%s87 + $0x8] sm:$0xff]
  %v90 = vmul.f32 %v86, %v88
  %v91 = vmul.f32 %v85, %v89
  %v92 = vadd.f32 %v90, 0.0
  %v93 = vadd.f32 %v91, 0.0
  %94 = vrot.lane.b32.xlu0 %v35, 47
  %v95 = vpop.permute.xlu0 %94
  %96 = vrot.lane.b32.xlu0 %v36, 47
  %v97 = vpop.permute.xlu0 %96
  %vm98 = vcmp.lt.s32.totalorder %v42, 47
  %v99 = vsel %vm98, %v95, %v97
  %v100 = vsel %vm98, %v97, %v95
  %s101 = scalar_lea.vmem %s1, 64
  %v102 = vld [vmem:[%s101] sm:$0xff]
  %v103 = vld [vmem:[%s101 + $0x8] sm:$0xff]
  %v104 = vmul.f32 %v100, %v102
  %v105 = vmul.f32 %v99, %v103
  %v106 = vadd.f32 %v50, %v104
  %v107 = vadd.f32 %v51, %v105
  %108 = vrot.lane.b32.xlu0 %v35, 46
  %v109 = vpop.permute.xlu0 %108
  %110 = vrot.lane.b32.xlu0 %v36, 46
  %v111 = vpop.permute.xlu0 %110
  %vm112 = vcmp.lt.s32.totalorder %v42, 46
  %v113 = vsel %vm112, %v109, %v111
  %v114 = vsel %vm112, %v111, %v109
  %s115 = scalar_lea.vmem %s1, 80
  %v116 = vld [vmem:[%s115] sm:$0xff]
  %v117 = vld [vmem:[%s115 + $0x8] sm:$0xff]
  %v118 = vmul.f32 %v114, %v116
  %v119 = vmul.f32 %v113, %v117
  %v120 = vadd.f32 %v64, %v118
  %v121 = vadd.f32 %v65, %v119
  %122 = vrot.lane.b32.xlu0 %v35, 45
  %v123 = vpop.permute.xlu0 %122
  %124 = vrot.lane.b32.xlu0 %v36, 45
  %v125 = vpop.permute.xlu0 %124
  %vm126 = vcmp.lt.s32.totalorder %v42, 45
  %v127 = vsel %vm126, %v123, %v125
  %v128 = vsel %vm126, %v125, %v123
  %s129 = scalar_lea.vmem %s1, 96
  %v130 = vld [vmem:[%s129] sm:$0xff]
  %v131 = vld [vmem:[%s129 + $0x8] sm:$0xff]
  %v132 = vmul.f32 %v128, %v130
  %v133 = vmul.f32 %v127, %v131
  %v134 = vadd.f32 %v78, %v132
  %v135 = vadd.f32 %v79, %v133
  %136 = vrot.lane.b32.xlu0 %v35, 35
  %v137 = vpop.permute.xlu0 %136
  %138 = vrot.lane.b32.xlu0 %v36, 35
  %v139 = vpop.permute.xlu0 %138
  %vm140 = vcmp.lt.s32.totalorder %v42, 35
  %v141 = vsel %vm140, %v137, %v139
  %v142 = vsel %vm140, %v139, %v137
  %s143 = scalar_lea.vmem %s1, 112
  %v144 = vld [vmem:[%s143] sm:$0xff]
  %v145 = vld [vmem:[%s143 + $0x8] sm:$0xff]
  %v146 = vmul.f32 %v142, %v144
  %v147 = vmul.f32 %v141, %v145
  %v148 = vadd.f32 %v92, %v146
  %v149 = vadd.f32 %v93, %v147
  %150 = vrot.lane.b32.xlu0 %v35, 34
  %v151 = vpop.permute.xlu0 %150
  %152 = vrot.lane.b32.xlu0 %v36, 34
  %v153 = vpop.permute.xlu0 %152
  %vm154 = vcmp.lt.s32.totalorder %v42, 34
  %v155 = vsel %vm154, %v151, %v153
  %v156 = vsel %vm154, %v153, %v151
  %s157 = scalar_lea.vmem %s1, 128
  %v158 = vld [vmem:[%s157] sm:$0xff]
  %v159 = vld [vmem:[%s157 + $0x8] sm:$0xff]
  %v160 = vmul.f32 %v156, %v158
  %v161 = vmul.f32 %v155, %v159
  %v162 = vadd.f32 %v106, %v160
  %v163 = vadd.f32 %v107, %v161
  %164 = vrot.lane.b32.xlu0 %v35, 33
  %v165 = vpop.permute.xlu0 %164
  %166 = vrot.lane.b32.xlu0 %v36, 33
  %v167 = vpop.permute.xlu0 %166
  %vm168 = vcmp.lt.s32.totalorder %v42, 33
  %v169 = vsel %vm168, %v165, %v167
  %v170 = vsel %vm168, %v167, %v165
  %s171 = scalar_lea.vmem %s1, 144
  %v172 = vld [vmem:[%s171] sm:$0xff]
  %v173 = vld [vmem:[%s171 + $0x8] sm:$0xff]
  %v174 = vmul.f32 %v170, %v172
  %v175 = vmul.f32 %v169, %v173
  %v176 = vadd.f32 %v120, %v174
  %v177 = vadd.f32 %v121, %v175
  %178 = vrot.lane.b32.xlu0 %v35, 32
  %v179 = vpop.permute.xlu0 %178
  %180 = vrot.lane.b32.xlu0 %v36, 32
  %v181 = vpop.permute.xlu0 %180
  %vm182 = vcmp.lt.s32.totalorder %v42, 32
  %v183 = vsel %vm182, %v179, %v181
  %v184 = vsel %vm182, %v181, %v179
  %s185 = scalar_lea.vmem %s1, 160
  %v186 = vld [vmem:[%s185] sm:$0xff]
  %v187 = vld [vmem:[%s185 + $0x8] sm:$0xff]
  %v188 = vmul.f32 %v184, %v186
  %v189 = vmul.f32 %v183, %v187
  %v190 = vadd.f32 %v134, %v188
  %v191 = vadd.f32 %v135, %v189
  %192 = vrot.lane.b32.xlu0 %v35, 31
  %v193 = vpop.permute.xlu0 %192
  %194 = vrot.lane.b32.xlu0 %v36, 31
  %v195 = vpop.permute.xlu0 %194
  %vm196 = vcmp.lt.s32.totalorder %v42, 31
  %v197 = vsel %vm196, %v193, %v195
  %v198 = vsel %vm196, %v195, %v193
  %s199 = scalar_lea.vmem %s1, 176
  %v200 = vld [vmem:[%s199] sm:$0xff]
  %v201 = vld [vmem:[%s199 + $0x8] sm:$0xff]
  %v202 = vmul.f32 %v198, %v200
  %v203 = vmul.f32 %v197, %v201
  %v204 = vadd.f32 %v148, %v202
  %v205 = vadd.f32 %v149, %v203
  %206 = vrot.lane.b32.xlu0 %v35, 30
  %v207 = vpop.permute.xlu0 %206
  %208 = vrot.lane.b32.xlu0 %v36, 30
  %v209 = vpop.permute.xlu0 %208
  %vm210 = vcmp.lt.s32.totalorder %v42, 30
  %v211 = vsel %vm210, %v207, %v209
  %v212 = vsel %vm210, %v209, %v207
  %s213 = scalar_lea.vmem %s1, 192
  %v214 = vld [vmem:[%s213] sm:$0xff]
  %v215 = vld [vmem:[%s213 + $0x8] sm:$0xff]
  %v216 = vmul.f32 %v212, %v214
  %v217 = vmul.f32 %v211, %v215
  %v218 = vadd.f32 %v162, %v216
  %v219 = vadd.f32 %v163, %v217
  %220 = vrot.lane.b32.xlu0 %v35, 29
  %v221 = vpop.permute.xlu0 %220
  %222 = vrot.lane.b32.xlu0 %v36, 29
  %v223 = vpop.permute.xlu0 %222
  %vm224 = vcmp.lt.s32.totalorder %v42, 29
  %v225 = vsel %vm224, %v221, %v223
  %v226 = vsel %vm224, %v223, %v221
  %s227 = scalar_lea.vmem %s1, 208
  %v228 = vld [vmem:[%s227] sm:$0xff]
  %v229 = vld [vmem:[%s227 + $0x8] sm:$0xff]
  %v230 = vmul.f32 %v226, %v228
  %v231 = vmul.f32 %v225, %v229
  %v232 = vadd.f32 %v176, %v230
  %v233 = vadd.f32 %v177, %v231
  %234 = vrot.lane.b32.xlu0 %v35, 19
  %v235 = vpop.permute.xlu0 %234
  %236 = vrot.lane.b32.xlu0 %v36, 19
  %v237 = vpop.permute.xlu0 %236
  %vm238 = vcmp.lt.s32.totalorder %v42, 19
  %v239 = vsel %vm238, %v235, %v237
  %v240 = vsel %vm238, %v237, %v235
  %s241 = scalar_lea.vmem %s1, 224
  %v242 = vld [vmem:[%s241] sm:$0xff]
  %v243 = vld [vmem:[%s241 + $0x8] sm:$0xff]
  %v244 = vmul.f32 %v240, %v242
  %v245 = vmul.f32 %v239, %v243
  %v246 = vadd.f32 %v190, %v244
  %v247 = vadd.f32 %v191, %v245
  %248 = vrot.lane.b32.xlu0 %v35, 18
  %v249 = vpop.permute.xlu0 %248
  %250 = vrot.lane.b32.xlu0 %v36, 18
  %v251 = vpop.permute.xlu0 %250
  %vm252 = vcmp.lt.s32.totalorder %v42, 18
  %v253 = vsel %vm252, %v249, %v251
  %v254 = vsel %vm252, %v251, %v249
  %s255 = scalar_lea.vmem %s1, 240
  %v256 = vld [vmem:[%s255] sm:$0xff]
  %v257 = vld [vmem:[%s255 + $0x8] sm:$0xff]
  %v258 = vmul.f32 %v254, %v256
  %v259 = vmul.f32 %v253, %v257
  %v260 = vadd.f32 %v204, %v258
  %v261 = vadd.f32 %v205, %v259
  %262 = vrot.lane.b32.xlu0 %v35, 17
  %v263 = vpop.permute.xlu0 %262
  %264 = vrot.lane.b32.xlu0 %v36, 17
  %v265 = vpop.permute.xlu0 %264
  %vm266 = vcmp.lt.s32.totalorder %v42, 17
  %v267 = vsel %vm266, %v263, %v265
  %v268 = vsel %vm266, %v265, %v263
  %s269 = scalar_lea.vmem %s1, 256
  %v270 = vld [vmem:[%s269] sm:$0xff]
  %v271 = vld [vmem:[%s269 + $0x8] sm:$0xff]
  %v272 = vmul.f32 %v268, %v270
  %v273 = vmul.f32 %v267, %v271
  %v274 = vadd.f32 %v218, %v272
  %v275 = vadd.f32 %v219, %v273
  %276 = vrot.lane.b32.xlu0 %v35, 16
  %v277 = vpop.permute.xlu0 %276
  %278 = vrot.lane.b32.xlu0 %v36, 16
  %v279 = vpop.permute.xlu0 %278
  %vm280 = vcmp.lt.s32.totalorder %v42, 16
  %v281 = vsel %vm280, %v277, %v279
  %v282 = vsel %vm280, %v279, %v277
  %s283 = scalar_lea.vmem %s1, 272
  %v284 = vld [vmem:[%s283] sm:$0xff]
  %v285 = vld [vmem:[%s283 + $0x8] sm:$0xff]
  %v286 = vmul.f32 %v282, %v284
  %v287 = vmul.f32 %v281, %v285
  %v288 = vadd.f32 %v232, %v286
  %v289 = vadd.f32 %v233, %v287
  %290 = vrot.lane.b32.xlu0 %v35, 15
  %v291 = vpop.permute.xlu0 %290
  %292 = vrot.lane.b32.xlu0 %v36, 15
  %v293 = vpop.permute.xlu0 %292
  %vm294 = vcmp.lt.s32.totalorder %v42, 15
  %v295 = vsel %vm294, %v291, %v293
  %v296 = vsel %vm294, %v293, %v291
  %s297 = scalar_lea.vmem %s1, 288
  %v298 = vld [vmem:[%s297] sm:$0xff]
  %v299 = vld [vmem:[%s297 + $0x8] sm:$0xff]
  %v300 = vmul.f32 %v296, %v298
  %v301 = vmul.f32 %v295, %v299
  %v302 = vadd.f32 %v246, %v300
  %v303 = vadd.f32 %v247, %v301
  %304 = vrot.lane.b32.xlu0 %v35, 14
  %v305 = vpop.permute.xlu0 %304
  %306 = vrot.lane.b32.xlu0 %v36, 14
  %v307 = vpop.permute.xlu0 %306
  %vm308 = vcmp.lt.s32.totalorder %v42, 14
  %v309 = vsel %vm308, %v305, %v307
  %v310 = vsel %vm308, %v307, %v305
  %s311 = scalar_lea.vmem %s1, 304
  %v312 = vld [vmem:[%s311] sm:$0xff]
  %v313 = vld [vmem:[%s311 + $0x8] sm:$0xff]
  %v314 = vmul.f32 %v310, %v312
  %v315 = vmul.f32 %v309, %v313
  %v316 = vadd.f32 %v260, %v314
  %v317 = vadd.f32 %v261, %v315
  %318 = vrot.lane.b32.xlu0 %v35, 13
  %v319 = vpop.permute.xlu0 %318
  %320 = vrot.lane.b32.xlu0 %v36, 13
  %v321 = vpop.permute.xlu0 %320
  %vm322 = vcmp.lt.s32.totalorder %v42, 13
  %v323 = vsel %vm322, %v319, %v321
  %v324 = vsel %vm322, %v321, %v319
  %s325 = scalar_lea.vmem %s1, 320
  %v326 = vld [vmem:[%s325] sm:$0xff]
  %v327 = vld [vmem:[%s325 + $0x8] sm:$0xff]
  %v328 = vmul.f32 %v324, %v326
  %v329 = vmul.f32 %v323, %v327
  %v330 = vadd.f32 %v274, %v328
  %v331 = vadd.f32 %v275, %v329
  %332 = vrot.lane.b32.xlu0 %v35, 3
  %v333 = vpop.permute.xlu0 %332
  %334 = vrot.lane.b32.xlu0 %v36, 3
  %v335 = vpop.permute.xlu0 %334
  %vm336 = vcmp.lt.s32.totalorder %v42, 3
  %v337 = vsel %vm336, %v333, %v335
  %v338 = vsel %vm336, %v335, %v333
  %s339 = scalar_lea.vmem %s1, 336
  %v340 = vld [vmem:[%s339] sm:$0xff]
  %v341 = vld [vmem:[%s339 + $0x8] sm:$0xff]
  %v342 = vmul.f32 %v338, %v340
  %v343 = vmul.f32 %v337, %v341
  %v344 = vadd.f32 %v288, %v342
  %v345 = vadd.f32 %v289, %v343
  %346 = vrot.lane.b32.xlu0 %v35, 2
  %v347 = vpop.permute.xlu0 %346
  %348 = vrot.lane.b32.xlu0 %v36, 2
  %v349 = vpop.permute.xlu0 %348
  %vm350 = vcmp.lt.s32.totalorder %v42, 2
  %v351 = vsel %vm350, %v347, %v349
  %v352 = vsel %vm350, %v349, %v347
  %s353 = scalar_lea.vmem %s1, 352
  %v354 = vld [vmem:[%s353] sm:$0xff]
  %v355 = vld [vmem:[%s353 + $0x8] sm:$0xff]
  %v356 = vmul.f32 %v352, %v354
  %v357 = vmul.f32 %v351, %v355
  %v358 = vadd.f32 %v302, %v356
  %v359 = vadd.f32 %v303, %v357
  %360 = vrot.lane.b32.xlu0 %v35, 1
  %v361 = vpop.permute.xlu0 %360
  %362 = vrot.lane.b32.xlu0 %v36, 1
  %v363 = vpop.permute.xlu0 %362
  %vm364 = vcmp.lt.s32.totalorder %v42, 1
  %v365 = vsel %vm364, %v361, %v363
  %v366 = vsel %vm364, %v363, %v361
  %s367 = scalar_lea.vmem %s1, 368
  %v368 = vld [vmem:[%s367] sm:$0xff]
  %v369 = vld [vmem:[%s367 + $0x8] sm:$0xff]
  %v370 = vmul.f32 %v366, %v368
  %v371 = vmul.f32 %v365, %v369
  %v372 = vadd.f32 %v316, %v370
  %v373 = vadd.f32 %v317, %v371
  %s374 = scalar_lea.vmem %s1, 384
  %v375 = vld [vmem:[%s374] sm:$0xff]
  %v376 = vld [vmem:[%s374 + $0x8] sm:$0xff]
  %v377 = vmul.f32 %v35, %v375
  %v378 = vmul.f32 %v36, %v376
  %v379 = vadd.f32 %v330, %v377
  %v380 = vadd.f32 %v331, %v378
  %381 = vrot.lane.b32.xlu0 %v35, 127
  %v382 = vpop.permute.xlu0 %381
  %383 = vrot.lane.b32.xlu0 %v36, 127
  %v384 = vpop.permute.xlu0 %383
  %vm385 = vcmp.lt.s32.totalorder %v42, 127
  %v386 = vsel %vm385, %v382, %v384
  %v387 = vsel %vm385, %v384, %v382
  %s388 = scalar_lea.vmem %s1, 400
  %v389 = vld [vmem:[%s388] sm:$0xff]
  %v390 = vld [vmem:[%s388 + $0x8] sm:$0xff]
  %v391 = vmul.f32 %v386, %v389
  %v392 = vmul.f32 %v387, %v390
  %v393 = vadd.f32 %v344, %v391
  %v394 = vadd.f32 %v345, %v392
  %395 = vrot.lane.b32.xlu0 %v35, 126
  %v396 = vpop.permute.xlu0 %395
  %397 = vrot.lane.b32.xlu0 %v36, 126
  %v398 = vpop.permute.xlu0 %397
  %vm399 = vcmp.lt.s32.totalorder %v42, 126
  %v400 = vsel %vm399, %v396, %v398
  %v401 = vsel %vm399, %v398, %v396
  %s402 = scalar_lea.vmem %s1, 416
  %v403 = vld [vmem:[%s402] sm:$0xff]
  %v404 = vld [vmem:[%s402 + $0x8] sm:$0xff]
  %v405 = vmul.f32 %v400, %v403
  %v406 = vmul.f32 %v401, %v404
  %v407 = vadd.f32 %v358, %v405
  %v408 = vadd.f32 %v359, %v406
  %409 = vrot.lane.b32.xlu0 %v35, 125
  %v410 = vpop.permute.xlu0 %409
  %411 = vrot.lane.b32.xlu0 %v36, 125
  %v412 = vpop.permute.xlu0 %411
  %vm413 = vcmp.lt.s32.totalorder %v42, 125
  %v414 = vsel %vm413, %v410, %v412
  %v415 = vsel %vm413, %v412, %v410
  %s416 = scalar_lea.vmem %s1, 432
  %v417 = vld [vmem:[%s416] sm:$0xff]
  %v418 = vld [vmem:[%s416 + $0x8] sm:$0xff]
  %v419 = vmul.f32 %v414, %v417
  %v420 = vmul.f32 %v415, %v418
  %v421 = vadd.f32 %v372, %v419
  %v422 = vadd.f32 %v373, %v420
  %423 = vrot.lane.b32.xlu0 %v35, 115
  %v424 = vpop.permute.xlu0 %423
  %425 = vrot.lane.b32.xlu0 %v36, 115
  %v426 = vpop.permute.xlu0 %425
  %vm427 = vcmp.lt.s32.totalorder %v42, 115
  %v428 = vsel %vm427, %v424, %v426
  %v429 = vsel %vm427, %v426, %v424
  %s430 = scalar_lea.vmem %s1, 448
  %v431 = vld [vmem:[%s430] sm:$0xff]
  %v432 = vld [vmem:[%s430 + $0x8] sm:$0xff]
  %v433 = vmul.f32 %v428, %v431
  %v434 = vmul.f32 %v429, %v432
  %v435 = vadd.f32 %v379, %v433
  %v436 = vadd.f32 %v380, %v434
  %437 = vrot.lane.b32.xlu0 %v35, 114
  %v438 = vpop.permute.xlu0 %437
  %439 = vrot.lane.b32.xlu0 %v36, 114
  %v440 = vpop.permute.xlu0 %439
  %vm441 = vcmp.lt.s32.totalorder %v42, 114
  %v442 = vsel %vm441, %v438, %v440
  %v443 = vsel %vm441, %v440, %v438
  %s444 = scalar_lea.vmem %s1, 464
  %v445 = vld [vmem:[%s444] sm:$0xff]
  %v446 = vld [vmem:[%s444 + $0x8] sm:$0xff]
  %v447 = vmul.f32 %v442, %v445
  %v448 = vmul.f32 %v443, %v446
  %v449 = vadd.f32 %v393, %v447
  %v450 = vadd.f32 %v394, %v448
  %451 = vrot.lane.b32.xlu0 %v35, 113
  %v452 = vpop.permute.xlu0 %451
  %453 = vrot.lane.b32.xlu0 %v36, 113
  %v454 = vpop.permute.xlu0 %453
  %vm455 = vcmp.lt.s32.totalorder %v42, 113
  %v456 = vsel %vm455, %v452, %v454
  %v457 = vsel %vm455, %v454, %v452
  %s458 = scalar_lea.vmem %s1, 480
  %v459 = vld [vmem:[%s458] sm:$0xff]
  %v460 = vld [vmem:[%s458 + $0x8] sm:$0xff]
  %v461 = vmul.f32 %v456, %v459
  %v462 = vmul.f32 %v457, %v460
  %v463 = vadd.f32 %v407, %v461
  %v464 = vadd.f32 %v408, %v462
  %465 = vrot.lane.b32.xlu0 %v35, 112
  %v466 = vpop.permute.xlu0 %465
  %467 = vrot.lane.b32.xlu0 %v36, 112
  %v468 = vpop.permute.xlu0 %467
  %vm469 = vcmp.lt.s32.totalorder %v42, 112
  %v470 = vsel %vm469, %v466, %v468
  %v471 = vsel %vm469, %v468, %v466
  %s472 = scalar_lea.vmem %s1, 496
  %v473 = vld [vmem:[%s472] sm:$0xff]
  %v474 = vld [vmem:[%s472 + $0x8] sm:$0xff]
  %v475 = vmul.f32 %v470, %v473
  %v476 = vmul.f32 %v471, %v474
  %v477 = vadd.f32 %v421, %v475
  %v478 = vadd.f32 %v422, %v476
  %479 = vrot.lane.b32.xlu0 %v35, 111
  %v480 = vpop.permute.xlu0 %479
  %481 = vrot.lane.b32.xlu0 %v36, 111
  %v482 = vpop.permute.xlu0 %481
  %vm483 = vcmp.lt.s32.totalorder %v42, 111
  %v484 = vsel %vm483, %v480, %v482
  %v485 = vsel %vm483, %v482, %v480
  %s486 = scalar_lea.vmem %s1, 512
  %v487 = vld [vmem:[%s486] sm:$0xff]
  %v488 = vld [vmem:[%s486 + $0x8] sm:$0xff]
  %v489 = vmul.f32 %v484, %v487
  %v490 = vmul.f32 %v485, %v488
  %v491 = vadd.f32 %v435, %v489
  %v492 = vadd.f32 %v436, %v490
  %493 = vrot.lane.b32.xlu0 %v35, 110
  %v494 = vpop.permute.xlu0 %493
  %495 = vrot.lane.b32.xlu0 %v36, 110
  %v496 = vpop.permute.xlu0 %495
  %vm497 = vcmp.lt.s32.totalorder %v42, 110
  %v498 = vsel %vm497, %v494, %v496
  %v499 = vsel %vm497, %v496, %v494
  %s500 = scalar_lea.vmem %s1, 528
  %v501 = vld [vmem:[%s500] sm:$0xff]
  %v502 = vld [vmem:[%s500 + $0x8] sm:$0xff]
  %v503 = vmul.f32 %v498, %v501
  %v504 = vmul.f32 %v499, %v502
  %v505 = vadd.f32 %v449, %v503
  %v506 = vadd.f32 %v450, %v504
  %507 = vrot.lane.b32.xlu0 %v35, 109
  %v508 = vpop.permute.xlu0 %507
  %509 = vrot.lane.b32.xlu0 %v36, 109
  %v510 = vpop.permute.xlu0 %509
  %vm511 = vcmp.lt.s32.totalorder %v42, 109
  %v512 = vsel %vm511, %v508, %v510
  %v513 = vsel %vm511, %v510, %v508
  %s514 = scalar_lea.vmem %s1, 544
  %v515 = vld [vmem:[%s514] sm:$0xff]
  %v516 = vld [vmem:[%s514 + $0x8] sm:$0xff]
  %v517 = vmul.f32 %v512, %v515
  %v518 = vmul.f32 %v513, %v516
  %v519 = vadd.f32 %v463, %v517
  %v520 = vadd.f32 %v464, %v518
  %521 = vrot.lane.b32.xlu0 %v35, 99
  %v522 = vpop.permute.xlu0 %521
  %523 = vrot.lane.b32.xlu0 %v36, 99
  %v524 = vpop.permute.xlu0 %523
  %vm525 = vcmp.lt.s32.totalorder %v42, 99
  %v526 = vsel %vm525, %v522, %v524
  %v527 = vsel %vm525, %v524, %v522
  %s528 = scalar_lea.vmem %s1, 560
  %v529 = vld [vmem:[%s528] sm:$0xff]
  %v530 = vld [vmem:[%s528 + $0x8] sm:$0xff]
  %v531 = vmul.f32 %v526, %v529
  %v532 = vmul.f32 %v527, %v530
  %v533 = vadd.f32 %v477, %v531
  %v534 = vadd.f32 %v478, %v532
  %535 = vrot.lane.b32.xlu0 %v35, 98
  %v536 = vpop.permute.xlu0 %535
  %537 = vrot.lane.b32.xlu0 %v36, 98
  %v538 = vpop.permute.xlu0 %537
  %vm539 = vcmp.lt.s32.totalorder %v42, 98
  %v540 = vsel %vm539, %v536, %v538
  %v541 = vsel %vm539, %v538, %v536
  %s542 = scalar_lea.vmem %s1, 576
  %v543 = vld [vmem:[%s542] sm:$0xff]
  %v544 = vld [vmem:[%s542 + $0x8] sm:$0xff]
  %v545 = vmul.f32 %v540, %v543
  %v546 = vmul.f32 %v541, %v544
  %v547 = vadd.f32 %v491, %v545
  %v548 = vadd.f32 %v492, %v546
  %549 = vrot.lane.b32.xlu0 %v35, 97
  %v550 = vpop.permute.xlu0 %549
  %551 = vrot.lane.b32.xlu0 %v36, 97
  %v552 = vpop.permute.xlu0 %551
  %vm553 = vcmp.lt.s32.totalorder %v42, 97
  %v554 = vsel %vm553, %v550, %v552
  %v555 = vsel %vm553, %v552, %v550
  %s556 = scalar_lea.vmem %s1, 592
  %v557 = vld [vmem:[%s556] sm:$0xff]
  %v558 = vld [vmem:[%s556 + $0x8] sm:$0xff]
  %v559 = vmul.f32 %v554, %v557
  %v560 = vmul.f32 %v555, %v558
  %v561 = vadd.f32 %v505, %v559
  %v562 = vadd.f32 %v506, %v560
  %563 = vrot.lane.b32.xlu0 %v35, 96
  %v564 = vpop.permute.xlu0 %563
  %565 = vrot.lane.b32.xlu0 %v36, 96
  %v566 = vpop.permute.xlu0 %565
  %vm567 = vcmp.lt.s32.totalorder %v42, 96
  %v568 = vsel %vm567, %v564, %v566
  %v569 = vsel %vm567, %v566, %v564
  %s570 = scalar_lea.vmem %s1, 608
  %v571 = vld [vmem:[%s570] sm:$0xff]
  %v572 = vld [vmem:[%s570 + $0x8] sm:$0xff]
  %v573 = vmul.f32 %v568, %v571
  %v574 = vmul.f32 %v569, %v572
  %v575 = vadd.f32 %v519, %v573
  %v576 = vadd.f32 %v520, %v574
  %577 = vrot.lane.b32.xlu0 %v35, 95
  %v578 = vpop.permute.xlu0 %577
  %579 = vrot.lane.b32.xlu0 %v36, 95
  %v580 = vpop.permute.xlu0 %579
  %vm581 = vcmp.lt.s32.totalorder %v42, 95
  %v582 = vsel %vm581, %v578, %v580
  %v583 = vsel %vm581, %v580, %v578
  %s584 = scalar_lea.vmem %s1, 624
  %v585 = vld [vmem:[%s584] sm:$0xff]
  %v586 = vld [vmem:[%s584 + $0x8] sm:$0xff]
  %v587 = vmul.f32 %v582, %v585
  %v588 = vmul.f32 %v583, %v586
  %v589 = vadd.f32 %v533, %v587
  %v590 = vadd.f32 %v534, %v588
  %591 = vrot.lane.b32.xlu0 %v35, 94
  %v592 = vpop.permute.xlu0 %591
  %593 = vrot.lane.b32.xlu0 %v36, 94
  %v594 = vpop.permute.xlu0 %593
  %vm595 = vcmp.lt.s32.totalorder %v42, 94
  %v596 = vsel %vm595, %v592, %v594
  %v597 = vsel %vm595, %v594, %v592
  %s598 = scalar_lea.vmem %s1, 640
  %v599 = vld [vmem:[%s598] sm:$0xff]
  %v600 = vld [vmem:[%s598 + $0x8] sm:$0xff]
  %v601 = vmul.f32 %v596, %v599
  %v602 = vmul.f32 %v597, %v600
  %v603 = vadd.f32 %v547, %v601
  %v604 = vadd.f32 %v548, %v602
  %605 = vrot.lane.b32.xlu0 %v35, 93
  %v606 = vpop.permute.xlu0 %605
  %607 = vrot.lane.b32.xlu0 %v36, 93
  %v608 = vpop.permute.xlu0 %607
  %vm609 = vcmp.lt.s32.totalorder %v42, 93
  %v610 = vsel %vm609, %v606, %v608
  %v611 = vsel %vm609, %v608, %v606
  %s612 = scalar_lea.vmem %s1, 656
  %v613 = vld [vmem:[%s612] sm:$0xff]
  %v614 = vld [vmem:[%s612 + $0x8] sm:$0xff]
  %v615 = vmul.f32 %v610, %v613
  %v616 = vmul.f32 %v611, %v614
  %v617 = vadd.f32 %v561, %v615
  %v618 = vadd.f32 %v562, %v616
  %619 = vrot.lane.b32.xlu0 %v35, 83
  %v620 = vpop.permute.xlu0 %619
  %621 = vrot.lane.b32.xlu0 %v36, 83
  %v622 = vpop.permute.xlu0 %621
  %vm623 = vcmp.lt.s32.totalorder %v42, 83
  %v624 = vsel %vm623, %v620, %v622
  %v625 = vsel %vm623, %v622, %v620
  %s626 = scalar_lea.vmem %s1, 672
  %v627 = vld [vmem:[%s626] sm:$0xff]
  %v628 = vld [vmem:[%s626 + $0x8] sm:$0xff]
  %v629 = vmul.f32 %v624, %v627
  %v630 = vmul.f32 %v625, %v628
  %v631 = vadd.f32 %v575, %v629
  %v632 = vadd.f32 %v576, %v630
  %633 = vrot.lane.b32.xlu0 %v35, 82
  %v634 = vpop.permute.xlu0 %633
  %635 = vrot.lane.b32.xlu0 %v36, 82
  %v636 = vpop.permute.xlu0 %635
  %vm637 = vcmp.lt.s32.totalorder %v42, 82
  %v638 = vsel %vm637, %v634, %v636
  %v639 = vsel %vm637, %v636, %v634
  %s640 = scalar_lea.vmem %s1, 688
  %v641 = vld [vmem:[%s640] sm:$0xff]
  %v642 = vld [vmem:[%s640 + $0x8] sm:$0xff]
  %v643 = vmul.f32 %v638, %v641
  %v644 = vmul.f32 %v639, %v642
  %v645 = vadd.f32 %v589, %v643
  %v646 = vadd.f32 %v590, %v644
  %647 = vrot.lane.b32.xlu0 %v35, 81
  %v648 = vpop.permute.xlu0 %647
  %649 = vrot.lane.b32.xlu0 %v36, 81
  %v650 = vpop.permute.xlu0 %649
  %vm651 = vcmp.lt.s32.totalorder %v42, 81
  %v652 = vsel %vm651, %v648, %v650
  %v653 = vsel %vm651, %v650, %v648
  %s654 = scalar_lea.vmem %s1, 704
  %v655 = vld [vmem:[%s654] sm:$0xff]
  %v656 = vld [vmem:[%s654 + $0x8] sm:$0xff]
  %v657 = vmul.f32 %v652, %v655
  %v658 = vmul.f32 %v653, %v656
  %v659 = vadd.f32 %v603, %v657
  %v660 = vadd.f32 %v604, %v658
  %661 = vrot.lane.b32.xlu0 %v35, 80
  %v662 = vpop.permute.xlu0 %661
  %663 = vrot.lane.b32.xlu0 %v36, 80
  %v664 = vpop.permute.xlu0 %663
  %vm665 = vcmp.lt.s32.totalorder %v42, 80
  %v666 = vsel %vm665, %v662, %v664
  %v667 = vsel %vm665, %v664, %v662
  %s668 = scalar_lea.vmem %s1, 720
  %v669 = vld [vmem:[%s668] sm:$0xff]
  %v670 = vld [vmem:[%s668 + $0x8] sm:$0xff]
  %v671 = vmul.f32 %v666, %v669
  %v672 = vmul.f32 %v667, %v670
  %v673 = vadd.f32 %v617, %v671
  %v674 = vadd.f32 %v618, %v672
  %675 = vrot.lane.b32.xlu0 %v35, 79
  %v676 = vpop.permute.xlu0 %675
  %677 = vrot.lane.b32.xlu0 %v36, 79
  %v678 = vpop.permute.xlu0 %677
  %vm679 = vcmp.lt.s32.totalorder %v42, 79
  %v680 = vsel %vm679, %v676, %v678
  %v681 = vsel %vm679, %v678, %v676
  %s682 = scalar_lea.vmem %s1, 736
  %v683 = vld [vmem:[%s682] sm:$0xff]
  %v684 = vld [vmem:[%s682 + $0x8] sm:$0xff]
  %v685 = vmul.f32 %v680, %v683
  %v686 = vmul.f32 %v681, %v684
  %v687 = vadd.f32 %v631, %v685
  %v688 = vadd.f32 %v632, %v686
  %689 = vrot.lane.b32.xlu0 %v35, 78
  %v690 = vpop.permute.xlu0 %689
  %691 = vrot.lane.b32.xlu0 %v36, 78
  %v692 = vpop.permute.xlu0 %691
  %vm693 = vcmp.lt.s32.totalorder %v42, 78
  %v694 = vsel %vm693, %v690, %v692
  %v695 = vsel %vm693, %v692, %v690
  %s696 = scalar_lea.vmem %s1, 752
  %v697 = vld [vmem:[%s696] sm:$0xff]
  %v698 = vld [vmem:[%s696 + $0x8] sm:$0xff]
  %v699 = vmul.f32 %v694, %v697
  %v700 = vmul.f32 %v695, %v698
  %v701 = vadd.f32 %v645, %v699
  %v702 = vadd.f32 %v646, %v700
  %703 = vrot.lane.b32.xlu0 %v35, 77
  %v704 = vpop.permute.xlu0 %703
  %705 = vrot.lane.b32.xlu0 %v36, 77
  %v706 = vpop.permute.xlu0 %705
  %vm707 = vcmp.lt.s32.totalorder %v42, 77
  %v708 = vsel %vm707, %v704, %v706
  %v709 = vsel %vm707, %v706, %v704
  %s710 = scalar_lea.vmem %s1, 768
  %v711 = vld [vmem:[%s710] sm:$0xff]
  %v712 = vld [vmem:[%s710 + $0x8] sm:$0xff]
  %v713 = vmul.f32 %v708, %v711
  %v714 = vmul.f32 %v709, %v712
  %v715 = vadd.f32 %v659, %v713
  %v716 = vadd.f32 %v660, %v714
  %v717 = vadd.f32 %v715, %v673
  %v718 = vadd.f32 %v716, %v674
  %v719 = vadd.f32 %v687, %v701
  %v720 = vadd.f32 %v688, %v702
  %v721 = vadd.f32 %v717, %v719
  %v722 = vadd.f32 %v718, %v720
  %v723 = vld [vmem:[%s2] sm:$0xff]
  %725 = vset.pattern.permute.xlu0 0
  %726 = vperm.xlu0 %725, %v723
  %v727 = vpop.permute.xlu0 %726
  %v729 = vadd.f32 %v721, %v727
  %v730 = vadd.f32 %v722, %v727
  %v731 = vld [vmem:[%s3] sm:$0xff]
  %vm732 = vcmask 64512
  %v734 = vsel %vm732, %v731, 0
  %736 = vmatpush.msra.mxu0 0.0
  %737 = vmatpush.msra.mxu0 0.0
  %738 = vmatpush.msra.mxu0 0.0
  %739 = vmatpush.msra.mxu0 0.0
  %740 = vmatpush.msra.mxu0 0.0
  %741 = vmatpush.msra.mxu0 0.0
  %742 = vmatpush.msra.mxu0 0.0
  %743 = vmatpush.msra.mxu0 0.0
  %744 = vmatpush.msra.mxu0 0.0
  %745 = vmatpush.msra.mxu0 0.0
  %746 = vmatpush.msra.mxu0 0.0
  %747 = vmatpush.msra.mxu0 0.0
  %748 = vmatpush.msra.mxu0 0.0
  %749 = vmatpush.msra.mxu0 0.0
  %750 = vmatpush.msra.mxu0 0.0
  %v751 = vand.u32 %v729, 4294901760
  %752 = vmatpush.msra.mxu0 %v751
  %v753 = vand.u32 %v734, 4294901760
  %v754 = vsub.f32 %v734, %v753
  %v755 = vand.u32 %v754, 4294901760
  %v756 = vsub.f32 %v754, %v755
  %v757 = vand.u32 %v756, 4294901760
  %758 = vmatmul.f32.gmra.mxu0 %v757
  %v759 = vpop.f32.mrf.mxu0
  %v760 = vadd.f32 0.0, %v759
  %761 = vdwg.mxu0
  %762 = vmatpush.msra.mxu0 0.0
  %763 = vmatpush.msra.mxu0 0.0
  %764 = vmatpush.msra.mxu0 0.0
  %765 = vmatpush.msra.mxu0 0.0
  %766 = vmatpush.msra.mxu0 0.0
  %767 = vmatpush.msra.mxu0 0.0
  %768 = vmatpush.msra.mxu0 0.0
  %769 = vmatpush.msra.mxu0 0.0
  %770 = vmatpush.msra.mxu0 0.0
  %771 = vmatpush.msra.mxu0 0.0
  %772 = vmatpush.msra.mxu0 0.0
  %773 = vmatpush.msra.mxu0 0.0
  %774 = vmatpush.msra.mxu0 0.0
  %775 = vmatpush.msra.mxu0 0.0
  %776 = vmatpush.msra.mxu0 0.0
  %v777 = vand.u32 %v729, 4294901760
  %v778 = vsub.f32 %v729, %v777
  %v779 = vand.u32 %v778, 4294901760
  %v780 = vsub.f32 %v778, %v779
  %v781 = vand.u32 %v780, 4294901760
  %782 = vmatpush.msra.mxu0 %v781
  %v783 = vand.u32 %v734, 4294901760
  %784 = vmatmul.f32.gmra.mxu0 %v783
  %v785 = vpop.f32.mrf.mxu0
  %v786 = vadd.f32 %v760, %v785
  %787 = vdwg.mxu0
  %788 = vmatpush.msra.mxu0 0.0
  %789 = vmatpush.msra.mxu0 0.0
  %790 = vmatpush.msra.mxu0 0.0
  %791 = vmatpush.msra.mxu0 0.0
  %792 = vmatpush.msra.mxu0 0.0
  %793 = vmatpush.msra.mxu0 0.0
  %794 = vmatpush.msra.mxu0 0.0
  %795 = vmatpush.msra.mxu0 0.0
  %796 = vmatpush.msra.mxu0 0.0
  %797 = vmatpush.msra.mxu0 0.0
  %798 = vmatpush.msra.mxu0 0.0
  %799 = vmatpush.msra.mxu0 0.0
  %800 = vmatpush.msra.mxu0 0.0
  %801 = vmatpush.msra.mxu0 0.0
  %802 = vmatpush.msra.mxu0 0.0
  %v803 = vand.u32 %v729, 4294901760
  %v804 = vsub.f32 %v729, %v803
  %805 = vmatpush.msra.mxu0 %v804
  %v806 = vand.u32 %v734, 4294901760
  %v807 = vsub.f32 %v734, %v806
  %808 = vmatmul.f32.gmra.mxu0 %v807
  %v809 = vpop.f32.mrf.mxu0
  %v810 = vadd.f32 %v786, %v809
  %811 = vdwg.mxu0
  %812 = vmatpush.msra.mxu0 0.0
  %813 = vmatpush.msra.mxu0 0.0
  %814 = vmatpush.msra.mxu0 0.0
  %815 = vmatpush.msra.mxu0 0.0
  %816 = vmatpush.msra.mxu0 0.0
  %817 = vmatpush.msra.mxu0 0.0
  %818 = vmatpush.msra.mxu0 0.0
  %819 = vmatpush.msra.mxu0 0.0
  %820 = vmatpush.msra.mxu0 0.0
  %821 = vmatpush.msra.mxu0 0.0
  %822 = vmatpush.msra.mxu0 0.0
  %823 = vmatpush.msra.mxu0 0.0
  %824 = vmatpush.msra.mxu0 0.0
  %825 = vmatpush.msra.mxu0 0.0
  %826 = vmatpush.msra.mxu0 0.0
  %v827 = vand.u32 %v729, 4294901760
  %828 = vmatpush.msra.mxu0 %v827
  %v829 = vand.u32 %v734, 4294901760
  %v830 = vsub.f32 %v734, %v829
  %v831 = vand.u32 %v830, 4294901760
  %832 = vmatmul.f32.gmra.mxu0 %v831
  %v833 = vpop.f32.mrf.mxu0
  %v834 = vadd.f32 %v810, %v833
  %835 = vdwg.mxu0
  %836 = vmatpush.msra.mxu0 0.0
  %837 = vmatpush.msra.mxu0 0.0
  %838 = vmatpush.msra.mxu0 0.0
  %839 = vmatpush.msra.mxu0 0.0
  %840 = vmatpush.msra.mxu0 0.0
  %841 = vmatpush.msra.mxu0 0.0
  %842 = vmatpush.msra.mxu0 0.0
  %843 = vmatpush.msra.mxu0 0.0
  %844 = vmatpush.msra.mxu0 0.0
  %845 = vmatpush.msra.mxu0 0.0
  %846 = vmatpush.msra.mxu0 0.0
  %847 = vmatpush.msra.mxu0 0.0
  %848 = vmatpush.msra.mxu0 0.0
  %849 = vmatpush.msra.mxu0 0.0
  %850 = vmatpush.msra.mxu0 0.0
  %v851 = vand.u32 %v729, 4294901760
  %v852 = vsub.f32 %v729, %v851
  %v853 = vand.u32 %v852, 4294901760
  %854 = vmatpush.msra.mxu0 %v853
  %v855 = vand.u32 %v734, 4294901760
  %856 = vmatmul.f32.gmra.mxu0 %v855
  %v857 = vpop.f32.mrf.mxu0
  %v858 = vadd.f32 %v834, %v857
  %859 = vdwg.mxu0
  %860 = vmatpush.msra.mxu0 0.0
  %861 = vmatpush.msra.mxu0 0.0
  %862 = vmatpush.msra.mxu0 0.0
  %863 = vmatpush.msra.mxu0 0.0
  %864 = vmatpush.msra.mxu0 0.0
  %865 = vmatpush.msra.mxu0 0.0
  %866 = vmatpush.msra.mxu0 0.0
  %867 = vmatpush.msra.mxu0 0.0
  %868 = vmatpush.msra.mxu0 0.0
  %869 = vmatpush.msra.mxu0 0.0
  %870 = vmatpush.msra.mxu0 0.0
  %871 = vmatpush.msra.mxu0 0.0
  %872 = vmatpush.msra.mxu0 0.0
  %873 = vmatpush.msra.mxu0 0.0
  %874 = vmatpush.msra.mxu0 0.0
  %v875 = vand.u32 %v729, 4294901760
  %876 = vmatpush.msra.mxu0 %v875
  %v877 = vand.u32 %v734, 4294901760
  %878 = vmatmul.f32.gmra.mxu0 %v877
  %v879 = vpop.f32.mrf.mxu0
  %v880 = vadd.f32 %v858, %v879
  %881 = vdwg.mxu0
  %882 = vmatpush.msra.mxu0 0.0
  %883 = vmatpush.msra.mxu0 0.0
  %884 = vmatpush.msra.mxu0 0.0
  %885 = vmatpush.msra.mxu0 0.0
  %886 = vmatpush.msra.mxu0 0.0
  %887 = vmatpush.msra.mxu0 0.0
  %888 = vmatpush.msra.mxu0 0.0
  %889 = vmatpush.msra.mxu0 0.0
  %890 = vmatpush.msra.mxu0 0.0
  %891 = vmatpush.msra.mxu0 0.0
  %892 = vmatpush.msra.mxu0 0.0
  %893 = vmatpush.msra.mxu0 0.0
  %894 = vmatpush.msra.mxu0 0.0
  %895 = vmatpush.msra.mxu0 0.0
  %896 = vmatpush.msra.mxu0 0.0
  %v897 = vand.u32 %v730, 4294901760
  %898 = vmatpush.msra.mxu0 %v897
  %v899 = vand.u32 %v734, 4294901760
  %v900 = vsub.f32 %v734, %v899
  %v901 = vand.u32 %v900, 4294901760
  %v902 = vsub.f32 %v900, %v901
  %v903 = vand.u32 %v902, 4294901760
  %904 = vmatmul.f32.gmra.mxu0 %v903
  %v905 = vpop.f32.mrf.mxu0
  %v906 = vadd.f32 0.0, %v905
  %907 = vdwg.mxu0
  %908 = vmatpush.msra.mxu0 0.0
  %909 = vmatpush.msra.mxu0 0.0
  %910 = vmatpush.msra.mxu0 0.0
  %911 = vmatpush.msra.mxu0 0.0
  %912 = vmatpush.msra.mxu0 0.0
  %913 = vmatpush.msra.mxu0 0.0
  %914 = vmatpush.msra.mxu0 0.0
  %915 = vmatpush.msra.mxu0 0.0
  %916 = vmatpush.msra.mxu0 0.0
  %917 = vmatpush.msra.mxu0 0.0
  %918 = vmatpush.msra.mxu0 0.0
  %919 = vmatpush.msra.mxu0 0.0
  %920 = vmatpush.msra.mxu0 0.0
  %921 = vmatpush.msra.mxu0 0.0
  %922 = vmatpush.msra.mxu0 0.0
  %v923 = vand.u32 %v730, 4294901760
  %v924 = vsub.f32 %v730, %v923
  %v925 = vand.u32 %v924, 4294901760
  %v926 = vsub.f32 %v924, %v925
  %v927 = vand.u32 %v926, 4294901760
  %928 = vmatpush.msra.mxu0 %v927
  %v929 = vand.u32 %v734, 4294901760
  %930 = vmatmul.f32.gmra.mxu0 %v929
  %v931 = vpop.f32.mrf.mxu0
  %v932 = vadd.f32 %v906, %v931
  %933 = vdwg.mxu0
  %934 = vmatpush.msra.mxu0 0.0
  %935 = vmatpush.msra.mxu0 0.0
  %936 = vmatpush.msra.mxu0 0.0
  %937 = vmatpush.msra.mxu0 0.0
  %938 = vmatpush.msra.mxu0 0.0
  %939 = vmatpush.msra.mxu0 0.0
  %940 = vmatpush.msra.mxu0 0.0
  %941 = vmatpush.msra.mxu0 0.0
  %942 = vmatpush.msra.mxu0 0.0
  %943 = vmatpush.msra.mxu0 0.0
  %944 = vmatpush.msra.mxu0 0.0
  %945 = vmatpush.msra.mxu0 0.0
  %946 = vmatpush.msra.mxu0 0.0
  %947 = vmatpush.msra.mxu0 0.0
  %948 = vmatpush.msra.mxu0 0.0
  %v949 = vand.u32 %v730, 4294901760
  %v950 = vsub.f32 %v730, %v949
  %951 = vmatpush.msra.mxu0 %v950
  %v952 = vand.u32 %v734, 4294901760
  %v953 = vsub.f32 %v734, %v952
  %954 = vmatmul.f32.gmra.mxu0 %v953
  %v955 = vpop.f32.mrf.mxu0
  %v956 = vadd.f32 %v932, %v955
  %957 = vdwg.mxu0
  %958 = vmatpush.msra.mxu0 0.0
  %959 = vmatpush.msra.mxu0 0.0
  %960 = vmatpush.msra.mxu0 0.0
  %961 = vmatpush.msra.mxu0 0.0
  %962 = vmatpush.msra.mxu0 0.0
  %963 = vmatpush.msra.mxu0 0.0
  %964 = vmatpush.msra.mxu0 0.0
  %965 = vmatpush.msra.mxu0 0.0
  %966 = vmatpush.msra.mxu0 0.0
  %967 = vmatpush.msra.mxu0 0.0
  %968 = vmatpush.msra.mxu0 0.0
  %969 = vmatpush.msra.mxu0 0.0
  %970 = vmatpush.msra.mxu0 0.0
  %971 = vmatpush.msra.mxu0 0.0
  %972 = vmatpush.msra.mxu0 0.0
  %v973 = vand.u32 %v730, 4294901760
  %974 = vmatpush.msra.mxu0 %v973
  %v975 = vand.u32 %v734, 4294901760
  %v976 = vsub.f32 %v734, %v975
  %v977 = vand.u32 %v976, 4294901760
  %978 = vmatmul.f32.gmra.mxu0 %v977
  %v979 = vpop.f32.mrf.mxu0
  %v980 = vadd.f32 %v956, %v979
  %981 = vdwg.mxu0
  %982 = vmatpush.msra.mxu0 0.0
  %983 = vmatpush.msra.mxu0 0.0
  %984 = vmatpush.msra.mxu0 0.0
  %985 = vmatpush.msra.mxu0 0.0
  %986 = vmatpush.msra.mxu0 0.0
  %987 = vmatpush.msra.mxu0 0.0
  %988 = vmatpush.msra.mxu0 0.0
  %989 = vmatpush.msra.mxu0 0.0
  %990 = vmatpush.msra.mxu0 0.0
  %991 = vmatpush.msra.mxu0 0.0
  %992 = vmatpush.msra.mxu0 0.0
  %993 = vmatpush.msra.mxu0 0.0
  %994 = vmatpush.msra.mxu0 0.0
  %995 = vmatpush.msra.mxu0 0.0
  %996 = vmatpush.msra.mxu0 0.0
  %v997 = vand.u32 %v730, 4294901760
  %v998 = vsub.f32 %v730, %v997
  %v999 = vand.u32 %v998, 4294901760
  %1000 = vmatpush.msra.mxu0 %v999
  %v1001 = vand.u32 %v734, 4294901760
  %1002 = vmatmul.f32.gmra.mxu0 %v1001
  %v1003 = vpop.f32.mrf.mxu0
  %v1004 = vadd.f32 %v980, %v1003
  %1005 = vdwg.mxu0
  %1006 = vmatpush.msra.mxu0 0.0
  %1007 = vmatpush.msra.mxu0 0.0
  %1008 = vmatpush.msra.mxu0 0.0
  %1009 = vmatpush.msra.mxu0 0.0
  %1010 = vmatpush.msra.mxu0 0.0
  %1011 = vmatpush.msra.mxu0 0.0
  %1012 = vmatpush.msra.mxu0 0.0
  %1013 = vmatpush.msra.mxu0 0.0
  %1014 = vmatpush.msra.mxu0 0.0
  %1015 = vmatpush.msra.mxu0 0.0
  %1016 = vmatpush.msra.mxu0 0.0
  %1017 = vmatpush.msra.mxu0 0.0
  %1018 = vmatpush.msra.mxu0 0.0
  %1019 = vmatpush.msra.mxu0 0.0
  %1020 = vmatpush.msra.mxu0 0.0
  %v1021 = vand.u32 %v730, 4294901760
  %1022 = vmatpush.msra.mxu0 %v1021
  %v1023 = vand.u32 %v734, 4294901760
  %1024 = vmatmul.f32.gmra.mxu0 %v1023
  %v1025 = vpop.f32.mrf.mxu0
  %v1026 = vadd.f32 %v1004, %v1025
  %1027 = vdwg.mxu0
  %v1028 = vsub.f32 %v729, %v880
  %v1029 = vsub.f32 %v730, %v1026
  %v1030 = vmul.f32 %v1028, %v1028
  %v1031 = vmul.f32 %v1029, %v1029
  %1032 = vmatpush.msra.mxu0 0.0
  %1033 = vmatpush.msra.mxu0 0.0
  %1034 = vmatpush.msra.mxu0 0.0
  %1035 = vmatpush.msra.mxu0 0.0
  %1036 = vmatpush.msra.mxu0 0.0
  %1037 = vmatpush.msra.mxu0 0.0
  %1038 = vmatpush.msra.mxu0 0.0
  %1039 = vmatpush.msra.mxu0 0.0
  %1040 = vmatpush.msra.mxu0 0.0
  %1041 = vmatpush.msra.mxu0 0.0
  %1042 = vmatpush.msra.mxu0 0.0
  %1043 = vmatpush.msra.mxu0 0.0
  %1044 = vmatpush.msra.mxu0 0.0
  %1045 = vmatpush.msra.mxu0 0.0
  %1046 = vmatpush.msra.mxu0 0.0
  %v1047 = vand.u32 %v1030, 4294901760
  %1048 = vmatpush.msra.mxu0 %v1047
  %v1049 = vand.u32 %v734, 4294901760
  %v1050 = vsub.f32 %v734, %v1049
  %v1051 = vand.u32 %v1050, 4294901760
  %v1052 = vsub.f32 %v1050, %v1051
  %v1053 = vand.u32 %v1052, 4294901760
  %1054 = vmatmul.f32.gmra.mxu0 %v1053
  %v1055 = vpop.f32.mrf.mxu0
  %v1056 = vadd.f32 1e-06, %v1055
  %1057 = vdwg.mxu0
  %1058 = vmatpush.msra.mxu0 0.0
  %1059 = vmatpush.msra.mxu0 0.0
  %1060 = vmatpush.msra.mxu0 0.0
  %1061 = vmatpush.msra.mxu0 0.0
  %1062 = vmatpush.msra.mxu0 0.0
  %1063 = vmatpush.msra.mxu0 0.0
  %1064 = vmatpush.msra.mxu0 0.0
  %1065 = vmatpush.msra.mxu0 0.0
  %1066 = vmatpush.msra.mxu0 0.0
  %1067 = vmatpush.msra.mxu0 0.0
  %1068 = vmatpush.msra.mxu0 0.0
  %1069 = vmatpush.msra.mxu0 0.0
  %1070 = vmatpush.msra.mxu0 0.0
  %1071 = vmatpush.msra.mxu0 0.0
  %1072 = vmatpush.msra.mxu0 0.0
  %v1073 = vand.u32 %v1030, 4294901760
  %v1074 = vsub.f32 %v1030, %v1073
  %v1075 = vand.u32 %v1074, 4294901760
  %v1076 = vsub.f32 %v1074, %v1075
  %v1077 = vand.u32 %v1076, 4294901760
  %1078 = vmatpush.msra.mxu0 %v1077
  %v1079 = vand.u32 %v734, 4294901760
  %1080 = vmatmul.f32.gmra.mxu0 %v1079
  %v1081 = vpop.f32.mrf.mxu0
  %v1082 = vadd.f32 %v1056, %v1081
  %1083 = vdwg.mxu0
  %1084 = vmatpush.msra.mxu0 0.0
  %1085 = vmatpush.msra.mxu0 0.0
  %1086 = vmatpush.msra.mxu0 0.0
  %1087 = vmatpush.msra.mxu0 0.0
  %1088 = vmatpush.msra.mxu0 0.0
  %1089 = vmatpush.msra.mxu0 0.0
  %1090 = vmatpush.msra.mxu0 0.0
  %1091 = vmatpush.msra.mxu0 0.0
  %1092 = vmatpush.msra.mxu0 0.0
  %1093 = vmatpush.msra.mxu0 0.0
  %1094 = vmatpush.msra.mxu0 0.0
  %1095 = vmatpush.msra.mxu0 0.0
  %1096 = vmatpush.msra.mxu0 0.0
  %1097 = vmatpush.msra.mxu0 0.0
  %1098 = vmatpush.msra.mxu0 0.0
  %v1099 = vand.u32 %v1030, 4294901760
  %v1100 = vsub.f32 %v1030, %v1099
  %1101 = vmatpush.msra.mxu0 %v1100
  %v1102 = vand.u32 %v734, 4294901760
  %v1103 = vsub.f32 %v734, %v1102
  %1104 = vmatmul.f32.gmra.mxu0 %v1103
  %v1105 = vpop.f32.mrf.mxu0
  %v1106 = vadd.f32 %v1082, %v1105
  %1107 = vdwg.mxu0
  %1108 = vmatpush.msra.mxu0 0.0
  %1109 = vmatpush.msra.mxu0 0.0
  %1110 = vmatpush.msra.mxu0 0.0
  %1111 = vmatpush.msra.mxu0 0.0
  %1112 = vmatpush.msra.mxu0 0.0
  %1113 = vmatpush.msra.mxu0 0.0
  %1114 = vmatpush.msra.mxu0 0.0
  %1115 = vmatpush.msra.mxu0 0.0
  %1116 = vmatpush.msra.mxu0 0.0
  %1117 = vmatpush.msra.mxu0 0.0
  %1118 = vmatpush.msra.mxu0 0.0
  %1119 = vmatpush.msra.mxu0 0.0
  %1120 = vmatpush.msra.mxu0 0.0
  %1121 = vmatpush.msra.mxu0 0.0
  %1122 = vmatpush.msra.mxu0 0.0
  %v1123 = vand.u32 %v1030, 4294901760
  %1124 = vmatpush.msra.mxu0 %v1123
  %v1125 = vand.u32 %v734, 4294901760
  %v1126 = vsub.f32 %v734, %v1125
  %v1127 = vand.u32 %v1126, 4294901760
  %1128 = vmatmul.f32.gmra.mxu0 %v1127
  %v1129 = vpop.f32.mrf.mxu0
  %v1130 = vadd.f32 %v1106, %v1129
  %1131 = vdwg.mxu0
  %1132 = vmatpush.msra.mxu0 0.0
  %1133 = vmatpush.msra.mxu0 0.0
  %1134 = vmatpush.msra.mxu0 0.0
  %1135 = vmatpush.msra.mxu0 0.0
  %1136 = vmatpush.msra.mxu0 0.0
  %1137 = vmatpush.msra.mxu0 0.0
  %1138 = vmatpush.msra.mxu0 0.0
  %1139 = vmatpush.msra.mxu0 0.0
  %1140 = vmatpush.msra.mxu0 0.0
  %1141 = vmatpush.msra.mxu0 0.0
  %1142 = vmatpush.msra.mxu0 0.0
  %1143 = vmatpush.msra.mxu0 0.0
  %1144 = vmatpush.msra.mxu0 0.0
  %1145 = vmatpush.msra.mxu0 0.0
  %1146 = vmatpush.msra.mxu0 0.0
  %v1147 = vand.u32 %v1030, 4294901760
  %v1148 = vsub.f32 %v1030, %v1147
  %v1149 = vand.u32 %v1148, 4294901760
  %1150 = vmatpush.msra.mxu0 %v1149
  %v1151 = vand.u32 %v734, 4294901760
  %1152 = vmatmul.f32.gmra.mxu0 %v1151
  %v1153 = vpop.f32.mrf.mxu0
  %v1154 = vadd.f32 %v1130, %v1153
  %1155 = vdwg.mxu0
  %1156 = vmatpush.msra.mxu0 0.0
  %1157 = vmatpush.msra.mxu0 0.0
  %1158 = vmatpush.msra.mxu0 0.0
  %1159 = vmatpush.msra.mxu0 0.0
  %1160 = vmatpush.msra.mxu0 0.0
  %1161 = vmatpush.msra.mxu0 0.0
  %1162 = vmatpush.msra.mxu0 0.0
  %1163 = vmatpush.msra.mxu0 0.0
  %1164 = vmatpush.msra.mxu0 0.0
  %1165 = vmatpush.msra.mxu0 0.0
  %1166 = vmatpush.msra.mxu0 0.0
  %1167 = vmatpush.msra.mxu0 0.0
  %1168 = vmatpush.msra.mxu0 0.0
  %1169 = vmatpush.msra.mxu0 0.0
  %1170 = vmatpush.msra.mxu0 0.0
  %v1171 = vand.u32 %v1030, 4294901760
  %1172 = vmatpush.msra.mxu0 %v1171
  %v1173 = vand.u32 %v734, 4294901760
  %1174 = vmatmul.f32.gmra.mxu0 %v1173
  %v1175 = vpop.f32.mrf.mxu0
  %v1176 = vadd.f32 %v1154, %v1175
  %1177 = vdwg.mxu0
  %1178 = vmatpush.msra.mxu0 0.0
  %1179 = vmatpush.msra.mxu0 0.0
  %1180 = vmatpush.msra.mxu0 0.0
  %1181 = vmatpush.msra.mxu0 0.0
  %1182 = vmatpush.msra.mxu0 0.0
  %1183 = vmatpush.msra.mxu0 0.0
  %1184 = vmatpush.msra.mxu0 0.0
  %1185 = vmatpush.msra.mxu0 0.0
  %1186 = vmatpush.msra.mxu0 0.0
  %1187 = vmatpush.msra.mxu0 0.0
  %1188 = vmatpush.msra.mxu0 0.0
  %1189 = vmatpush.msra.mxu0 0.0
  %1190 = vmatpush.msra.mxu0 0.0
  %1191 = vmatpush.msra.mxu0 0.0
  %1192 = vmatpush.msra.mxu0 0.0
  %v1193 = vand.u32 %v1031, 4294901760
  %1194 = vmatpush.msra.mxu0 %v1193
  %v1195 = vand.u32 %v734, 4294901760
  %v1196 = vsub.f32 %v734, %v1195
  %v1197 = vand.u32 %v1196, 4294901760
  %v1198 = vsub.f32 %v1196, %v1197
  %v1199 = vand.u32 %v1198, 4294901760
  %1200 = vmatmul.f32.gmra.mxu0 %v1199
  %v1201 = vpop.f32.mrf.mxu0
  %v1202 = vadd.f32 1e-06, %v1201
  %1203 = vdwg.mxu0
  %1204 = vmatpush.msra.mxu0 0.0
  %1205 = vmatpush.msra.mxu0 0.0
  %1206 = vmatpush.msra.mxu0 0.0
  %1207 = vmatpush.msra.mxu0 0.0
  %1208 = vmatpush.msra.mxu0 0.0
  %1209 = vmatpush.msra.mxu0 0.0
  %1210 = vmatpush.msra.mxu0 0.0
  %1211 = vmatpush.msra.mxu0 0.0
  %1212 = vmatpush.msra.mxu0 0.0
  %1213 = vmatpush.msra.mxu0 0.0
  %1214 = vmatpush.msra.mxu0 0.0
  %1215 = vmatpush.msra.mxu0 0.0
  %1216 = vmatpush.msra.mxu0 0.0
  %1217 = vmatpush.msra.mxu0 0.0
  %1218 = vmatpush.msra.mxu0 0.0
  %v1219 = vand.u32 %v1031, 4294901760
  %v1220 = vsub.f32 %v1031, %v1219
  %v1221 = vand.u32 %v1220, 4294901760
  %v1222 = vsub.f32 %v1220, %v1221
  %v1223 = vand.u32 %v1222, 4294901760
  %1224 = vmatpush.msra.mxu0 %v1223
  %v1225 = vand.u32 %v734, 4294901760
  %1226 = vmatmul.f32.gmra.mxu0 %v1225
  %v1227 = vpop.f32.mrf.mxu0
  %v1228 = vadd.f32 %v1202, %v1227
  %1229 = vdwg.mxu0
  %1230 = vmatpush.msra.mxu0 0.0
  %1231 = vmatpush.msra.mxu0 0.0
  %1232 = vmatpush.msra.mxu0 0.0
  %1233 = vmatpush.msra.mxu0 0.0
  %1234 = vmatpush.msra.mxu0 0.0
  %1235 = vmatpush.msra.mxu0 0.0
  %1236 = vmatpush.msra.mxu0 0.0
  %1237 = vmatpush.msra.mxu0 0.0
  %1238 = vmatpush.msra.mxu0 0.0
  %1239 = vmatpush.msra.mxu0 0.0
  %1240 = vmatpush.msra.mxu0 0.0
  %1241 = vmatpush.msra.mxu0 0.0
  %1242 = vmatpush.msra.mxu0 0.0
  %1243 = vmatpush.msra.mxu0 0.0
  %1244 = vmatpush.msra.mxu0 0.0
  %v1245 = vand.u32 %v1031, 4294901760
  %v1246 = vsub.f32 %v1031, %v1245
  %1247 = vmatpush.msra.mxu0 %v1246
  %v1248 = vand.u32 %v734, 4294901760
  %v1249 = vsub.f32 %v734, %v1248
  %1250 = vmatmul.f32.gmra.mxu0 %v1249
  %v1251 = vpop.f32.mrf.mxu0
  %v1252 = vadd.f32 %v1228, %v1251
  %1253 = vdwg.mxu0
  %1254 = vmatpush.msra.mxu0 0.0
  %1255 = vmatpush.msra.mxu0 0.0
  %1256 = vmatpush.msra.mxu0 0.0
  %1257 = vmatpush.msra.mxu0 0.0
  %1258 = vmatpush.msra.mxu0 0.0
  %1259 = vmatpush.msra.mxu0 0.0
  %1260 = vmatpush.msra.mxu0 0.0
  %1261 = vmatpush.msra.mxu0 0.0
  %1262 = vmatpush.msra.mxu0 0.0
  %1263 = vmatpush.msra.mxu0 0.0
  %1264 = vmatpush.msra.mxu0 0.0
  %1265 = vmatpush.msra.mxu0 0.0
  %1266 = vmatpush.msra.mxu0 0.0
  %1267 = vmatpush.msra.mxu0 0.0
  %1268 = vmatpush.msra.mxu0 0.0
  %v1269 = vand.u32 %v1031, 4294901760
  %1270 = vmatpush.msra.mxu0 %v1269
  %v1271 = vand.u32 %v734, 4294901760
  %v1272 = vsub.f32 %v734, %v1271
  %v1273 = vand.u32 %v1272, 4294901760
  %1274 = vmatmul.f32.gmra.mxu0 %v1273
  %v1275 = vpop.f32.mrf.mxu0
  %v1276 = vadd.f32 %v1252, %v1275
  %1277 = vdwg.mxu0
  %1278 = vmatpush.msra.mxu0 0.0
  %1279 = vmatpush.msra.mxu0 0.0
  %1280 = vmatpush.msra.mxu0 0.0
  %1281 = vmatpush.msra.mxu0 0.0
  %1282 = vmatpush.msra.mxu0 0.0
  %1283 = vmatpush.msra.mxu0 0.0
  %1284 = vmatpush.msra.mxu0 0.0
  %1285 = vmatpush.msra.mxu0 0.0
  %1286 = vmatpush.msra.mxu0 0.0
  %1287 = vmatpush.msra.mxu0 0.0
  %1288 = vmatpush.msra.mxu0 0.0
  %1289 = vmatpush.msra.mxu0 0.0
  %1290 = vmatpush.msra.mxu0 0.0
  %1291 = vmatpush.msra.mxu0 0.0
  %1292 = vmatpush.msra.mxu0 0.0
  %v1293 = vand.u32 %v1031, 4294901760
  %v1294 = vsub.f32 %v1031, %v1293
  %v1295 = vand.u32 %v1294, 4294901760
  %1296 = vmatpush.msra.mxu0 %v1295
  %v1297 = vand.u32 %v734, 4294901760
  %1298 = vmatmul.f32.gmra.mxu0 %v1297
  %v1299 = vpop.f32.mrf.mxu0
  %v1300 = vadd.f32 %v1276, %v1299
  %1301 = vdwg.mxu0
  %1302 = vmatpush.msra.mxu0 0.0
  %1303 = vmatpush.msra.mxu0 0.0
  %1304 = vmatpush.msra.mxu0 0.0
  %1305 = vmatpush.msra.mxu0 0.0
  %1306 = vmatpush.msra.mxu0 0.0
  %1307 = vmatpush.msra.mxu0 0.0
  %1308 = vmatpush.msra.mxu0 0.0
  %1309 = vmatpush.msra.mxu0 0.0
  %1310 = vmatpush.msra.mxu0 0.0
  %1311 = vmatpush.msra.mxu0 0.0
  %1312 = vmatpush.msra.mxu0 0.0
  %1313 = vmatpush.msra.mxu0 0.0
  %1314 = vmatpush.msra.mxu0 0.0
  %1315 = vmatpush.msra.mxu0 0.0
  %1316 = vmatpush.msra.mxu0 0.0
  %v1317 = vand.u32 %v1031, 4294901760
  %1318 = vmatpush.msra.mxu0 %v1317
  %v1319 = vand.u32 %v734, 4294901760
  %1320 = vmatmul.f32.gmra.mxu0 %v1319
  %v1321 = vpop.f32.mrf.mxu0
  %v1322 = vadd.f32 %v1300, %v1321
  %1323 = vdwg.mxu0
  %v1324 = vrsqrt.pop %v1176
  %v1325 = vmul.f32 %v1324, %v1176
  %v1326 = vmul.f32 %v1325, %v1324
  %v1327 = vmul.f32 0.5, %v1326
  %v1328 = vsub.f32 1.5, %v1327
  %v1329 = vmul.f32 %v1324, %v1328
  %vm1330 = vweird.f32 %v1176
  %vm1331 = vweird.f32 %v1324
  %vm1332 = vmor %vm1330, %vm1331
  %v1333 = vsel %vm1332, %v1324, %v1329
  %v1334 = vrsqrt.pop %v1322
  %v1335 = vmul.f32 %v1334, %v1322
  %v1336 = vmul.f32 %v1335, %v1334
  %v1337 = vmul.f32 0.5, %v1336
  %v1338 = vsub.f32 1.5, %v1337
  %v1339 = vmul.f32 %v1334, %v1338
  %vm1340 = vweird.f32 %v1322
  %vm1341 = vweird.f32 %v1334
  %vm1342 = vmor %vm1340, %vm1341
  %v1343 = vsel %vm1342, %v1334, %v1339
  %v1344 = vmul.f32 %v1028, %v1333
  %v1345 = vmul.f32 %v1029, %v1343
  %v1346 = vld [vmem:[%s4] sm:$0xff]
  %1348 = vset.pattern.permute.xlu0 0
  %1349 = vperm.xlu0 %1348, %v1346
  %v1350 = vpop.permute.xlu0 %1349
  %v1352 = vmul.f32 %v1350, %v1344
  %v1353 = vmul.f32 %v1350, %v1345
  %v1354 = vld [vmem:[%s5] sm:$0xff]
  %1356 = vset.pattern.permute.xlu0 0
  %1357 = vperm.xlu0 %1356, %v1354
  %v1358 = vpop.permute.xlu0 %1357
  %v1360 = vadd.f32 %v1352, %v1358
  %v1361 = vadd.f32 %v1353, %v1358
  %v1362 = vld [vmem:[%s6] sm:$0xff]
  %v1363 = vld [vmem:[%s6 + $0x8] sm:$0xff]
  %v1364 = vld [vmem:[%s6 + $0x10] sm:$0xff]
  %v1365 = vld [vmem:[%s6 + $0x18] sm:$0xff]
  %v1366 = vld [vmem:[%s7] sm:$0xff]
  %v1367 = vld [vmem:[%s7 + $0x8] sm:$0xff]
  %v1368 = vld [vmem:[%s7 + $0x10] sm:$0xff]
  %v1369 = vld [vmem:[%s7 + $0x18] sm:$0xff]
  %1371 = vset.pattern.permute.xlu0 0
  %1372 = vperm.xlu0 %1371, %v1366
  %v1373 = vpop.permute.xlu0 %1372
  %1376 = vset.pattern.permute.xlu0 0
  %1377 = vperm.xlu0 %1376, %v1367
  %v1378 = vpop.permute.xlu0 %1377
  %1381 = vset.pattern.permute.xlu0 0
  %1382 = vperm.xlu0 %1381, %v1368
  %v1383 = vpop.permute.xlu0 %1382
  %1386 = vset.pattern.permute.xlu0 0
  %1387 = vperm.xlu0 %1386, %v1369
  %v1388 = vpop.permute.xlu0 %1387
  %v1391 = vsel %vm732, %v1362, 0
  %v1394 = vsel %vm732, %v1363, 0
  %v1397 = vsel %vm732, %v1364, 0
  %v1400 = vsel %vm732, %v1365, 0
  %1402 = vmatpush.msra.mxu0 0.0
  %1403 = vmatpush.msra.mxu0 0.0
  %1404 = vmatpush.msra.mxu0 0.0
  %1405 = vmatpush.msra.mxu0 0.0
  %1406 = vmatpush.msra.mxu0 0.0
  %1407 = vmatpush.msra.mxu0 0.0
  %1408 = vmatpush.msra.mxu0 0.0
  %1409 = vmatpush.msra.mxu0 0.0
  %1410 = vmatpush.msra.mxu0 0.0
  %1411 = vmatpush.msra.mxu0 0.0
  %1412 = vmatpush.msra.mxu0 0.0
  %1413 = vmatpush.msra.mxu0 0.0
  %1414 = vmatpush.msra.mxu0 0.0
  %1415 = vmatpush.msra.mxu0 0.0
  %1416 = vmatpush.msra.mxu0 0.0
  %v1417 = vand.u32 %v1360, 4294901760
  %1418 = vmatpush.msra.mxu0 %v1417
  %v1419 = vand.u32 %v1391, 4294901760
  %v1420 = vsub.f32 %v1391, %v1419
  %v1421 = vand.u32 %v1420, 4294901760
  %v1422 = vsub.f32 %v1420, %v1421
  %v1423 = vand.u32 %v1422, 4294901760
  %1424 = vmatmul.f32.gmra.mxu0 %v1423
  %v1425 = vpop.f32.mrf.mxu0
  %v1426 = vadd.f32 %v1373, %v1425
  %v1427 = vand.u32 %v1394, 4294901760
  %v1428 = vsub.f32 %v1394, %v1427
  %v1429 = vand.u32 %v1428, 4294901760
  %v1430 = vsub.f32 %v1428, %v1429
  %v1431 = vand.u32 %v1430, 4294901760
  %1432 = vmatmul.f32.gmra.mxu0 %v1431
  %v1433 = vpop.f32.mrf.mxu0
  %v1434 = vadd.f32 %v1378, %v1433
  %v1435 = vand.u32 %v1397, 4294901760
  %v1436 = vsub.f32 %v1397, %v1435
  %v1437 = vand.u32 %v1436, 4294901760
  %v1438 = vsub.f32 %v1436, %v1437
  %v1439 = vand.u32 %v1438, 4294901760
  %1440 = vmatmul.f32.gmra.mxu0 %v1439
  %v1441 = vpop.f32.mrf.mxu0
  %v1442 = vadd.f32 %v1383, %v1441
  %v1443 = vand.u32 %v1400, 4294901760
  %v1444 = vsub.f32 %v1400, %v1443
  %v1445 = vand.u32 %v1444, 4294901760
  %v1446 = vsub.f32 %v1444, %v1445
  %v1447 = vand.u32 %v1446, 4294901760
  %1448 = vmatmul.f32.gmra.mxu0 %v1447
  %v1449 = vpop.f32.mrf.mxu0
  %v1450 = vadd.f32 %v1388, %v1449
  %1451 = vdwg.mxu0
  %1452 = vmatpush.msra.mxu0 0.0
  %1453 = vmatpush.msra.mxu0 0.0
  %1454 = vmatpush.msra.mxu0 0.0
  %1455 = vmatpush.msra.mxu0 0.0
  %1456 = vmatpush.msra.mxu0 0.0
  %1457 = vmatpush.msra.mxu0 0.0
  %1458 = vmatpush.msra.mxu0 0.0
  %1459 = vmatpush.msra.mxu0 0.0
  %1460 = vmatpush.msra.mxu0 0.0
  %1461 = vmatpush.msra.mxu0 0.0
  %1462 = vmatpush.msra.mxu0 0.0
  %1463 = vmatpush.msra.mxu0 0.0
  %1464 = vmatpush.msra.mxu0 0.0
  %1465 = vmatpush.msra.mxu0 0.0
  %1466 = vmatpush.msra.mxu0 0.0
  %v1467 = vand.u32 %v1360, 4294901760
  %v1468 = vsub.f32 %v1360, %v1467
  %v1469 = vand.u32 %v1468, 4294901760
  %v1470 = vsub.f32 %v1468, %v1469
  %v1471 = vand.u32 %v1470, 4294901760
  %1472 = vmatpush.msra.mxu0 %v1471
  %v1473 = vand.u32 %v1391, 4294901760
  %1474 = vmatmul.f32.gmra.mxu0 %v1473
  %v1475 = vpop.f32.mrf.mxu0
  %v1476 = vadd.f32 %v1426, %v1475
  %v1477 = vand.u32 %v1394, 4294901760
  %1478 = vmatmul.f32.gmra.mxu0 %v1477
  %v1479 = vpop.f32.mrf.mxu0
  %v1480 = vadd.f32 %v1434, %v1479
  %v1481 = vand.u32 %v1397, 4294901760
  %1482 = vmatmul.f32.gmra.mxu0 %v1481
  %v1483 = vpop.f32.mrf.mxu0
  %v1484 = vadd.f32 %v1442, %v1483
  %v1485 = vand.u32 %v1400, 4294901760
  %1486 = vmatmul.f32.gmra.mxu0 %v1485
  %v1487 = vpop.f32.mrf.mxu0
  %v1488 = vadd.f32 %v1450, %v1487
  %1489 = vdwg.mxu0
  %1490 = vmatpush.msra.mxu0 0.0
  %1491 = vmatpush.msra.mxu0 0.0
  %1492 = vmatpush.msra.mxu0 0.0
  %1493 = vmatpush.msra.mxu0 0.0
  %1494 = vmatpush.msra.mxu0 0.0
  %1495 = vmatpush.msra.mxu0 0.0
  %1496 = vmatpush.msra.mxu0 0.0
  %1497 = vmatpush.msra.mxu0 0.0
  %1498 = vmatpush.msra.mxu0 0.0
  %1499 = vmatpush.msra.mxu0 0.0
  %1500 = vmatpush.msra.mxu0 0.0
  %1501 = vmatpush.msra.mxu0 0.0
  %1502 = vmatpush.msra.mxu0 0.0
  %1503 = vmatpush.msra.mxu0 0.0
  %1504 = vmatpush.msra.mxu0 0.0
  %v1505 = vand.u32 %v1360, 4294901760
  %v1506 = vsub.f32 %v1360, %v1505
  %1507 = vmatpush.msra.mxu0 %v1506
  %v1508 = vand.u32 %v1391, 4294901760
  %v1509 = vsub.f32 %v1391, %v1508
  %1510 = vmatmul.f32.gmra.mxu0 %v1509
  %v1511 = vpop.f32.mrf.mxu0
  %v1512 = vadd.f32 %v1476, %v1511
  %v1513 = vand.u32 %v1394, 4294901760
  %v1514 = vsub.f32 %v1394, %v1513
  %1515 = vmatmul.f32.gmra.mxu0 %v1514
  %v1516 = vpop.f32.mrf.mxu0
  %v1517 = vadd.f32 %v1480, %v1516
  %v1518 = vand.u32 %v1397, 4294901760
  %v1519 = vsub.f32 %v1397, %v1518
  %1520 = vmatmul.f32.gmra.mxu0 %v1519
  %v1521 = vpop.f32.mrf.mxu0
  %v1522 = vadd.f32 %v1484, %v1521
  %v1523 = vand.u32 %v1400, 4294901760
  %v1524 = vsub.f32 %v1400, %v1523
  %1525 = vmatmul.f32.gmra.mxu0 %v1524
  %v1526 = vpop.f32.mrf.mxu0
  %v1527 = vadd.f32 %v1488, %v1526
  %1528 = vdwg.mxu0
  %1529 = vmatpush.msra.mxu0 0.0
  %1530 = vmatpush.msra.mxu0 0.0
  %1531 = vmatpush.msra.mxu0 0.0
  %1532 = vmatpush.msra.mxu0 0.0
  %1533 = vmatpush.msra.mxu0 0.0
  %1534 = vmatpush.msra.mxu0 0.0
  %1535 = vmatpush.msra.mxu0 0.0
  %1536 = vmatpush.msra.mxu0 0.0
  %1537 = vmatpush.msra.mxu0 0.0
  %1538 = vmatpush.msra.mxu0 0.0
  %1539 = vmatpush.msra.mxu0 0.0
  %1540 = vmatpush.msra.mxu0 0.0
  %1541 = vmatpush.msra.mxu0 0.0
  %1542 = vmatpush.msra.mxu0 0.0
  %1543 = vmatpush.msra.mxu0 0.0
  %v1544 = vand.u32 %v1360, 4294901760
  %1545 = vmatpush.msra.mxu0 %v1544
  %v1546 = vand.u32 %v1391, 4294901760
  %v1547 = vsub.f32 %v1391, %v1546
  %v1548 = vand.u32 %v1547, 4294901760
  %1549 = vmatmul.f32.gmra.mxu0 %v1548
  %v1550 = vpop.f32.mrf.mxu0
  %v1551 = vadd.f32 %v1512, %v1550
  %v1552 = vand.u32 %v1394, 4294901760
  %v1553 = vsub.f32 %v1394, %v1552
  %v1554 = vand.u32 %v1553, 4294901760
  %1555 = vmatmul.f32.gmra.mxu0 %v1554
  %v1556 = vpop.f32.mrf.mxu0
  %v1557 = vadd.f32 %v1517, %v1556
  %v1558 = vand.u32 %v1397, 4294901760
  %v1559 = vsub.f32 %v1397, %v1558
  %v1560 = vand.u32 %v1559, 4294901760
  %1561 = vmatmul.f32.gmra.mxu0 %v1560
  %v1562 = vpop.f32.mrf.mxu0
  %v1563 = vadd.f32 %v1522, %v1562
  %v1564 = vand.u32 %v1400, 4294901760
  %v1565 = vsub.f32 %v1400, %v1564
  %v1566 = vand.u32 %v1565, 4294901760
  %1567 = vmatmul.f32.gmra.mxu0 %v1566
  %v1568 = vpop.f32.mrf.mxu0
  %v1569 = vadd.f32 %v1527, %v1568
  %1570 = vdwg.mxu0
  %1571 = vmatpush.msra.mxu0 0.0
  %1572 = vmatpush.msra.mxu0 0.0
  %1573 = vmatpush.msra.mxu0 0.0
  %1574 = vmatpush.msra.mxu0 0.0
  %1575 = vmatpush.msra.mxu0 0.0
  %1576 = vmatpush.msra.mxu0 0.0
  %1577 = vmatpush.msra.mxu0 0.0
  %1578 = vmatpush.msra.mxu0 0.0
  %1579 = vmatpush.msra.mxu0 0.0
  %1580 = vmatpush.msra.mxu0 0.0
  %1581 = vmatpush.msra.mxu0 0.0
  %1582 = vmatpush.msra.mxu0 0.0
  %1583 = vmatpush.msra.mxu0 0.0
  %1584 = vmatpush.msra.mxu0 0.0
  %1585 = vmatpush.msra.mxu0 0.0
  %v1586 = vand.u32 %v1360, 4294901760
  %v1587 = vsub.f32 %v1360, %v1586
  %v1588 = vand.u32 %v1587, 4294901760
  %1589 = vmatpush.msra.mxu0 %v1588
  %v1590 = vand.u32 %v1391, 4294901760
  %1591 = vmatmul.f32.gmra.mxu0 %v1590
  %v1592 = vpop.f32.mrf.mxu0
  %v1593 = vadd.f32 %v1551, %v1592
  %v1594 = vand.u32 %v1394, 4294901760
  %1595 = vmatmul.f32.gmra.mxu0 %v1594
  %v1596 = vpop.f32.mrf.mxu0
  %v1597 = vadd.f32 %v1557, %v1596
  %v1598 = vand.u32 %v1397, 4294901760
  %1599 = vmatmul.f32.gmra.mxu0 %v1598
  %v1600 = vpop.f32.mrf.mxu0
  %v1601 = vadd.f32 %v1563, %v1600
  %v1602 = vand.u32 %v1400, 4294901760
  %1603 = vmatmul.f32.gmra.mxu0 %v1602
  %v1604 = vpop.f32.mrf.mxu0
  %v1605 = vadd.f32 %v1569, %v1604
  %1606 = vdwg.mxu0
  %1607 = vmatpush.msra.mxu0 0.0
  %1608 = vmatpush.msra.mxu0 0.0
  %1609 = vmatpush.msra.mxu0 0.0
  %1610 = vmatpush.msra.mxu0 0.0
  %1611 = vmatpush.msra.mxu0 0.0
  %1612 = vmatpush.msra.mxu0 0.0
  %1613 = vmatpush.msra.mxu0 0.0
  %1614 = vmatpush.msra.mxu0 0.0
  %1615 = vmatpush.msra.mxu0 0.0
  %1616 = vmatpush.msra.mxu0 0.0
  %1617 = vmatpush.msra.mxu0 0.0
  %1618 = vmatpush.msra.mxu0 0.0
  %1619 = vmatpush.msra.mxu0 0.0
  %1620 = vmatpush.msra.mxu0 0.0
  %1621 = vmatpush.msra.mxu0 0.0
  %v1622 = vand.u32 %v1360, 4294901760
  %1623 = vmatpush.msra.mxu0 %v1622
  %v1624 = vand.u32 %v1391, 4294901760
  %1625 = vmatmul.f32.gmra.mxu0 %v1624
  %v1626 = vpop.f32.mrf.mxu0
  %v1627 = vadd.f32 %v1593, %v1626
  %v1628 = vand.u32 %v1394, 4294901760
  %1629 = vmatmul.f32.gmra.mxu0 %v1628
  %v1630 = vpop.f32.mrf.mxu0
  %v1631 = vadd.f32 %v1597, %v1630
  %v1632 = vand.u32 %v1397, 4294901760
  %1633 = vmatmul.f32.gmra.mxu0 %v1632
  %v1634 = vpop.f32.mrf.mxu0
  %v1635 = vadd.f32 %v1601, %v1634
  %v1636 = vand.u32 %v1400, 4294901760
  %1637 = vmatmul.f32.gmra.mxu0 %v1636
  %v1638 = vpop.f32.mrf.mxu0
  %v1639 = vadd.f32 %v1605, %v1638
  %1640 = vdwg.mxu0
  %1641 = vmatpush.msra.mxu0 0.0
  %1642 = vmatpush.msra.mxu0 0.0
  %1643 = vmatpush.msra.mxu0 0.0
  %1644 = vmatpush.msra.mxu0 0.0
  %1645 = vmatpush.msra.mxu0 0.0
  %1646 = vmatpush.msra.mxu0 0.0
  %1647 = vmatpush.msra.mxu0 0.0
  %1648 = vmatpush.msra.mxu0 0.0
  %1649 = vmatpush.msra.mxu0 0.0
  %1650 = vmatpush.msra.mxu0 0.0
  %1651 = vmatpush.msra.mxu0 0.0
  %1652 = vmatpush.msra.mxu0 0.0
  %1653 = vmatpush.msra.mxu0 0.0
  %1654 = vmatpush.msra.mxu0 0.0
  %1655 = vmatpush.msra.mxu0 0.0
  %v1656 = vand.u32 %v1361, 4294901760
  %1657 = vmatpush.msra.mxu0 %v1656
  %v1658 = vand.u32 %v1391, 4294901760
  %v1659 = vsub.f32 %v1391, %v1658
  %v1660 = vand.u32 %v1659, 4294901760
  %v1661 = vsub.f32 %v1659, %v1660
  %v1662 = vand.u32 %v1661, 4294901760
  %1663 = vmatmul.f32.gmra.mxu0 %v1662
  %v1664 = vpop.f32.mrf.mxu0
  %v1665 = vadd.f32 %v1373, %v1664
  %v1666 = vand.u32 %v1394, 4294901760
  %v1667 = vsub.f32 %v1394, %v1666
  %v1668 = vand.u32 %v1667, 4294901760
  %v1669 = vsub.f32 %v1667, %v1668
  %v1670 = vand.u32 %v1669, 4294901760
  %1671 = vmatmul.f32.gmra.mxu0 %v1670
  %v1672 = vpop.f32.mrf.mxu0
  %v1673 = vadd.f32 %v1378, %v1672
  %v1674 = vand.u32 %v1397, 4294901760
  %v1675 = vsub.f32 %v1397, %v1674
  %v1676 = vand.u32 %v1675, 4294901760
  %v1677 = vsub.f32 %v1675, %v1676
  %v1678 = vand.u32 %v1677, 4294901760
  %1679 = vmatmul.f32.gmra.mxu0 %v1678
  %v1680 = vpop.f32.mrf.mxu0
  %v1681 = vadd.f32 %v1383, %v1680
  %v1682 = vand.u32 %v1400, 4294901760
  %v1683 = vsub.f32 %v1400, %v1682
  %v1684 = vand.u32 %v1683, 4294901760
  %v1685 = vsub.f32 %v1683, %v1684
  %v1686 = vand.u32 %v1685, 4294901760
  %1687 = vmatmul.f32.gmra.mxu0 %v1686
  %v1688 = vpop.f32.mrf.mxu0
  %v1689 = vadd.f32 %v1388, %v1688
  %1690 = vdwg.mxu0
  %1691 = vmatpush.msra.mxu0 0.0
  %1692 = vmatpush.msra.mxu0 0.0
  %1693 = vmatpush.msra.mxu0 0.0
  %1694 = vmatpush.msra.mxu0 0.0
  %1695 = vmatpush.msra.mxu0 0.0
  %1696 = vmatpush.msra.mxu0 0.0
  %1697 = vmatpush.msra.mxu0 0.0
  %1698 = vmatpush.msra.mxu0 0.0
  %1699 = vmatpush.msra.mxu0 0.0
  %1700 = vmatpush.msra.mxu0 0.0
  %1701 = vmatpush.msra.mxu0 0.0
  %1702 = vmatpush.msra.mxu0 0.0
  %1703 = vmatpush.msra.mxu0 0.0
  %1704 = vmatpush.msra.mxu0 0.0
  %1705 = vmatpush.msra.mxu0 0.0
  %v1706 = vand.u32 %v1361, 4294901760
  %v1707 = vsub.f32 %v1361, %v1706
  %v1708 = vand.u32 %v1707, 4294901760
  %v1709 = vsub.f32 %v1707, %v1708
  %v1710 = vand.u32 %v1709, 4294901760
  %1711 = vmatpush.msra.mxu0 %v1710
  %v1712 = vand.u32 %v1391, 4294901760
  %1713 = vmatmul.f32.gmra.mxu0 %v1712
  %v1714 = vpop.f32.mrf.mxu0
  %v1715 = vadd.f32 %v1665, %v1714
  %v1716 = vand.u32 %v1394, 4294901760
  %1717 = vmatmul.f32.gmra.mxu0 %v1716
  %v1718 = vpop.f32.mrf.mxu0
  %v1719 = vadd.f32 %v1673, %v1718
  %v1720 = vand.u32 %v1397, 4294901760
  %1721 = vmatmul.f32.gmra.mxu0 %v1720
  %v1722 = vpop.f32.mrf.mxu0
  %v1723 = vadd.f32 %v1681, %v1722
  %v1724 = vand.u32 %v1400, 4294901760
  %1725 = vmatmul.f32.gmra.mxu0 %v1724
  %v1726 = vpop.f32.mrf.mxu0
  %v1727 = vadd.f32 %v1689, %v1726
  %1728 = vdwg.mxu0
  %1729 = vmatpush.msra.mxu0 0.0
  %1730 = vmatpush.msra.mxu0 0.0
  %1731 = vmatpush.msra.mxu0 0.0
  %1732 = vmatpush.msra.mxu0 0.0
  %1733 = vmatpush.msra.mxu0 0.0
  %1734 = vmatpush.msra.mxu0 0.0
  %1735 = vmatpush.msra.mxu0 0.0
  %1736 = vmatpush.msra.mxu0 0.0
  %1737 = vmatpush.msra.mxu0 0.0
  %1738 = vmatpush.msra.mxu0 0.0
  %1739 = vmatpush.msra.mxu0 0.0
  %1740 = vmatpush.msra.mxu0 0.0
  %1741 = vmatpush.msra.mxu0 0.0
  %1742 = vmatpush.msra.mxu0 0.0
  %1743 = vmatpush.msra.mxu0 0.0
  %v1744 = vand.u32 %v1361, 4294901760
  %v1745 = vsub.f32 %v1361, %v1744
  %1746 = vmatpush.msra.mxu0 %v1745
  %v1747 = vand.u32 %v1391, 4294901760
  %v1748 = vsub.f32 %v1391, %v1747
  %1749 = vmatmul.f32.gmra.mxu0 %v1748
  %v1750 = vpop.f32.mrf.mxu0
  %v1751 = vadd.f32 %v1715, %v1750
  %v1752 = vand.u32 %v1394, 4294901760
  %v1753 = vsub.f32 %v1394, %v1752
  %1754 = vmatmul.f32.gmra.mxu0 %v1753
  %v1755 = vpop.f32.mrf.mxu0
  %v1756 = vadd.f32 %v1719, %v1755
  %v1757 = vand.u32 %v1397, 4294901760
  %v1758 = vsub.f32 %v1397, %v1757
  %1759 = vmatmul.f32.gmra.mxu0 %v1758
  %v1760 = vpop.f32.mrf.mxu0
  %v1761 = vadd.f32 %v1723, %v1760
  %v1762 = vand.u32 %v1400, 4294901760
  %v1763 = vsub.f32 %v1400, %v1762
  %1764 = vmatmul.f32.gmra.mxu0 %v1763
  %v1765 = vpop.f32.mrf.mxu0
  %v1766 = vadd.f32 %v1727, %v1765
  %1767 = vdwg.mxu0
  %1768 = vmatpush.msra.mxu0 0.0
  %1769 = vmatpush.msra.mxu0 0.0
  %1770 = vmatpush.msra.mxu0 0.0
  %1771 = vmatpush.msra.mxu0 0.0
  %1772 = vmatpush.msra.mxu0 0.0
  %1773 = vmatpush.msra.mxu0 0.0
  %1774 = vmatpush.msra.mxu0 0.0
  %1775 = vmatpush.msra.mxu0 0.0
  %1776 = vmatpush.msra.mxu0 0.0
  %1777 = vmatpush.msra.mxu0 0.0
  %1778 = vmatpush.msra.mxu0 0.0
  %1779 = vmatpush.msra.mxu0 0.0
  %1780 = vmatpush.msra.mxu0 0.0
  %1781 = vmatpush.msra.mxu0 0.0
  %1782 = vmatpush.msra.mxu0 0.0
  %v1783 = vand.u32 %v1361, 4294901760
  %1784 = vmatpush.msra.mxu0 %v1783
  %v1785 = vand.u32 %v1391, 4294901760
  %v1786 = vsub.f32 %v1391, %v1785
  %v1787 = vand.u32 %v1786, 4294901760
  %1788 = vmatmul.f32.gmra.mxu0 %v1787
  %v1789 = vpop.f32.mrf.mxu0
  %v1790 = vadd.f32 %v1751, %v1789
  %v1791 = vand.u32 %v1394, 4294901760
  %v1792 = vsub.f32 %v1394, %v1791
  %v1793 = vand.u32 %v1792, 4294901760
  %1794 = vmatmul.f32.gmra.mxu0 %v1793
  %v1795 = vpop.f32.mrf.mxu0
  %v1796 = vadd.f32 %v1756, %v1795
  %v1797 = vand.u32 %v1397, 4294901760
  %v1798 = vsub.f32 %v1397, %v1797
  %v1799 = vand.u32 %v1798, 4294901760
  %1800 = vmatmul.f32.gmra.mxu0 %v1799
  %v1801 = vpop.f32.mrf.mxu0
  %v1802 = vadd.f32 %v1761, %v1801
  %v1803 = vand.u32 %v1400, 4294901760
  %v1804 = vsub.f32 %v1400, %v1803
  %v1805 = vand.u32 %v1804, 4294901760
  %1806 = vmatmul.f32.gmra.mxu0 %v1805
  %v1807 = vpop.f32.mrf.mxu0
  %v1808 = vadd.f32 %v1766, %v1807
  %1809 = vdwg.mxu0
  %1810 = vmatpush.msra.mxu0 0.0
  %1811 = vmatpush.msra.mxu0 0.0
  %1812 = vmatpush.msra.mxu0 0.0
  %1813 = vmatpush.msra.mxu0 0.0
  %1814 = vmatpush.msra.mxu0 0.0
  %1815 = vmatpush.msra.mxu0 0.0
  %1816 = vmatpush.msra.mxu0 0.0
  %1817 = vmatpush.msra.mxu0 0.0
  %1818 = vmatpush.msra.mxu0 0.0
  %1819 = vmatpush.msra.mxu0 0.0
  %1820 = vmatpush.msra.mxu0 0.0
  %1821 = vmatpush.msra.mxu0 0.0
  %1822 = vmatpush.msra.mxu0 0.0
  %1823 = vmatpush.msra.mxu0 0.0
  %1824 = vmatpush.msra.mxu0 0.0
  %v1825 = vand.u32 %v1361, 4294901760
  %v1826 = vsub.f32 %v1361, %v1825
  %v1827 = vand.u32 %v1826, 4294901760
  %1828 = vmatpush.msra.mxu0 %v1827
  %v1829 = vand.u32 %v1391, 4294901760
  %1830 = vmatmul.f32.gmra.mxu0 %v1829
  %v1831 = vpop.f32.mrf.mxu0
  %v1832 = vadd.f32 %v1790, %v1831
  %v1833 = vand.u32 %v1394, 4294901760
  %1834 = vmatmul.f32.gmra.mxu0 %v1833
  %v1835 = vpop.f32.mrf.mxu0
  %v1836 = vadd.f32 %v1796, %v1835
  %v1837 = vand.u32 %v1397, 4294901760
  %1838 = vmatmul.f32.gmra.mxu0 %v1837
  %v1839 = vpop.f32.mrf.mxu0
  %v1840 = vadd.f32 %v1802, %v1839
  %v1841 = vand.u32 %v1400, 4294901760
  %1842 = vmatmul.f32.gmra.mxu0 %v1841
  %v1843 = vpop.f32.mrf.mxu0
  %v1844 = vadd.f32 %v1808, %v1843
  %1845 = vdwg.mxu0
  %1846 = vmatpush.msra.mxu0 0.0
  %1847 = vmatpush.msra.mxu0 0.0
  %1848 = vmatpush.msra.mxu0 0.0
  %1849 = vmatpush.msra.mxu0 0.0
  %1850 = vmatpush.msra.mxu0 0.0
  %1851 = vmatpush.msra.mxu0 0.0
  %1852 = vmatpush.msra.mxu0 0.0
  %1853 = vmatpush.msra.mxu0 0.0
  %1854 = vmatpush.msra.mxu0 0.0
  %1855 = vmatpush.msra.mxu0 0.0
  %1856 = vmatpush.msra.mxu0 0.0
  %1857 = vmatpush.msra.mxu0 0.0
  %1858 = vmatpush.msra.mxu0 0.0
  %1859 = vmatpush.msra.mxu0 0.0
  %1860 = vmatpush.msra.mxu0 0.0
  %v1861 = vand.u32 %v1361, 4294901760
  %1862 = vmatpush.msra.mxu0 %v1861
  %v1863 = vand.u32 %v1391, 4294901760
  %1864 = vmatmul.f32.gmra.mxu0 %v1863
  %v1865 = vpop.f32.mrf.mxu0
  %v1866 = vadd.f32 %v1832, %v1865
  %v1867 = vand.u32 %v1394, 4294901760
  %1868 = vmatmul.f32.gmra.mxu0 %v1867
  %v1869 = vpop.f32.mrf.mxu0
  %v1870 = vadd.f32 %v1836, %v1869
  %v1871 = vand.u32 %v1397, 4294901760
  %1872 = vmatmul.f32.gmra.mxu0 %v1871
  %v1873 = vpop.f32.mrf.mxu0
  %v1874 = vadd.f32 %v1840, %v1873
  %v1875 = vand.u32 %v1400, 4294901760
  %1876 = vmatmul.f32.gmra.mxu0 %v1875
  %v1877 = vpop.f32.mrf.mxu0
  %v1878 = vadd.f32 %v1844, %v1877
  %1879 = vdwg.mxu0
  %v1880 = vmul.f32 %v1627, 0.5
  %v1881 = vmul.f32 %v1866, 0.5
  %v1882 = vmul.f32 %v1631, 0.5
  %v1883 = vmul.f32 %v1870, 0.5
  %v1884 = vmul.f32 %v1635, 0.5
  %v1885 = vmul.f32 %v1874, 0.5
  %v1886 = vmul.f32 %v1639, 0.5
  %v1887 = vmul.f32 %v1878, 0.5
  %v1888 = vmul.f32 %v1627, 0.044715
  %v1889 = vmul.f32 %v1866, 0.044715
  %v1890 = vmul.f32 %v1631, 0.044715
  %v1891 = vmul.f32 %v1870, 0.044715
  %v1892 = vmul.f32 %v1635, 0.044715
  %v1893 = vmul.f32 %v1874, 0.044715
  %v1894 = vmul.f32 %v1639, 0.044715
  %v1895 = vmul.f32 %v1878, 0.044715
  %v1896 = vmul.f32 %v1888, %v1627
  %v1897 = vmul.f32 %v1889, %v1866
  %v1898 = vmul.f32 %v1890, %v1631
  %v1899 = vmul.f32 %v1891, %v1870
  %v1900 = vmul.f32 %v1892, %v1635
  %v1901 = vmul.f32 %v1893, %v1874
  %v1902 = vmul.f32 %v1894, %v1639
  %v1903 = vmul.f32 %v1895, %v1878
  %v1904 = vmul.f32 %v1896, %v1627
  %v1905 = vmul.f32 %v1897, %v1866
  %v1906 = vmul.f32 %v1898, %v1631
  %v1907 = vmul.f32 %v1899, %v1870
  %v1908 = vmul.f32 %v1900, %v1635
  %v1909 = vmul.f32 %v1901, %v1874
  %v1910 = vmul.f32 %v1902, %v1639
  %v1911 = vmul.f32 %v1903, %v1878
  %v1912 = vadd.f32 %v1627, %v1904
  %v1913 = vadd.f32 %v1866, %v1905
  %v1914 = vadd.f32 %v1631, %v1906
  %v1915 = vadd.f32 %v1870, %v1907
  %v1916 = vadd.f32 %v1635, %v1908
  %v1917 = vadd.f32 %v1874, %v1909
  %v1918 = vadd.f32 %v1639, %v1910
  %v1919 = vadd.f32 %v1878, %v1911
  %v1920 = vmul.f32 %v1912, 0.7978846
  %v1921 = vmul.f32 %v1913, 0.7978846
  %v1922 = vmul.f32 %v1914, 0.7978846
  %v1923 = vmul.f32 %v1915, 0.7978846
  %v1924 = vmul.f32 %v1916, 0.7978846
  %v1925 = vmul.f32 %v1917, 0.7978846
  %v1926 = vmul.f32 %v1918, 0.7978846
  %v1927 = vmul.f32 %v1919, 0.7978846
  %v1928 = vtanh.pop %v1920
  %v1929 = vtanh.pop %v1921
  %v1930 = vtanh.pop %v1922
  %v1931 = vtanh.pop %v1923
  %v1932 = vtanh.pop %v1924
  %v1933 = vtanh.pop %v1925
  %v1934 = vtanh.pop %v1926
  %v1935 = vtanh.pop %v1927
  %v1936 = vadd.f32 %v1928, 1.0
  %v1937 = vadd.f32 %v1929, 1.0
  %v1938 = vadd.f32 %v1930, 1.0
  %v1939 = vadd.f32 %v1931, 1.0
  %v1940 = vadd.f32 %v1932, 1.0
  %v1941 = vadd.f32 %v1933, 1.0
  %v1942 = vadd.f32 %v1934, 1.0
  %v1943 = vadd.f32 %v1935, 1.0
  %v1944 = vmul.f32 %v1880, %v1936
  %v1945 = vmul.f32 %v1881, %v1937
  %v1946 = vmul.f32 %v1882, %v1938
  %v1947 = vmul.f32 %v1883, %v1939
  %v1948 = vmul.f32 %v1884, %v1940
  %v1949 = vmul.f32 %v1885, %v1941
  %v1950 = vmul.f32 %v1886, %v1942
  %v1951 = vmul.f32 %v1887, %v1943
  %v1952 = vld [vmem:[%s8] sm:$0xff]
  %v1953 = vld [vmem:[%s9] sm:$0xff]
  %1955 = vset.pattern.permute.xlu0 0
  %1956 = vperm.xlu0 %1955, %v1953
  %v1957 = vpop.permute.xlu0 %1956
  %vm1959 = vcmask 261120
  %v1961 = vsel %vm1959, %v1952, 0
  %1963 = vmatpush.msra.mxu0 0.0
  %1964 = vmatpush.msra.mxu0 0.0
  %1965 = vmatpush.msra.mxu0 0.0
  %1966 = vmatpush.msra.mxu0 0.0
  %1967 = vmatpush.msra.mxu0 0.0
  %1968 = vmatpush.msra.mxu0 0.0
  %1969 = vmatpush.msra.mxu0 0.0
  %1970 = vmatpush.msra.mxu0 0.0
  %1971 = vmatpush.msra.mxu0 0.0
  %1972 = vmatpush.msra.mxu0 0.0
  %1973 = vmatpush.msra.mxu0 0.0
  %1974 = vmatpush.msra.mxu0 0.0
  %v1975 = vand.u32 %v1950, 4294901760
  %1976 = vmatpush.msra.mxu0 %v1975
  %v1977 = vand.u32 %v1948, 4294901760
  %1978 = vmatpush.msra.mxu0 %v1977
  %v1979 = vand.u32 %v1946, 4294901760
  %1980 = vmatpush.msra.mxu0 %v1979
  %v1981 = vand.u32 %v1944, 4294901760
  %1982 = vmatpush.msra.mxu0 %v1981
  %v1983 = vand.u32 %v1961, 4294901760
  %v1984 = vsub.f32 %v1961, %v1983
  %v1985 = vand.u32 %v1984, 4294901760
  %v1986 = vsub.f32 %v1984, %v1985
  %v1987 = vand.u32 %v1986, 4294901760
  %1988 = vmatmul.f32.gmra.mxu0 %v1987
  %v1989 = vpop.f32.mrf.mxu0
  %v1990 = vadd.f32 %v1957, %v1989
  %1991 = vdwg.mxu0
  %1992 = vmatpush.msra.mxu0 0.0
  %1993 = vmatpush.msra.mxu0 0.0
  %1994 = vmatpush.msra.mxu0 0.0
  %1995 = vmatpush.msra.mxu0 0.0
  %1996 = vmatpush.msra.mxu0 0.0
  %1997 = vmatpush.msra.mxu0 0.0
  %1998 = vmatpush.msra.mxu0 0.0
  %1999 = vmatpush.msra.mxu0 0.0
  %2000 = vmatpush.msra.mxu0 0.0
  %2001 = vmatpush.msra.mxu0 0.0
  %2002 = vmatpush.msra.mxu0 0.0
  %2003 = vmatpush.msra.mxu0 0.0
  %v2004 = vand.u32 %v1950, 4294901760
  %v2005 = vsub.f32 %v1950, %v2004
  %v2006 = vand.u32 %v2005, 4294901760
  %v2007 = vsub.f32 %v2005, %v2006
  %v2008 = vand.u32 %v2007, 4294901760
  %2009 = vmatpush.msra.mxu0 %v2008
  %v2010 = vand.u32 %v1948, 4294901760
  %v2011 = vsub.f32 %v1948, %v2010
  %v2012 = vand.u32 %v2011, 4294901760
  %v2013 = vsub.f32 %v2011, %v2012
  %v2014 = vand.u32 %v2013, 4294901760
  %2015 = vmatpush.msra.mxu0 %v2014
  %v2016 = vand.u32 %v1946, 4294901760
  %v2017 = vsub.f32 %v1946, %v2016
  %v2018 = vand.u32 %v2017, 4294901760
  %v2019 = vsub.f32 %v2017, %v2018
  %v2020 = vand.u32 %v2019, 4294901760
  %2021 = vmatpush.msra.mxu0 %v2020
  %v2022 = vand.u32 %v1944, 4294901760
  %v2023 = vsub.f32 %v1944, %v2022
  %v2024 = vand.u32 %v2023, 4294901760
  %v2025 = vsub.f32 %v2023, %v2024
  %v2026 = vand.u32 %v2025, 4294901760
  %2027 = vmatpush.msra.mxu0 %v2026
  %v2028 = vand.u32 %v1961, 4294901760
  %2029 = vmatmul.f32.gmra.mxu0 %v2028
  %v2030 = vpop.f32.mrf.mxu0
  %v2031 = vadd.f32 %v1990, %v2030
  %2032 = vdwg.mxu0
  %2033 = vmatpush.msra.mxu0 0.0
  %2034 = vmatpush.msra.mxu0 0.0
  %2035 = vmatpush.msra.mxu0 0.0
  %2036 = vmatpush.msra.mxu0 0.0
  %2037 = vmatpush.msra.mxu0 0.0
  %2038 = vmatpush.msra.mxu0 0.0
  %2039 = vmatpush.msra.mxu0 0.0
  %2040 = vmatpush.msra.mxu0 0.0
  %2041 = vmatpush.msra.mxu0 0.0
  %2042 = vmatpush.msra.mxu0 0.0
  %2043 = vmatpush.msra.mxu0 0.0
  %2044 = vmatpush.msra.mxu0 0.0
  %v2045 = vand.u32 %v1950, 4294901760
  %v2046 = vsub.f32 %v1950, %v2045
  %2047 = vmatpush.msra.mxu0 %v2046
  %v2048 = vand.u32 %v1948, 4294901760
  %v2049 = vsub.f32 %v1948, %v2048
  %2050 = vmatpush.msra.mxu0 %v2049
  %v2051 = vand.u32 %v1946, 4294901760
  %v2052 = vsub.f32 %v1946, %v2051
  %2053 = vmatpush.msra.mxu0 %v2052
  %v2054 = vand.u32 %v1944, 4294901760
  %v2055 = vsub.f32 %v1944, %v2054
  %2056 = vmatpush.msra.mxu0 %v2055
  %v2057 = vand.u32 %v1961, 4294901760
  %v2058 = vsub.f32 %v1961, %v2057
  %2059 = vmatmul.f32.gmra.mxu0 %v2058
  %v2060 = vpop.f32.mrf.mxu0
  %v2061 = vadd.f32 %v2031, %v2060
  %2062 = vdwg.mxu0
  %2063 = vmatpush.msra.mxu0 0.0
  %2064 = vmatpush.msra.mxu0 0.0
  %2065 = vmatpush.msra.mxu0 0.0
  %2066 = vmatpush.msra.mxu0 0.0
  %2067 = vmatpush.msra.mxu0 0.0
  %2068 = vmatpush.msra.mxu0 0.0
  %2069 = vmatpush.msra.mxu0 0.0
  %2070 = vmatpush.msra.mxu0 0.0
  %2071 = vmatpush.msra.mxu0 0.0
  %2072 = vmatpush.msra.mxu0 0.0
  %2073 = vmatpush.msra.mxu0 0.0
  %2074 = vmatpush.msra.mxu0 0.0
  %v2075 = vand.u32 %v1950, 4294901760
  %2076 = vmatpush.msra.mxu0 %v2075
  %v2077 = vand.u32 %v1948, 4294901760
  %2078 = vmatpush.msra.mxu0 %v2077
  %v2079 = vand.u32 %v1946, 4294901760
  %2080 = vmatpush.msra.mxu0 %v2079
  %v2081 = vand.u32 %v1944, 4294901760
  %2082 = vmatpush.msra.mxu0 %v2081
  %v2083 = vand.u32 %v1961, 4294901760
  %v2084 = vsub.f32 %v1961, %v2083
  %v2085 = vand.u32 %v2084, 4294901760
  %2086 = vmatmul.f32.gmra.mxu0 %v2085
  %v2087 = vpop.f32.mrf.mxu0
  %v2088 = vadd.f32 %v2061, %v2087
  %2089 = vdwg.mxu0
  %2090 = vmatpush.msra.mxu0 0.0
  %2091 = vmatpush.msra.mxu0 0.0
  %2092 = vmatpush.msra.mxu0 0.0
  %2093 = vmatpush.msra.mxu0 0.0
  %2094 = vmatpush.msra.mxu0 0.0
  %2095 = vmatpush.msra.mxu0 0.0
  %2096 = vmatpush.msra.mxu0 0.0
  %2097 = vmatpush.msra.mxu0 0.0
  %2098 = vmatpush.msra.mxu0 0.0
  %2099 = vmatpush.msra.mxu0 0.0
  %2100 = vmatpush.msra.mxu0 0.0
  %2101 = vmatpush.msra.mxu0 0.0
  %v2102 = vand.u32 %v1950, 4294901760
  %v2103 = vsub.f32 %v1950, %v2102
  %v2104 = vand.u32 %v2103, 4294901760
  %2105 = vmatpush.msra.mxu0 %v2104
  %v2106 = vand.u32 %v1948, 4294901760
  %v2107 = vsub.f32 %v1948, %v2106
  %v2108 = vand.u32 %v2107, 4294901760
  %2109 = vmatpush.msra.mxu0 %v2108
  %v2110 = vand.u32 %v1946, 4294901760
  %v2111 = vsub.f32 %v1946, %v2110
  %v2112 = vand.u32 %v2111, 4294901760
  %2113 = vmatpush.msra.mxu0 %v2112
  %v2114 = vand.u32 %v1944, 4294901760
  %v2115 = vsub.f32 %v1944, %v2114
  %v2116 = vand.u32 %v2115, 4294901760
  %2117 = vmatpush.msra.mxu0 %v2116
  %v2118 = vand.u32 %v1961, 4294901760
  %2119 = vmatmul.f32.gmra.mxu0 %v2118
  %v2120 = vpop.f32.mrf.mxu0
  %v2121 = vadd.f32 %v2088, %v2120
  %2122 = vdwg.mxu0
  %2123 = vmatpush.msra.mxu0 0.0
  %2124 = vmatpush.msra.mxu0 0.0
  %2125 = vmatpush.msra.mxu0 0.0
  %2126 = vmatpush.msra.mxu0 0.0
  %2127 = vmatpush.msra.mxu0 0.0
  %2128 = vmatpush.msra.mxu0 0.0
  %2129 = vmatpush.msra.mxu0 0.0
  %2130 = vmatpush.msra.mxu0 0.0
  %2131 = vmatpush.msra.mxu0 0.0
  %2132 = vmatpush.msra.mxu0 0.0
  %2133 = vmatpush.msra.mxu0 0.0
  %2134 = vmatpush.msra.mxu0 0.0
  %v2135 = vand.u32 %v1950, 4294901760
  %2136 = vmatpush.msra.mxu0 %v2135
  %v2137 = vand.u32 %v1948, 4294901760
  %2138 = vmatpush.msra.mxu0 %v2137
  %v2139 = vand.u32 %v1946, 4294901760
  %2140 = vmatpush.msra.mxu0 %v2139
  %v2141 = vand.u32 %v1944, 4294901760
  %2142 = vmatpush.msra.mxu0 %v2141
  %v2143 = vand.u32 %v1961, 4294901760
  %2144 = vmatmul.f32.gmra.mxu0 %v2143
  %v2145 = vpop.f32.mrf.mxu0
  %v2146 = vadd.f32 %v2121, %v2145
  %2147 = vdwg.mxu0
  %2148 = vmatpush.msra.mxu0 0.0
  %2149 = vmatpush.msra.mxu0 0.0
  %2150 = vmatpush.msra.mxu0 0.0
  %2151 = vmatpush.msra.mxu0 0.0
  %2152 = vmatpush.msra.mxu0 0.0
  %2153 = vmatpush.msra.mxu0 0.0
  %2154 = vmatpush.msra.mxu0 0.0
  %2155 = vmatpush.msra.mxu0 0.0
  %2156 = vmatpush.msra.mxu0 0.0
  %2157 = vmatpush.msra.mxu0 0.0
  %2158 = vmatpush.msra.mxu0 0.0
  %2159 = vmatpush.msra.mxu0 0.0
  %v2160 = vand.u32 %v1951, 4294901760
  %2161 = vmatpush.msra.mxu0 %v2160
  %v2162 = vand.u32 %v1949, 4294901760
  %2163 = vmatpush.msra.mxu0 %v2162
  %v2164 = vand.u32 %v1947, 4294901760
  %2165 = vmatpush.msra.mxu0 %v2164
  %v2166 = vand.u32 %v1945, 4294901760
  %2167 = vmatpush.msra.mxu0 %v2166
  %v2168 = vand.u32 %v1961, 4294901760
  %v2169 = vsub.f32 %v1961, %v2168
  %v2170 = vand.u32 %v2169, 4294901760
  %v2171 = vsub.f32 %v2169, %v2170
  %v2172 = vand.u32 %v2171, 4294901760
  %2173 = vmatmul.f32.gmra.mxu0 %v2172
  %v2174 = vpop.f32.mrf.mxu0
  %v2175 = vadd.f32 %v1957, %v2174
  %2176 = vdwg.mxu0
  %2177 = vmatpush.msra.mxu0 0.0
  %2178 = vmatpush.msra.mxu0 0.0
  %2179 = vmatpush.msra.mxu0 0.0
  %2180 = vmatpush.msra.mxu0 0.0
  %2181 = vmatpush.msra.mxu0 0.0
  %2182 = vmatpush.msra.mxu0 0.0
  %2183 = vmatpush.msra.mxu0 0.0
  %2184 = vmatpush.msra.mxu0 0.0
  %2185 = vmatpush.msra.mxu0 0.0
  %2186 = vmatpush.msra.mxu0 0.0
  %2187 = vmatpush.msra.mxu0 0.0
  %2188 = vmatpush.msra.mxu0 0.0
  %v2189 = vand.u32 %v1951, 4294901760
  %v2190 = vsub.f32 %v1951, %v2189
  %v2191 = vand.u32 %v2190, 4294901760
  %v2192 = vsub.f32 %v2190, %v2191
  %v2193 = vand.u32 %v2192, 4294901760
  %2194 = vmatpush.msra.mxu0 %v2193
  %v2195 = vand.u32 %v1949, 4294901760
  %v2196 = vsub.f32 %v1949, %v2195
  %v2197 = vand.u32 %v2196, 4294901760
  %v2198 = vsub.f32 %v2196, %v2197
  %v2199 = vand.u32 %v2198, 4294901760
  %2200 = vmatpush.msra.mxu0 %v2199
  %v2201 = vand.u32 %v1947, 4294901760
  %v2202 = vsub.f32 %v1947, %v2201
  %v2203 = vand.u32 %v2202, 4294901760
  %v2204 = vsub.f32 %v2202, %v2203
  %v2205 = vand.u32 %v2204, 4294901760
  %2206 = vmatpush.msra.mxu0 %v2205
  %v2207 = vand.u32 %v1945, 4294901760
  %v2208 = vsub.f32 %v1945, %v2207
  %v2209 = vand.u32 %v2208, 4294901760
  %v2210 = vsub.f32 %v2208, %v2209
  %v2211 = vand.u32 %v2210, 4294901760
  %2212 = vmatpush.msra.mxu0 %v2211
  %v2213 = vand.u32 %v1961, 4294901760
  %2214 = vmatmul.f32.gmra.mxu0 %v2213
  %v2215 = vpop.f32.mrf.mxu0
  %v2216 = vadd.f32 %v2175, %v2215
  %2217 = vdwg.mxu0
  %2218 = vmatpush.msra.mxu0 0.0
  %2219 = vmatpush.msra.mxu0 0.0
  %2220 = vmatpush.msra.mxu0 0.0
  %2221 = vmatpush.msra.mxu0 0.0
  %2222 = vmatpush.msra.mxu0 0.0
  %2223 = vmatpush.msra.mxu0 0.0
  %2224 = vmatpush.msra.mxu0 0.0
  %2225 = vmatpush.msra.mxu0 0.0
  %2226 = vmatpush.msra.mxu0 0.0
  %2227 = vmatpush.msra.mxu0 0.0
  %2228 = vmatpush.msra.mxu0 0.0
  %2229 = vmatpush.msra.mxu0 0.0
  %v2230 = vand.u32 %v1951, 4294901760
  %v2231 = vsub.f32 %v1951, %v2230
  %2232 = vmatpush.msra.mxu0 %v2231
  %v2233 = vand.u32 %v1949, 4294901760
  %v2234 = vsub.f32 %v1949, %v2233
  %2235 = vmatpush.msra.mxu0 %v2234
  %v2236 = vand.u32 %v1947, 4294901760
  %v2237 = vsub.f32 %v1947, %v2236
  %2238 = vmatpush.msra.mxu0 %v2237
  %v2239 = vand.u32 %v1945, 4294901760
  %v2240 = vsub.f32 %v1945, %v2239
  %2241 = vmatpush.msra.mxu0 %v2240
  %v2242 = vand.u32 %v1961, 4294901760
  %v2243 = vsub.f32 %v1961, %v2242
  %2244 = vmatmul.f32.gmra.mxu0 %v2243
  %v2245 = vpop.f32.mrf.mxu0
  %v2246 = vadd.f32 %v2216, %v2245
  %2247 = vdwg.mxu0
  %2248 = vmatpush.msra.mxu0 0.0
  %2249 = vmatpush.msra.mxu0 0.0
  %2250 = vmatpush.msra.mxu0 0.0
  %2251 = vmatpush.msra.mxu0 0.0
  %2252 = vmatpush.msra.mxu0 0.0
  %2253 = vmatpush.msra.mxu0 0.0
  %2254 = vmatpush.msra.mxu0 0.0
  %2255 = vmatpush.msra.mxu0 0.0
  %2256 = vmatpush.msra.mxu0 0.0
  %2257 = vmatpush.msra.mxu0 0.0
  %2258 = vmatpush.msra.mxu0 0.0
  %2259 = vmatpush.msra.mxu0 0.0
  %v2260 = vand.u32 %v1951, 4294901760
  %2261 = vmatpush.msra.mxu0 %v2260
  %v2262 = vand.u32 %v1949, 4294901760
  %2263 = vmatpush.msra.mxu0 %v2262
  %v2264 = vand.u32 %v1947, 4294901760
  %2265 = vmatpush.msra.mxu0 %v2264
  %v2266 = vand.u32 %v1945, 4294901760
  %2267 = vmatpush.msra.mxu0 %v2266
  %v2268 = vand.u32 %v1961, 4294901760
  %v2269 = vsub.f32 %v1961, %v2268
  %v2270 = vand.u32 %v2269, 4294901760
  %2271 = vmatmul.f32.gmra.mxu0 %v2270
  %v2272 = vpop.f32.mrf.mxu0
  %v2273 = vadd.f32 %v2246, %v2272
  %2274 = vdwg.mxu0
  %2275 = vmatpush.msra.mxu0 0.0
  %2276 = vmatpush.msra.mxu0 0.0
  %2277 = vmatpush.msra.mxu0 0.0
  %2278 = vmatpush.msra.mxu0 0.0
  %2279 = vmatpush.msra.mxu0 0.0
  %2280 = vmatpush.msra.mxu0 0.0
  %2281 = vmatpush.msra.mxu0 0.0
  %2282 = vmatpush.msra.mxu0 0.0
  %2283 = vmatpush.msra.mxu0 0.0
  %2284 = vmatpush.msra.mxu0 0.0
  %2285 = vmatpush.msra.mxu0 0.0
  %2286 = vmatpush.msra.mxu0 0.0
  %v2287 = vand.u32 %v1951, 4294901760
  %v2288 = vsub.f32 %v1951, %v2287
  %v2289 = vand.u32 %v2288, 4294901760
  %2290 = vmatpush.msra.mxu0 %v2289
  %v2291 = vand.u32 %v1949, 4294901760
  %v2292 = vsub.f32 %v1949, %v2291
  %v2293 = vand.u32 %v2292, 4294901760
  %2294 = vmatpush.msra.mxu0 %v2293
  %v2295 = vand.u32 %v1947, 4294901760
  %v2296 = vsub.f32 %v1947, %v2295
  %v2297 = vand.u32 %v2296, 4294901760
  %2298 = vmatpush.msra.mxu0 %v2297
  %v2299 = vand.u32 %v1945, 4294901760
  %v2300 = vsub.f32 %v1945, %v2299
  %v2301 = vand.u32 %v2300, 4294901760
  %2302 = vmatpush.msra.mxu0 %v2301
  %v2303 = vand.u32 %v1961, 4294901760
  %2304 = vmatmul.f32.gmra.mxu0 %v2303
  %v2305 = vpop.f32.mrf.mxu0
  %v2306 = vadd.f32 %v2273, %v2305
  %2307 = vdwg.mxu0
  %2308 = vmatpush.msra.mxu0 0.0
  %2309 = vmatpush.msra.mxu0 0.0
  %2310 = vmatpush.msra.mxu0 0.0
  %2311 = vmatpush.msra.mxu0 0.0
  %2312 = vmatpush.msra.mxu0 0.0
  %2313 = vmatpush.msra.mxu0 0.0
  %2314 = vmatpush.msra.mxu0 0.0
  %2315 = vmatpush.msra.mxu0 0.0
  %2316 = vmatpush.msra.mxu0 0.0
  %2317 = vmatpush.msra.mxu0 0.0
  %2318 = vmatpush.msra.mxu0 0.0
  %2319 = vmatpush.msra.mxu0 0.0
  %v2320 = vand.u32 %v1951, 4294901760
  %2321 = vmatpush.msra.mxu0 %v2320
  %v2322 = vand.u32 %v1949, 4294901760
  %2323 = vmatpush.msra.mxu0 %v2322
  %v2324 = vand.u32 %v1947, 4294901760
  %2325 = vmatpush.msra.mxu0 %v2324
  %v2326 = vand.u32 %v1945, 4294901760
  %2327 = vmatpush.msra.mxu0 %v2326
  %v2328 = vand.u32 %v1961, 4294901760
  %2329 = vmatmul.f32.gmra.mxu0 %v2328
  %v2330 = vpop.f32.mrf.mxu0
  %v2331 = vadd.f32 %v2306, %v2330
  %2332 = vdwg.mxu0
  %v2333 = vadd.f32 %v2146, %v35
  %v2334 = vadd.f32 %v2331, %v36
  %2335 = vst [vmem:[%s10] sm:$0xff] %v2333
  %2336 = vst [vmem:[%s10 + $0x8] sm:$0xff] %v2334
  // Predicated region
  $region42: #{_encoder_block_forward.1} parent=0 // pred_check
    _
  $region43: #{_encoder_block_forward.1} parent=0 // pred_check_branch
    %2338 = sbr.rel (0) target = $region45
  $region44: #{_encoder_block_forward.1} parent=0 // pred_region
    _
  $region45: #{_encoder_block_forward.1} parent=0 // pred_fallthru
    _
  // Predicated region
  $region46: #{_encoder_block_forward.1} parent=0 // pred_check
    _
  $region47: #{_encoder_block_forward.1} parent=0 // pred_check_branch
    %2340 = sbr.rel (0) target = $region49
  $region48: #{_encoder_block_forward.1} parent=0 // pred_region
    _
  $region49: #{_encoder_block_forward.1} parent=0 // pred_fallthru
    _

</llo_original>
